<compile_context>
chip_gen: v7x
topology: tpu7x:2x2x1
jax: 0.10.0
libtpu: 0.0.40
codegen_flags: <defaults>
</compile_context>

<pallas_src>
import functools
import math

import jax
import jax.numpy as jnp
from jax.experimental import pallas as pl
from jax.experimental.pallas import tpu as pltpu

_VMEM_LIMIT = 32 * 1024 * 1024  # safe on v5e/v6e/v7x; largest blocks here are ~10 MiB


def _round_up(v, m):
    return ((v + m - 1) // m) * m


def _m_tiling(M):
    """Pick an M tile that divides M when possible (avoids padding/copying A)."""
    for t in (512, 256, 128, 64, 32, 16, 8):
        if M % t == 0:
            return t, M
    t = 512 if M >= 2048 else (64 if M >= 64 else 8)
    return t, _round_up(M, t)


# ---------------------------------------------------------------------------
# Fused matmul + bias + activation kernel (conv / transposed-conv hot path)
# ---------------------------------------------------------------------------
def _mm_bias_act_kernel(a_ref, b_ref, bias_ref, o_ref, *, act):
    acc = jnp.dot(a_ref[...], b_ref[...], preferred_element_type=jnp.float32)
    acc = acc + bias_ref[...]            # (1, N) broadcasts over rows; f32 epilogue
    if act == "relu":
        acc = jnp.maximum(acc, 0.0)
    elif act == "sigmoid":
        acc = 1.0 / (1.0 + jnp.exp(-acc))
    elif act == "lrelu":                 # nn.LeakyReLU() default negative_slope = 0.01
        acc = jnp.where(acc > 0.0, acc, 0.01 * acc)
    o_ref[...] = acc.astype(o_ref.dtype)


def pallas_matmul(a, b, bias=None, act="none", operand_dtype=jnp.bfloat16):
    """(M, K) @ (K, N) + bias with fused activation on the MXU."""
    M, K = a.shape
    K2, N = b.shape
    assert K == K2
    a = a.astype(operand_dtype)
    b = b.astype(operand_dtype)
    if bias is None:
        bias = jnp.zeros((N,), jnp.float32)
    bias = bias.astype(jnp.float32).reshape(1, N)

    tm, Mp = _m_tiling(M)
    if Mp != M:
        a = jnp.pad(a, ((0, Mp - M), (0, 0)))

    out = pl.pallas_call(
        functools.partial(_mm_bias_act_kernel, act=act),
        out_shape=jax.ShapeDtypeStruct((Mp, N), jnp.float32),
        grid=(Mp // tm,),
        in_specs=[
            pl.BlockSpec((tm, K), lambda i: (i, 0)),   # A tile (full K)
            pl.BlockSpec((K, N), lambda i: (0, 0)),    # B resident across the grid
            pl.BlockSpec((1, N), lambda i: (0, 0)),    # bias
        ],
        out_specs=pl.BlockSpec((tm, N), lambda i: (i, 0)),
        compiler_params=pltpu.CompilerParams(
            dimension_semantics=("parallel",),
            vmem_limit_bytes=_VMEM_LIMIT),
    )(a, b, bias)
    return out[:M] if Mp != M else out


# ---------------------------------------------------------------------------
# GroupNorm (NHWC): per-image stats kernel + fused normalize*gamma+beta kernel
# ---------------------------------------------------------------------------
def _gn_stats_kernel(x_ref, s1_ref, s2_ref):
    x = x_ref[...].astype(jnp.float32)                  # (1, HW, C)
    s1_ref[...] = jnp.sum(x, axis=1, keepdims=True)     # (1, 1, C)
    s2_ref[...] = jnp.sum(x * x, axis=1, keepdims=True)


def _gn_apply_kernel(x_ref, scale_ref, shift_ref, o_ref):
    o_ref[...] = x_ref[...] * scale_ref[...] + shift_ref[...]


def group_norm_nhwc(x, num_groups, gamma, beta, eps=1e-5):
    N, H, W, C = x.shape
    G = num_groups
    Cg = C // G
    HW = H * W
    xf = x.reshape(N, HW, C).astype(jnp.float32)

    x_spec = pl.BlockSpec((1, HW, C), lambda n: (n, 0, 0))
    vec_spec = pl.BlockSpec((1, 1, C), lambda n: (n, 0, 0))
    cparams = pltpu.CompilerParams(dimension_semantics=("parallel",),
                                   vmem_limit_bytes=_VMEM_LIMIT)

    s1, s2 = pl.pallas_call(
        _gn_stats_kernel,
        out_shape=(jax.ShapeDtypeStruct((N, 1, C), jnp.float32),
                   jax.ShapeDtypeStruct((N, 1, C), jnp.float32)),
        grid=(N,),
        in_specs=[x_spec],
        out_specs=(vec_spec, vec_spec),
        compiler_params=cparams,
    )(xf)

    # Tiny (N, G) group-combine in plain JAX, folded into per-channel scale/shift.
    cnt = float(HW * Cg)
    gm = s1.reshape(N, G, Cg).sum(-1) / cnt
    gms = s2.reshape(N, G, Cg).sum(-1) / cnt
    var = gms - gm * gm
    inv = jax.lax.rsqrt(var + eps)
    inv_c = jnp.repeat(inv, Cg, axis=1)                 # (N, C)
    mean_c = jnp.repeat(gm, Cg, axis=1)
    scale = (inv_c * gamma[None, :]).reshape(N, 1, C).astype(jnp.float32)
    shift = (beta[None, :] - mean_c * inv_c * gamma[None, :]).reshape(N, 1, C)
    shift = shift.astype(jnp.float32)

    out = pl.pallas_call(
        _gn_apply_kernel,
        out_shape=jax.ShapeDtypeStruct((N, HW, C), jnp.float32),
        grid=(N,),
        in_specs=[x_spec, vec_spec, vec_spec],
        out_specs=x_spec,
        compiler_params=cparams,
    )(xf, scale, shift)
    return out.reshape(N, H, W, C)


# ---------------------------------------------------------------------------
# Conv / ConvTranspose wrappers (NHWC, bf16 operands into the Pallas matmul)
# ---------------------------------------------------------------------------
def conv2d_nhwc(x, w_oikk, b, stride, pad, act="none"):
    # TODO(synk): 3x3/7x7 taps are still materialized as a (bf16) im2col matrix in HBM;
    # a tap-reduction grid axis with shifted blocks would remove this duplication.
    x = x.astype(jnp.bfloat16)
    if pad > 0:
        x = jnp.pad(x, ((0, 0), (pad, pad), (pad, pad), (0, 0)))
    N, Hp, Wp, Cin = x.shape
    Cout, _, kh, kw = w_oikk.shape
    Ho = (Hp - kh) // stride + 1
    Wo = (Wp - kw) // stride + 1
    if kh == 1 and kw == 1 and stride == 1:
        A = x.reshape(N * Ho * Wo, Cin)                 # 1x1 conv: no im2col
    else:
        cols = [x[:, di:di + stride * (Ho - 1) + 1:stride,
                  dj:dj + stride * (Wo - 1) + 1:stride, :]
                for di in range(kh) for dj in range(kw)]
        A = jnp.concatenate(cols, axis=-1).reshape(N * Ho * Wo, kh * kw * Cin)
    Bm = jnp.transpose(w_oikk, (2, 3, 1, 0)).reshape(kh * kw * Cin, Cout)
    out = pallas_matmul(A, Bm, b, act=act)
    return out.reshape(N, Ho, Wo, Cout)


def conv_transpose_s4k4_nhwc(x, w_iokk, b, act="none"):
    """ConvTranspose2d(kernel=4, stride=4, pad=0) by sub-pixel (phase) decomposition."""
    N, H, W, Cin = x.shape
    _, Cout, kh, kw = w_iokk.shape                      # (Cin, Cout, 4, 4)
    A = x.astype(jnp.bfloat16).reshape(N * H * W, Cin)
    Bm = jnp.transpose(w_iokk, (0, 2, 3, 1)).reshape(Cin, kh * kw * Cout)
    bias = jnp.tile(b.astype(jnp.float32), kh * kw)
    out = pallas_matmul(A, Bm, bias, act=act)           # (N*H*W, kh*kw*Cout)
    out = out.reshape(N, H, W, kh, kw, Cout)
    out = jnp.transpose(out, (0, 1, 3, 2, 4, 5)).reshape(N, H * kh, W * kw, Cout)
    return out


# ---------------------------------------------------------------------------
# grid_sample / affine_grid / TPS glue (plain JAX)
# ---------------------------------------------------------------------------
def grid_sample_bilinear(x, grid):
    # TODO(synk): data-dependent bilinear gather kept in plain JAX (no clean Pallas gather).
    # mode='bilinear', padding_mode='zeros', align_corners=False (PyTorch defaults)
    N, C, H, W = x.shape
    _, Ho, Wo, _ = grid.shape
    gx = grid[..., 0]
    gy = grid[..., 1]
    ix = ((gx + 1.0) * W - 1.0) * 0.5
    iy = ((gy + 1.0) * H - 1.0) * 0.5
    ix0 = jnp.floor(ix)
    iy0 = jnp.floor(iy)
    ix1 = ix0 + 1.0
    iy1 = iy0 + 1.0
    wx1 = ix - ix0
    wx0 = 1.0 - wx1
    wy1 = iy - iy0
    wy0 = 1.0 - wy1
    xf = x.reshape(N, C, H * W)

    def sample(xi, yi):
        valid = ((xi >= 0) & (xi <= W - 1) & (yi >= 0) & (yi <= H - 1)).astype(x.dtype)
        xc = jnp.clip(xi.astype(jnp.int32), 0, W - 1)
        yc = jnp.clip(yi.astype(jnp.int32), 0, H - 1)
        idx = (yc * W + xc).reshape(N, 1, Ho * Wo)
        idx = jnp.broadcast_to(idx, (N, C, Ho * Wo))
        g = jnp.take_along_axis(xf, idx, axis=2).reshape(N, C, Ho, Wo)
        return g * valid[:, None, :, :]

    v00 = sample(ix0, iy0)
    v01 = sample(ix1, iy0)
    v10 = sample(ix0, iy1)
    v11 = sample(ix1, iy1)
    out = (v00 * (wx0 * wy0)[:, None] + v01 * (wx1 * wy0)[:, None]
           + v10 * (wx0 * wy1)[:, None] + v11 * (wx1 * wy1)[:, None])
    return out


def affine_grid(theta_mat, H, W):
    # F.affine_grid, align_corners=False
    xs = (2.0 * jnp.arange(W, dtype=jnp.float32) + 1.0) / W - 1.0
    ys = (2.0 * jnp.arange(H, dtype=jnp.float32) + 1.0) / H - 1.0
    gx, gy = jnp.meshgrid(xs, ys)
    base = jnp.stack([gx, gy, jnp.ones_like(gx)], axis=-1)   # (H, W, 3)
    grid = jnp.einsum("hwk,ok->hwo", base, theta_mat[0])     # (H, W, 2)
    return grid[None]


def uniform_ctrl_grid(gh, gw):
    xs = jnp.linspace(0.0, 1.0, gw)
    ys = jnp.linspace(0.0, 1.0, gh)
    gx, gy = jnp.meshgrid(xs, ys)
    return jnp.stack([gx, gy], axis=-1).reshape(-1, 2)       # (T, 2)


def tps_grid(theta, ctrl, oH, oW):
    # cheind/py-thin-plate-spline tps_grid semantics with reduced theta (T+2 params)
    xs = jnp.linspace(0.0, 1.0, oW)
    ys = jnp.linspace(0.0, 1.0, oH)
    gx, gy = jnp.meshgrid(xs, ys)
    base = jnp.stack([jnp.ones_like(gx), gx, gy], axis=-1)   # (oH, oW, 3)
    T = ctrl.shape[0]
    diff = base[..., 1:][:, :, None, :] - ctrl[None, None, :, :]   # (oH, oW, T, 2)
    D = jnp.sqrt(jnp.sum(diff * diff, axis=-1))
    U = (D * D) * jnp.log(D + 1e-6)
    w = theta[0, :-3, :]           # (T-1, 2)
    a = theta[0, -3:, :]           # (3, 2)
    w_full = jnp.concatenate([-jnp.sum(w, axis=0, keepdims=True), w], axis=0)  # (T, 2)
    A = jnp.concatenate([U.reshape(oH * oW, T), base.reshape(oH * oW, 3)], axis=1)
    Bm = jnp.concatenate([w_full, a], axis=0)                # (T+3, 2)
    # grid coordinates need f32 fidelity -> f32 operands for this tiny matmul
    z = pallas_matmul(A, Bm, operand_dtype=jnp.float32).reshape(1, oH, oW, 2)
    return (base[None, ..., 1:] + z) * 2.0 - 1.0


# ---------------------------------------------------------------------------
# Module forwards
# ---------------------------------------------------------------------------
def grid_refine_forward(p, x):
    """GridRefine.forward with NHWC activations. x: (N, H, W, 2)."""
    w, b = p["conv1"];  x1 = conv2d_nhwc(x, w, b, 4, 3, act="relu")
    x1 = group_norm_nhwc(x1, 16, p["gn_gamma"], p["gn_beta"])
    w, b = p["conv2"];  x2 = conv2d_nhwc(x1, w, b, 1, 1, act="relu")
    w, b = p["conv31"]; x31 = conv2d_nhwc(x2, w, b, 4, 3, act="relu")
    w, b = p["conv32"]; x32 = conv2d_nhwc(x31, w, b, 1, 1, act="relu")
    w, b = p["conv3f"]; x3_f = conv2d_nhwc(x31, w, b, 1, 0, act="sigmoid")
    w, b = p["conv33"]; x33 = conv2d_nhwc(x32, w, b, 1, 1, act="relu")
    w, b = p["trans2"]; x3_out = conv_transpose_s4k4_nhwc(x33 * x3_f, w, b, act="lrelu")
    w, b = p["conv3"];  x3 = conv2d_nhwc(x3_out, w, b, 1, 1, act="relu")
    w, b = p["conv2f"]; x2_f = conv2d_nhwc(x1, w, b, 1, 0, act="sigmoid")
    w, b = p["trans1"]; out = conv_transpose_s4k4_nhwc(x3 * x2_f, w, b, act="lrelu")
    return x + out


def gdnet_forward(params, x, out_size):
    """GDNet.forward (fine_grid is None, with_refine=True path)."""
    B, C, H, W = x.shape
    oH, oW = out_size
    coarse_affine = affine_grid(params["affine_mat"], H, W)             # (1, H, W, 2)
    coarse_affine = jnp.transpose(coarse_affine, (0, 3, 1, 2))          # (1, 2, H, W)
    coarse_tps = tps_grid(params["theta"], params["ctrl_pts"], oH, oW)  # (1, oH, oW, 2)
    tps_g = grid_sample_bilinear(coarse_affine, coarse_tps)             # (1, 2, oH, oW)
    # GridRefine is per-sample with shared weights, so refining the batch-1 grid and
    # tiling afterwards is identical to PyTorch's repeat-then-refine (and B x cheaper).
    tps_nhwc = jnp.transpose(tps_g, (0, 2, 3, 1))                       # (1, oH, oW, 2)
    fine = jnp.clip(grid_refine_forward(params["refine"], tps_nhwc), -1.0, 1.0)
    fine = jnp.tile(fine, (B, 1, 1, 1))                                 # (B, oH, oW, 2)
    return grid_sample_bilinear(x, fine)                                # (B, C, oH, oW)


# ---------------------------------------------------------------------------
# Deterministic synthetic parameter init (shapes match the PyTorch __init__)
# ---------------------------------------------------------------------------
def init_params(key, grid_shape=(5, 5)):
    keys = iter(jax.random.split(key, 32))

    def conv_small(cout, cin, k):
        kk = next(keys); kw_, kb_ = jax.random.split(kk)
        fan_in = cin * k * k
        w = jax.random.normal(kw_, (cout, cin, k, k), jnp.float32) * 1e-4
        bound = 1.0 / math.sqrt(fan_in)
        b = jax.random.uniform(kb_, (cout,), jnp.float32, -bound, bound)
        return w, b

    def convT_default(cin, cout, k):
        kk = next(keys); kw_, kb_ = jax.random.split(kk)
        fan_in = cin * k * k
        bound = 1.0 / math.sqrt(fan_in)
        w = jax.random.uniform(kw_, (cin, cout, k, k), jnp.float32, -bound, bound)
        b = jax.random.uniform(kb_, (cout,), jnp.float32, -bound, bound)
        return w, b

    # GridRefine: Conv2d weights ~ N(0, 1e-4); ConvTranspose2d keeps default init
    refine = {
        "conv1": conv_small(32, 2, 7),
        "conv2": conv_small(64, 32, 3),
        "conv3": conv_small(32, 64, 3),
        "conv2f": conv_small(32, 32, 1),
        "conv31": conv_small(64, 64, 7),
        "conv32": conv_small(128, 64, 3),
        "conv33": conv_small(64, 128, 3),
        "conv3f": conv_small(64, 64, 1),
        "trans1": convT_default(32, 2, 4),
        "trans2": convT_default(64, 64, 4),
        "gn_gamma": jnp.ones((32,), jnp.float32),
        "gn_beta": jnp.zeros((32,), jnp.float32),
    }
    nctrl = grid_shape[0] * grid_shape[1]
    return {
        "affine_mat": jnp.array([[[1.0, 0.0, 0.0], [0.0, 1.0, 0.0]]], jnp.float32),
        "theta": jnp.ones((1, nctrl + 2, 2), jnp.float32) * 0.001,
        "ctrl_pts": uniform_ctrl_grid(*grid_shape),
        "refine": refine,
    }


if __name__ == "__main__":
    key = jax.random.PRNGKey(0)
    kp, kx = jax.random.split(key)
    params = init_params(kp)

    B, C, H, W = 2, 3, 16, 16
    out_size = (16, 16)  # GDNet default is (512, 512); small shapes for the smoke test
    x = jax.random.uniform(kx, (B, C, H, W), jnp.float32)

    fwd = jax.jit(gdnet_forward, static_argnames=("out_size",))
    out = jax.block_until_ready(fwd(params, x, out_size=out_size))
    assert out.shape == (B, C, out_size[0], out_size[1]), out.shape
    assert bool(jnp.all(jnp.isfinite(out)))
    print("KERNEL_OK")
</pallas_src>

<mosaic_0001>
module attributes {stable_mosaic.version = 11 : i64} {
  func.func private @main(%arg0: i32) attributes {dimension_semantics = [#tpu.dimension_semantics<core_parallel>], iteration_bounds = array<i64: 2>, tpu.core_type = #tpu.core_type<sc_scalar_subcore>, window_params = []} {
    return
  }
}

module attributes {stable_mosaic.version = 11 : i64} {
  func.func private @main(%arg0: i32) attributes {dimension_semantics = [#tpu.dimension_semantics<core_parallel>], iteration_bounds = array<i64: 2>, tpu.core_type = #tpu.core_type<sc_scalar_subcore>, window_params = []} {
    return
  }
}

module attributes {stable_mosaic.version = 11 : i64} {
  func.func @_mm_bias_act_kernel(%arg0: i32, %arg1: memref<256x28xf32, #tpu.memory_space<vmem>>, %arg2: memref<28x2xf32, #tpu.memory_space<vmem>>, %arg3: memref<1x2xf32, #tpu.memory_space<vmem>>, %arg4: memref<256x2xf32, #tpu.memory_space<vmem>>) attributes {dimension_semantics = [#tpu.dimension_semantics<parallel>], iteration_bounds = array<i64: 1>, scalar_prefetch = 0 : i64, scratch_operands = 0 : i64, tpu.core_type = #tpu.core_type<tc>, window_params = [{transform_indices = @transform_0, window_bounds = array<i64: 256, 28>}, {pipeline_mode = #tpu.pipeline_mode<synchronous>, transform_indices = @transform_1, window_bounds = array<i64: 28, 2>}, {pipeline_mode = #tpu.pipeline_mode<synchronous>, transform_indices = @transform_2, window_bounds = array<i64: 1, 2>}, {transform_indices = @transform_3, window_bounds = array<i64: 256, 2>}]} {
    %c0 = arith.constant 0 : index
    %c0_0 = arith.constant 0 : index
    %0 = vector.load %arg1[%c0, %c0_0] : memref<256x28xf32, #tpu.memory_space<vmem>>, vector<256x28xf32>
    %c0_1 = arith.constant 0 : index
    %c0_2 = arith.constant 0 : index
    %1 = vector.load %arg2[%c0_1, %c0_2] : memref<28x2xf32, #tpu.memory_space<vmem>>, vector<28x2xf32>
    %cst = arith.constant dense<0.000000e+00> : vector<256x2xf32>
    %2 = tpu.matmul %0, %1, %cst {dimension_numbers = #tpu.dot_dimension_numbers<[1], [0], [0], [1], [0, 0, 1, 1], [], []>} : vector<256x28xf32>, vector<28x2xf32>, vector<256x2xf32> -> vector<256x2xf32>
    %c0_3 = arith.constant 0 : index
    %c0_4 = arith.constant 0 : index
    %3 = vector.load %arg3[%c0_3, %c0_4] : memref<1x2xf32, #tpu.memory_space<vmem>>, vector<1x2xf32>
    %4 = vector.broadcast %3 : vector<1x2xf32> to vector<256x2xf32>
    %5 = arith.addf %2, %4 : vector<256x2xf32>
    %c0_5 = arith.constant 0 : index
    %c0_6 = arith.constant 0 : index
    %6 = vector.load %arg4[%c0_5, %c0_6] : memref<256x2xf32, #tpu.memory_space<vmem>>, vector<256x2xf32>
    tpu.vector_store %arg4[%c0_5, %c0_6], %5 {strides = array<i32>} : memref<256x2xf32, #tpu.memory_space<vmem>>, vector<256x2xf32>,
    return
  }
  func.func @transform_0(%arg0: i32) -> (i32, i32) {
    %c0_i32 = arith.constant 0 : i32
    %c0_i32_0 = arith.constant 0 : i32
    return %arg0, %c0_i32 : i32, i32
  }
  func.func @transform_1(%arg0: i32) -> (i32, i32) {
    %c0_i32 = arith.constant 0 : i32
    %c0_i32_0 = arith.constant 0 : i32
    %c0_i32_1 = arith.constant 0 : i32
    return %c0_i32, %c0_i32_0 : i32, i32
  }
  func.func @transform_2(%arg0: i32) -> (i32, i32) {
    %c0_i32 = arith.constant 0 : i32
    %c0_i32_0 = arith.constant 0 : i32
    %c0_i32_1 = arith.constant 0 : i32
    return %c0_i32, %c0_i32_0 : i32, i32
  }
  func.func @transform_3(%arg0: i32) -> (i32, i32) {
    %c0_i32 = arith.constant 0 : i32
    %c0_i32_0 = arith.constant 0 : i32
    return %arg0, %c0_i32 : i32, i32
  }
}

module attributes {stable_mosaic.version = 11 : i64} {
  func.func @_gn_stats_kernel(%arg0: i32, %arg1: memref<1x16x32xf32, #tpu.memory_space<vmem>>, %arg2: memref<1x1x32xf32, #tpu.memory_space<vmem>>, %arg3: memref<1x1x32xf32, #tpu.memory_space<vmem>>) attributes {dimension_semantics = [#tpu.dimension_semantics<parallel>], iteration_bounds = array<i64: 1>, scalar_prefetch = 0 : i64, scratch_operands = 0 : i64, tpu.core_type = #tpu.core_type<tc>, window_params = [{transform_indices = @transform_0, window_bounds = array<i64: 1, 16, 32>}, {transform_indices = @transform_1, window_bounds = array<i64: 1, 1, 32>}, {transform_indices = @transform_2, window_bounds = array<i64: 1, 1, 32>}]} {
    %c0 = arith.constant 0 : index
    %c0_0 = arith.constant 0 : index
    %c0_1 = arith.constant 0 : index
    %0 = vector.load %arg1[%c0, %c0_0, %c0_1] : memref<1x16x32xf32, #tpu.memory_space<vmem>>, vector<1x16x32xf32>
    %cst = arith.constant dense<0.000000e+00> : vector<1x32xf32>
    %1 = vector.multi_reduction <add>, %0, %cst [1] : vector<1x16x32xf32> to vector<1x32xf32>
    %2 = vector.shape_cast %1 : vector<1x32xf32> to vector<1x1x32xf32>
    %c0_2 = arith.constant 0 : index
    %c0_3 = arith.constant 0 : index
    %c0_4 = arith.constant 0 : index
    %3 = vector.load %arg2[%c0_2, %c0_3, %c0_4] : memref<1x1x32xf32, #tpu.memory_space<vmem>>, vector<1x1x32xf32>
    tpu.vector_store %arg2[%c0_2, %c0_3, %c0_4], %2 {strides = array<i32>} : memref<1x1x32xf32, #tpu.memory_space<vmem>>, vector<1x1x32xf32>,
    %4 = arith.mulf %0, %0 : vector<1x16x32xf32>
    %cst_5 = arith.constant dense<0.000000e+00> : vector<1x32xf32>
    %5 = vector.multi_reduction <add>, %4, %cst_5 [1] : vector<1x16x32xf32> to vector<1x32xf32>
    %6 = vector.shape_cast %5 : vector<1x32xf32> to vector<1x1x32xf32>
    %c0_6 = arith.constant 0 : index
    %c0_7 = arith.constant 0 : index
    %c0_8 = arith.constant 0 : index
    %7 = vector.load %arg3[%c0_6, %c0_7, %c0_8] : memref<1x1x32xf32, #tpu.memory_space<vmem>>, vector<1x1x32xf32>
    tpu.vector_store %arg3[%c0_6, %c0_7, %c0_8], %6 {strides = array<i32>} : memref<1x1x32xf32, #tpu.memory_space<vmem>>, vector<1x1x32xf32>,
    return
  }
  func.func @transform_0(%arg0: i32) -> (i32, i32, i32) {
    %c0_i32 = arith.constant 0 : i32
    %c0_i32_0 = arith.constant 0 : i32
    %c0_i32_1 = arith.constant 0 : i32
    return %arg0, %c0_i32, %c0_i32_0 : i32, i32, i32
  }
  func.func @transform_1(%arg0: i32) -> (i32, i32, i32) {
    %c0_i32 = arith.constant 0 : i32
    %c0_i32_0 = arith.constant 0 : i32
    %c0_i32_1 = arith.constant 0 : i32
    return %arg0, %c0_i32, %c0_i32_0 : i32, i32, i32
  }
  func.func @transform_2(%arg0: i32) -> (i32, i32, i32) {
    %c0_i32 = arith.constant 0 : i32
    %c0_i32_0 = arith.constant 0 : i32
    %c0_i32_1 = arith.constant 0 : i32
    return %arg0, %c0_i32, %c0_i32_0 : i32, i32, i32
  }
}

module attributes {stable_mosaic.version = 11 : i64} {
  func.func @_mm_bias_act_kernel(%arg0: i32, %arg1: memref<16x98xbf16, #tpu.memory_space<vmem>>, %arg2: memref<98x32xbf16, #tpu.memory_space<vmem>>, %arg3: memref<1x32xf32, #tpu.memory_space<vmem>>, %arg4: memref<16x32xf32, #tpu.memory_space<vmem>>) attributes {dimension_semantics = [#tpu.dimension_semantics<parallel>], iteration_bounds = array<i64: 1>, scalar_prefetch = 0 : i64, scratch_operands = 0 : i64, tpu.core_type = #tpu.core_type<tc>, window_params = [{transform_indices = @transform_0, window_bounds = array<i64: 16, 98>}, {pipeline_mode = #tpu.pipeline_mode<synchronous>, transform_indices = @transform_1, window_bounds = array<i64: 98, 32>}, {pipeline_mode = #tpu.pipeline_mode<synchronous>, transform_indices = @transform_2, window_bounds = array<i64: 1, 32>}, {transform_indices = @transform_3, window_bounds = array<i64: 16, 32>}]} {
    %c0 = arith.constant 0 : index
    %c0_0 = arith.constant 0 : index
    %0 = vector.load %arg1[%c0, %c0_0] : memref<16x98xbf16, #tpu.memory_space<vmem>>, vector<16x98xbf16>
    %c0_1 = arith.constant 0 : index
    %c0_2 = arith.constant 0 : index
    %1 = vector.load %arg2[%c0_1, %c0_2] : memref<98x32xbf16, #tpu.memory_space<vmem>>, vector<98x32xbf16>
    %cst = arith.constant dense<0.000000e+00> : vector<16x32xf32>
    %2 = tpu.matmul %0, %1, %cst {dimension_numbers = #tpu.dot_dimension_numbers<[1], [0], [0], [1], [0, 0, 1, 1], [], []>} : vector<16x98xbf16>, vector<98x32xbf16>, vector<16x32xf32> -> vector<16x32xf32>
    %c0_3 = arith.constant 0 : index
    %c0_4 = arith.constant 0 : index
    %3 = vector.load %arg3[%c0_3, %c0_4] : memref<1x32xf32, #tpu.memory_space<vmem>>, vector<1x32xf32>
    %4 = vector.broadcast %3 : vector<1x32xf32> to vector<16x32xf32>
    %5 = arith.addf %2, %4 : vector<16x32xf32>
    %cst_5 = arith.constant 0.000000e+00 : f32
    %6 = vector.broadcast %cst_5 : f32 to vector<16x32xf32>
    %7 = arith.maximumf %5, %6 : vector<16x32xf32>
    %c0_6 = arith.constant 0 : index
    %c0_7 = arith.constant 0 : index
    %8 = vector.load %arg4[%c0_6, %c0_7] : memref<16x32xf32, #tpu.memory_space<vmem>>, vector<16x32xf32>
    tpu.vector_store %arg4[%c0_6, %c0_7], %7 {strides = array<i32>} : memref<16x32xf32, #tpu.memory_space<vmem>>, vector<16x32xf32>,
    return
  }
  func.func @transform_0(%arg0: i32) -> (i32, i32) {
    %c0_i32 = arith.constant 0 : i32
    %c0_i32_0 = arith.constant 0 : i32
    return %arg0, %c0_i32 : i32, i32
  }
  func.func @transform_1(%arg0: i32) -> (i32, i32) {
    %c0_i32 = arith.constant 0 : i32
    %c0_i32_0 = arith.constant 0 : i32
    %c0_i32_1 = arith.constant 0 : i32
    return %c0_i32, %c0_i32_0 : i32, i32
  }
  func.func @transform_2(%arg0: i32) -> (i32, i32) {
    %c0_i32 = arith.constant 0 : i32
    %c0_i32_0 = arith.constant 0 : i32
    %c0_i32_1 = arith.constant 0 : i32
    return %c0_i32, %c0_i32_0 : i32, i32
  }
  func.func @transform_3(%arg0: i32) -> (i32, i32) {
    %c0_i32 = arith.constant 0 : i32
    %c0_i32_0 = arith.constant 0 : i32
    return %arg0, %c0_i32 : i32, i32
  }
}

module attributes {stable_mosaic.version = 11 : i64} {
  func.func @_gn_apply_kernel(%arg0: i32, %arg1: memref<1x16x32xf32, #tpu.memory_space<vmem>>, %arg2: memref<1x1x32xf32, #tpu.memory_space<vmem>>, %arg3: memref<1x1x32xf32, #tpu.memory_space<vmem>>, %arg4: memref<1x16x32xf32, #tpu.memory_space<vmem>>) attributes {dimension_semantics = [#tpu.dimension_semantics<parallel>], iteration_bounds = array<i64: 1>, scalar_prefetch = 0 : i64, scratch_operands = 0 : i64, tpu.core_type = #tpu.core_type<tc>, window_params = [{transform_indices = @transform_0, window_bounds = array<i64: 1, 16, 32>}, {transform_indices = @transform_1, window_bounds = array<i64: 1, 1, 32>}, {transform_indices = @transform_2, window_bounds = array<i64: 1, 1, 32>}, {transform_indices = @transform_3, window_bounds = array<i64: 1, 16, 32>}]} {
    %c0 = arith.constant 0 : index
    %c0_0 = arith.constant 0 : index
    %c0_1 = arith.constant 0 : index
    %0 = vector.load %arg1[%c0, %c0_0, %c0_1] : memref<1x16x32xf32, #tpu.memory_space<vmem>>, vector<1x16x32xf32>
    %c0_2 = arith.constant 0 : index
    %c0_3 = arith.constant 0 : index
    %c0_4 = arith.constant 0 : index
    %1 = vector.load %arg2[%c0_2, %c0_3, %c0_4] : memref<1x1x32xf32, #tpu.memory_space<vmem>>, vector<1x1x32xf32>
    %2 = vector.broadcast %1 : vector<1x1x32xf32> to vector<1x16x32xf32>
    %3 = arith.mulf %0, %2 : vector<1x16x32xf32>
    %c0_5 = arith.constant 0 : index
    %c0_6 = arith.constant 0 : index
    %c0_7 = arith.constant 0 : index
    %4 = vector.load %arg3[%c0_5, %c0_6, %c0_7] : memref<1x1x32xf32, #tpu.memory_space<vmem>>, vector<1x1x32xf32>
    %5 = vector.broadcast %4 : vector<1x1x32xf32> to vector<1x16x32xf32>
    %6 = arith.addf %3, %5 : vector<1x16x32xf32>
    %c0_8 = arith.constant 0 : index
    %c0_9 = arith.constant 0 : index
    %c0_10 = arith.constant 0 : index
    %7 = vector.load %arg4[%c0_8, %c0_9, %c0_10] : memref<1x16x32xf32, #tpu.memory_space<vmem>>, vector<1x16x32xf32>
    tpu.vector_store %arg4[%c0_8, %c0_9, %c0_10], %6 {strides = array<i32>} : memref<1x16x32xf32, #tpu.memory_space<vmem>>, vector<1x16x32xf32>,
    return
  }
  func.func @transform_0(%arg0: i32) -> (i32, i32, i32) {
    %c0_i32 = arith.constant 0 : i32
    %c0_i32_0 = arith.constant 0 : i32
    %c0_i32_1 = arith.constant 0 : i32
    return %arg0, %c0_i32, %c0_i32_0 : i32, i32, i32
  }
  func.func @transform_1(%arg0: i32) -> (i32, i32, i32) {
    %c0_i32 = arith.constant 0 : i32
    %c0_i32_0 = arith.constant 0 : i32
    %c0_i32_1 = arith.constant 0 : i32
    return %arg0, %c0_i32, %c0_i32_0 : i32, i32, i32
  }
  func.func @transform_2(%arg0: i32) -> (i32, i32, i32) {
    %c0_i32 = arith.constant 0 : i32
    %c0_i32_0 = arith.constant 0 : i32
    %c0_i32_1 = arith.constant 0 : i32
    return %arg0, %c0_i32, %c0_i32_0 : i32, i32, i32
  }
  func.func @transform_3(%arg0: i32) -> (i32, i32, i32) {
    %c0_i32 = arith.constant 0 : i32
    %c0_i32_0 = arith.constant 0 : i32
    %c0_i32_1 = arith.constant 0 : i32
    return %arg0, %c0_i32, %c0_i32_0 : i32, i32, i32
  }
}

module attributes {stable_mosaic.version = 11 : i64} {
  func.func @_mm_bias_act_kernel(%arg0: i32, %arg1: memref<16x288xbf16, #tpu.memory_space<vmem>>, %arg2: memref<288x64xbf16, #tpu.memory_space<vmem>>, %arg3: memref<1x64xf32, #tpu.memory_space<vmem>>, %arg4: memref<16x64xf32, #tpu.memory_space<vmem>>) attributes {dimension_semantics = [#tpu.dimension_semantics<parallel>], iteration_bounds = array<i64: 1>, scalar_prefetch = 0 : i64, scratch_operands = 0 : i64, tpu.core_type = #tpu.core_type<tc>, window_params = [{transform_indices = @transform_0, window_bounds = array<i64: 16, 288>}, {pipeline_mode = #tpu.pipeline_mode<synchronous>, transform_indices = @transform_1, window_bounds = array<i64: 288, 64>}, {pipeline_mode = #tpu.pipeline_mode<synchronous>, transform_indices = @transform_2, window_bounds = array<i64: 1, 64>}, {transform_indices = @transform_3, window_bounds = array<i64: 16, 64>}]} {
    %c0 = arith.constant 0 : index
    %c0_0 = arith.constant 0 : index
    %0 = vector.load %arg1[%c0, %c0_0] : memref<16x288xbf16, #tpu.memory_space<vmem>>, vector<16x288xbf16>
    %c0_1 = arith.constant 0 : index
    %c0_2 = arith.constant 0 : index
    %1 = vector.load %arg2[%c0_1, %c0_2] : memref<288x64xbf16, #tpu.memory_space<vmem>>, vector<288x64xbf16>
    %cst = arith.constant dense<0.000000e+00> : vector<16x64xf32>
    %2 = tpu.matmul %0, %1, %cst {dimension_numbers = #tpu.dot_dimension_numbers<[1], [0], [0], [1], [0, 0, 1, 1], [], []>} : vector<16x288xbf16>, vector<288x64xbf16>, vector<16x64xf32> -> vector<16x64xf32>
    %c0_3 = arith.constant 0 : index
    %c0_4 = arith.constant 0 : index
    %3 = vector.load %arg3[%c0_3, %c0_4] : memref<1x64xf32, #tpu.memory_space<vmem>>, vector<1x64xf32>
    %4 = vector.broadcast %3 : vector<1x64xf32> to vector<16x64xf32>
    %5 = arith.addf %2, %4 : vector<16x64xf32>
    %cst_5 = arith.constant 0.000000e+00 : f32
    %6 = vector.broadcast %cst_5 : f32 to vector<16x64xf32>
    %7 = arith.maximumf %5, %6 : vector<16x64xf32>
    %c0_6 = arith.constant 0 : index
    %c0_7 = arith.constant 0 : index
    %8 = vector.load %arg4[%c0_6, %c0_7] : memref<16x64xf32, #tpu.memory_space<vmem>>, vector<16x64xf32>
    tpu.vector_store %arg4[%c0_6, %c0_7], %7 {strides = array<i32>} : memref<16x64xf32, #tpu.memory_space<vmem>>, vector<16x64xf32>,
    return
  }
  func.func @transform_0(%arg0: i32) -> (i32, i32) {
    %c0_i32 = arith.constant 0 : i32
    %c0_i32_0 = arith.constant 0 : i32
    return %arg0, %c0_i32 : i32, i32
  }
  func.func @transform_1(%arg0: i32) -> (i32, i32) {
    %c0_i32 = arith.constant 0 : i32
    %c0_i32_0 = arith.constant 0 : i32
    %c0_i32_1 = arith.constant 0 : i32
    return %c0_i32, %c0_i32_0 : i32, i32
  }
  func.func @transform_2(%arg0: i32) -> (i32, i32) {
    %c0_i32 = arith.constant 0 : i32
    %c0_i32_0 = arith.constant 0 : i32
    %c0_i32_1 = arith.constant 0 : i32
    return %c0_i32, %c0_i32_0 : i32, i32
  }
  func.func @transform_3(%arg0: i32) -> (i32, i32) {
    %c0_i32 = arith.constant 0 : i32
    %c0_i32_0 = arith.constant 0 : i32
    return %arg0, %c0_i32 : i32, i32
  }
}

module attributes {stable_mosaic.version = 11 : i64} {
  func.func @_mm_bias_act_kernel(%arg0: i32, %arg1: memref<8x3136xbf16, #tpu.memory_space<vmem>>, %arg2: memref<3136x64xbf16, #tpu.memory_space<vmem>>, %arg3: memref<1x64xf32, #tpu.memory_space<vmem>>, %arg4: memref<8x64xf32, #tpu.memory_space<vmem>>) attributes {dimension_semantics = [#tpu.dimension_semantics<parallel>], iteration_bounds = array<i64: 1>, scalar_prefetch = 0 : i64, scratch_operands = 0 : i64, tpu.core_type = #tpu.core_type<tc>, window_params = [{transform_indices = @transform_0, window_bounds = array<i64: 8, 3136>}, {pipeline_mode = #tpu.pipeline_mode<synchronous>, transform_indices = @transform_1, window_bounds = array<i64: 3136, 64>}, {pipeline_mode = #tpu.pipeline_mode<synchronous>, transform_indices = @transform_2, window_bounds = array<i64: 1, 64>}, {transform_indices = @transform_3, window_bounds = array<i64: 8, 64>}]} {
    %c0 = arith.constant 0 : index
    %c0_0 = arith.constant 0 : index
    %0 = vector.load %arg1[%c0, %c0_0] : memref<8x3136xbf16, #tpu.memory_space<vmem>>, vector<8x3136xbf16>
    %c0_1 = arith.constant 0 : index
    %c0_2 = arith.constant 0 : index
    %1 = vector.load %arg2[%c0_1, %c0_2] : memref<3136x64xbf16, #tpu.memory_space<vmem>>, vector<3136x64xbf16>
    %cst = arith.constant dense<0.000000e+00> : vector<8x64xf32>
    %2 = tpu.matmul %0, %1, %cst {dimension_numbers = #tpu.dot_dimension_numbers<[1], [0], [0], [1], [0, 0, 1, 1], [], []>} : vector<8x3136xbf16>, vector<3136x64xbf16>, vector<8x64xf32> -> vector<8x64xf32>
    %c0_3 = arith.constant 0 : index
    %c0_4 = arith.constant 0 : index
    %3 = vector.load %arg3[%c0_3, %c0_4] : memref<1x64xf32, #tpu.memory_space<vmem>>, vector<1x64xf32>
    %4 = vector.broadcast %3 : vector<1x64xf32> to vector<8x64xf32>
    %5 = arith.addf %2, %4 : vector<8x64xf32>
    %cst_5 = arith.constant 0.000000e+00 : f32
    %6 = vector.broadcast %cst_5 : f32 to vector<8x64xf32>
    %7 = arith.maximumf %5, %6 : vector<8x64xf32>
    %c0_6 = arith.constant 0 : index
    %c0_7 = arith.constant 0 : index
    %8 = vector.load %arg4[%c0_6, %c0_7] : memref<8x64xf32, #tpu.memory_space<vmem>>, vector<8x64xf32>
    tpu.vector_store %arg4[%c0_6, %c0_7], %7 {strides = array<i32>} : memref<8x64xf32, #tpu.memory_space<vmem>>, vector<8x64xf32>,
    return
  }
  func.func @transform_0(%arg0: i32) -> (i32, i32) {
    %c0_i32 = arith.constant 0 : i32
    %c0_i32_0 = arith.constant 0 : i32
    return %arg0, %c0_i32 : i32, i32
  }
  func.func @transform_1(%arg0: i32) -> (i32, i32) {
    %c0_i32 = arith.constant 0 : i32
    %c0_i32_0 = arith.constant 0 : i32
    %c0_i32_1 = arith.constant 0 : i32
    return %c0_i32, %c0_i32_0 : i32, i32
  }
  func.func @transform_2(%arg0: i32) -> (i32, i32) {
    %c0_i32 = arith.constant 0 : i32
    %c0_i32_0 = arith.constant 0 : i32
    %c0_i32_1 = arith.constant 0 : i32
    return %c0_i32, %c0_i32_0 : i32, i32
  }
  func.func @transform_3(%arg0: i32) -> (i32, i32) {
    %c0_i32 = arith.constant 0 : i32
    %c0_i32_0 = arith.constant 0 : i32
    return %arg0, %c0_i32 : i32, i32
  }
}

module attributes {stable_mosaic.version = 11 : i64} {
  func.func @_mm_bias_act_kernel(%arg0: i32, %arg1: memref<8x576xbf16, #tpu.memory_space<vmem>>, %arg2: memref<576x128xbf16, #tpu.memory_space<vmem>>, %arg3: memref<1x128xf32, #tpu.memory_space<vmem>>, %arg4: memref<8x128xf32, #tpu.memory_space<vmem>>) attributes {dimension_semantics = [#tpu.dimension_semantics<parallel>], iteration_bounds = array<i64: 1>, scalar_prefetch = 0 : i64, scratch_operands = 0 : i64, tpu.core_type = #tpu.core_type<tc>, window_params = [{transform_indices = @transform_0, window_bounds = array<i64: 8, 576>}, {pipeline_mode = #tpu.pipeline_mode<synchronous>, transform_indices = @transform_1, window_bounds = array<i64: 576, 128>}, {pipeline_mode = #tpu.pipeline_mode<synchronous>, transform_indices = @transform_2, window_bounds = array<i64: 1, 128>}, {transform_indices = @transform_3, window_bounds = array<i64: 8, 128>}]} {
    %c0 = arith.constant 0 : index
    %c0_0 = arith.constant 0 : index
    %0 = vector.load %arg1[%c0, %c0_0] : memref<8x576xbf16, #tpu.memory_space<vmem>>, vector<8x576xbf16>
    %c0_1 = arith.constant 0 : index
    %c0_2 = arith.constant 0 : index
    %1 = vector.load %arg2[%c0_1, %c0_2] : memref<576x128xbf16, #tpu.memory_space<vmem>>, vector<576x128xbf16>
    %cst = arith.constant dense<0.000000e+00> : vector<8x128xf32>
    %2 = tpu.matmul %0, %1, %cst {dimension_numbers = #tpu.dot_dimension_numbers<[1], [0], [0], [1], [0, 0, 1, 1], [], []>} : vector<8x576xbf16>, vector<576x128xbf16>, vector<8x128xf32> -> vector<8x128xf32>
    %c0_3 = arith.constant 0 : index
    %c0_4 = arith.constant 0 : index
    %3 = vector.load %arg3[%c0_3, %c0_4] : memref<1x128xf32, #tpu.memory_space<vmem>>, vector<1x128xf32>
    %4 = vector.broadcast %3 : vector<1x128xf32> to vector<8x128xf32>
    %5 = arith.addf %2, %4 : vector<8x128xf32>
    %cst_5 = arith.constant 0.000000e+00 : f32
    %6 = vector.broadcast %cst_5 : f32 to vector<8x128xf32>
    %7 = arith.maximumf %5, %6 : vector<8x128xf32>
    %c0_6 = arith.constant 0 : index
    %c0_7 = arith.constant 0 : index
    %8 = vector.load %arg4[%c0_6, %c0_7] : memref<8x128xf32, #tpu.memory_space<vmem>>, vector<8x128xf32>
    tpu.vector_store %arg4[%c0_6, %c0_7], %7 {strides = array<i32>} : memref<8x128xf32, #tpu.memory_space<vmem>>, vector<8x128xf32>,
    return
  }
  func.func @transform_0(%arg0: i32) -> (i32, i32) {
    %c0_i32 = arith.constant 0 : i32
    %c0_i32_0 = arith.constant 0 : i32
    return %arg0, %c0_i32 : i32, i32
  }
  func.func @transform_1(%arg0: i32) -> (i32, i32) {
    %c0_i32 = arith.constant 0 : i32
    %c0_i32_0 = arith.constant 0 : i32
    %c0_i32_1 = arith.constant 0 : i32
    return %c0_i32, %c0_i32_0 : i32, i32
  }
  func.func @transform_2(%arg0: i32) -> (i32, i32) {
    %c0_i32 = arith.constant 0 : i32
    %c0_i32_0 = arith.constant 0 : i32
    %c0_i32_1 = arith.constant 0 : i32
    return %c0_i32, %c0_i32_0 : i32, i32
  }
  func.func @transform_3(%arg0: i32) -> (i32, i32) {
    %c0_i32 = arith.constant 0 : i32
    %c0_i32_0 = arith.constant 0 : i32
    return %arg0, %c0_i32 : i32, i32
  }
}

module attributes {stable_mosaic.version = 11 : i64} {
  func.func @_mm_bias_act_kernel(%arg0: i32, %arg1: memref<8x1152xbf16, #tpu.memory_space<vmem>>, %arg2: memref<1152x64xbf16, #tpu.memory_space<vmem>>, %arg3: memref<1x64xf32, #tpu.memory_space<vmem>>, %arg4: memref<8x64xf32, #tpu.memory_space<vmem>>) attributes {dimension_semantics = [#tpu.dimension_semantics<parallel>], iteration_bounds = array<i64: 1>, scalar_prefetch = 0 : i64, scratch_operands = 0 : i64, tpu.core_type = #tpu.core_type<tc>, window_params = [{transform_indices = @transform_0, window_bounds = array<i64: 8, 1152>}, {pipeline_mode = #tpu.pipeline_mode<synchronous>, transform_indices = @transform_1, window_bounds = array<i64: 1152, 64>}, {pipeline_mode = #tpu.pipeline_mode<synchronous>, transform_indices = @transform_2, window_bounds = array<i64: 1, 64>}, {transform_indices = @transform_3, window_bounds = array<i64: 8, 64>}]} {
    %c0 = arith.constant 0 : index
    %c0_0 = arith.constant 0 : index
    %0 = vector.load %arg1[%c0, %c0_0] : memref<8x1152xbf16, #tpu.memory_space<vmem>>, vector<8x1152xbf16>
    %c0_1 = arith.constant 0 : index
    %c0_2 = arith.constant 0 : index
    %1 = vector.load %arg2[%c0_1, %c0_2] : memref<1152x64xbf16, #tpu.memory_space<vmem>>, vector<1152x64xbf16>
    %cst = arith.constant dense<0.000000e+00> : vector<8x64xf32>
    %2 = tpu.matmul %0, %1, %cst {dimension_numbers = #tpu.dot_dimension_numbers<[1], [0], [0], [1], [0, 0, 1, 1], [], []>} : vector<8x1152xbf16>, vector<1152x64xbf16>, vector<8x64xf32> -> vector<8x64xf32>
    %c0_3 = arith.constant 0 : index
    %c0_4 = arith.constant 0 : index
    %3 = vector.load %arg3[%c0_3, %c0_4] : memref<1x64xf32, #tpu.memory_space<vmem>>, vector<1x64xf32>
    %4 = vector.broadcast %3 : vector<1x64xf32> to vector<8x64xf32>
    %5 = arith.addf %2, %4 : vector<8x64xf32>
    %cst_5 = arith.constant 0.000000e+00 : f32
    %6 = vector.broadcast %cst_5 : f32 to vector<8x64xf32>
    %7 = arith.maximumf %5, %6 : vector<8x64xf32>
    %c0_6 = arith.constant 0 : index
    %c0_7 = arith.constant 0 : index
    %8 = vector.load %arg4[%c0_6, %c0_7] : memref<8x64xf32, #tpu.memory_space<vmem>>, vector<8x64xf32>
    tpu.vector_store %arg4[%c0_6, %c0_7], %7 {strides = array<i32>} : memref<8x64xf32, #tpu.memory_space<vmem>>, vector<8x64xf32>,
    return
  }
  func.func @transform_0(%arg0: i32) -> (i32, i32) {
    %c0_i32 = arith.constant 0 : i32
    %c0_i32_0 = arith.constant 0 : i32
    return %arg0, %c0_i32 : i32, i32
  }
  func.func @transform_1(%arg0: i32) -> (i32, i32) {
    %c0_i32 = arith.constant 0 : i32
    %c0_i32_0 = arith.constant 0 : i32
    %c0_i32_1 = arith.constant 0 : i32
    return %c0_i32, %c0_i32_0 : i32, i32
  }
  func.func @transform_2(%arg0: i32) -> (i32, i32) {
    %c0_i32 = arith.constant 0 : i32
    %c0_i32_0 = arith.constant 0 : i32
    %c0_i32_1 = arith.constant 0 : i32
    return %c0_i32, %c0_i32_0 : i32, i32
  }
  func.func @transform_3(%arg0: i32) -> (i32, i32) {
    %c0_i32 = arith.constant 0 : i32
    %c0_i32_0 = arith.constant 0 : i32
    return %arg0, %c0_i32 : i32, i32
  }
}

module attributes {stable_mosaic.version = 11 : i64} {
  func.func @_mm_bias_act_kernel(%arg0: i32, %arg1: memref<8x64xbf16, #tpu.memory_space<vmem>>, %arg2: memref<64x64xbf16, #tpu.memory_space<vmem>>, %arg3: memref<1x64xf32, #tpu.memory_space<vmem>>, %arg4: memref<8x64xf32, #tpu.memory_space<vmem>>) attributes {dimension_semantics = [#tpu.dimension_semantics<parallel>], iteration_bounds = array<i64: 1>, scalar_prefetch = 0 : i64, scratch_operands = 0 : i64, tpu.core_type = #tpu.core_type<tc>, window_params = [{transform_indices = @transform_0, window_bounds = array<i64: 8, 64>}, {pipeline_mode = #tpu.pipeline_mode<synchronous>, transform_indices = @transform_1, window_bounds = array<i64: 64, 64>}, {pipeline_mode = #tpu.pipeline_mode<synchronous>, transform_indices = @transform_2, window_bounds = array<i64: 1, 64>}, {transform_indices = @transform_3, window_bounds = array<i64: 8, 64>}]} {
    %c0 = arith.constant 0 : index
    %c0_0 = arith.constant 0 : index
    %0 = vector.load %arg1[%c0, %c0_0] : memref<8x64xbf16, #tpu.memory_space<vmem>>, vector<8x64xbf16>
    %c0_1 = arith.constant 0 : index
    %c0_2 = arith.constant 0 : index
    %1 = vector.load %arg2[%c0_1, %c0_2] : memref<64x64xbf16, #tpu.memory_space<vmem>>, vector<64x64xbf16>
    %cst = arith.constant dense<0.000000e+00> : vector<8x64xf32>
    %2 = tpu.matmul %0, %1, %cst {dimension_numbers = #tpu.dot_dimension_numbers<[1], [0], [0], [1], [0, 0, 1, 1], [], []>} : vector<8x64xbf16>, vector<64x64xbf16>, vector<8x64xf32> -> vector<8x64xf32>
    %c0_3 = arith.constant 0 : index
    %c0_4 = arith.constant 0 : index
    %3 = vector.load %arg3[%c0_3, %c0_4] : memref<1x64xf32, #tpu.memory_space<vmem>>, vector<1x64xf32>
    %4 = vector.broadcast %3 : vector<1x64xf32> to vector<8x64xf32>
    %5 = arith.addf %2, %4 : vector<8x64xf32>
    %cst_5 = arith.constant 0.000000e+00 : f32
    %6 = vector.broadcast %cst_5 : f32 to vector<8x64xf32>
    %7 = arith.subf %6, %5 : vector<8x64xf32>
    %8 = math.exp %7 : vector<8x64xf32>
    %cst_6 = arith.constant 1.000000e+00 : f32
    %9 = vector.broadcast %cst_6 : f32 to vector<8x64xf32>
    %10 = arith.addf %9, %8 : vector<8x64xf32>
    %cst_7 = arith.constant 1.000000e+00 : f32
    %11 = vector.broadcast %cst_7 : f32 to vector<8x64xf32>
    %12 = arith.divf %11, %10 : vector<8x64xf32>
    %c0_8 = arith.constant 0 : index
    %c0_9 = arith.constant 0 : index
    %13 = vector.load %arg4[%c0_8, %c0_9] : memref<8x64xf32, #tpu.memory_space<vmem>>, vector<8x64xf32>
    tpu.vector_store %arg4[%c0_8, %c0_9], %12 {strides = array<i32>} : memref<8x64xf32, #tpu.memory_space<vmem>>, vector<8x64xf32>,
    return
  }
  func.func @transform_0(%arg0: i32) -> (i32, i32) {
    %c0_i32 = arith.constant 0 : i32
    %c0_i32_0 = arith.constant 0 : i32
    return %arg0, %c0_i32 : i32, i32
  }
  func.func @transform_1(%arg0: i32) -> (i32, i32) {
    %c0_i32 = arith.constant 0 : i32
    %c0_i32_0 = arith.constant 0 : i32
    %c0_i32_1 = arith.constant 0 : i32
    return %c0_i32, %c0_i32_0 : i32, i32
  }
  func.func @transform_2(%arg0: i32) -> (i32, i32) {
    %c0_i32 = arith.constant 0 : i32
    %c0_i32_0 = arith.constant 0 : i32
    %c0_i32_1 = arith.constant 0 : i32
    return %c0_i32, %c0_i32_0 : i32, i32
  }
  func.func @transform_3(%arg0: i32) -> (i32, i32) {
    %c0_i32 = arith.constant 0 : i32
    %c0_i32_0 = arith.constant 0 : i32
    return %arg0, %c0_i32 : i32, i32
  }
}

module attributes {stable_mosaic.version = 11 : i64} {
  func.func @_mm_bias_act_kernel(%arg0: i32, %arg1: memref<8x64xbf16, #tpu.memory_space<vmem>>, %arg2: memref<64x1024xbf16, #tpu.memory_space<vmem>>, %arg3: memref<1x1024xf32, #tpu.memory_space<vmem>>, %arg4: memref<8x1024xf32, #tpu.memory_space<vmem>>) attributes {dimension_semantics = [#tpu.dimension_semantics<parallel>], iteration_bounds = array<i64: 1>, scalar_prefetch = 0 : i64, scratch_operands = 0 : i64, tpu.core_type = #tpu.core_type<tc>, window_params = [{transform_indices = @transform_0, window_bounds = array<i64: 8, 64>}, {pipeline_mode = #tpu.pipeline_mode<synchronous>, transform_indices = @transform_1, window_bounds = array<i64: 64, 1024>}, {pipeline_mode = #tpu.pipeline_mode<synchronous>, transform_indices = @transform_2, window_bounds = array<i64: 1, 1024>}, {transform_indices = @transform_3, window_bounds = array<i64: 8, 1024>}]} {
    %c0 = arith.constant 0 : index
    %c0_0 = arith.constant 0 : index
    %0 = vector.load %arg1[%c0, %c0_0] : memref<8x64xbf16, #tpu.memory_space<vmem>>, vector<8x64xbf16>
    %c0_1 = arith.constant 0 : index
    %c0_2 = arith.constant 0 : index
    %1 = vector.load %arg2[%c0_1, %c0_2] : memref<64x1024xbf16, #tpu.memory_space<vmem>>, vector<64x1024xbf16>
    %cst = arith.constant dense<0.000000e+00> : vector<8x1024xf32>
    %2 = tpu.matmul %0, %1, %cst {dimension_numbers = #tpu.dot_dimension_numbers<[1], [0], [0], [1], [0, 0, 1, 1], [], []>} : vector<8x64xbf16>, vector<64x1024xbf16>, vector<8x1024xf32> -> vector<8x1024xf32>
    %c0_3 = arith.constant 0 : index
    %c0_4 = arith.constant 0 : index
    %3 = vector.load %arg3[%c0_3, %c0_4] : memref<1x1024xf32, #tpu.memory_space<vmem>>, vector<1x1024xf32>
    %4 = vector.broadcast %3 : vector<1x1024xf32> to vector<8x1024xf32>
    %5 = arith.addf %2, %4 : vector<8x1024xf32>
    %cst_5 = arith.constant 0.000000e+00 : f32
    %6 = vector.broadcast %cst_5 : f32 to vector<8x1024xf32>
    %7 = arith.cmpf ogt, %5, %6 : vector<8x1024xf32>
    %cst_6 = arith.constant 0.00999999977 : f32
    %8 = vector.broadcast %cst_6 : f32 to vector<8x1024xf32>
    %9 = arith.mulf %8, %5 : vector<8x1024xf32>
    %10 = arith.select %7, %5, %9 : vector<8x1024xi1>, vector<8x1024xf32>
    %c0_7 = arith.constant 0 : index
    %c0_8 = arith.constant 0 : index
    %11 = vector.load %arg4[%c0_7, %c0_8] : memref<8x1024xf32, #tpu.memory_space<vmem>>, vector<8x1024xf32>
    tpu.vector_store %arg4[%c0_7, %c0_8], %10 {strides = array<i32>} : memref<8x1024xf32, #tpu.memory_space<vmem>>, vector<8x1024xf32>,
    return
  }
  func.func @transform_0(%arg0: i32) -> (i32, i32) {
    %c0_i32 = arith.constant 0 : i32
    %c0_i32_0 = arith.constant 0 : i32
    return %arg0, %c0_i32 : i32, i32
  }
  func.func @transform_1(%arg0: i32) -> (i32, i32) {
    %c0_i32 = arith.constant 0 : i32
    %c0_i32_0 = arith.constant 0 : i32
    %c0_i32_1 = arith.constant 0 : i32
    return %c0_i32, %c0_i32_0 : i32, i32
  }
  func.func @transform_2(%arg0: i32) -> (i32, i32) {
    %c0_i32 = arith.constant 0 : i32
    %c0_i32_0 = arith.constant 0 : i32
    %c0_i32_1 = arith.constant 0 : i32
    return %c0_i32, %c0_i32_0 : i32, i32
  }
  func.func @transform_3(%arg0: i32) -> (i32, i32) {
    %c0_i32 = arith.constant 0 : i32
    %c0_i32_0 = arith.constant 0 : i32
    return %arg0, %c0_i32 : i32, i32
  }
}

module attributes {stable_mosaic.version = 11 : i64} {
  func.func @_mm_bias_act_kernel(%arg0: i32, %arg1: memref<16x32xbf16, #tpu.memory_space<vmem>>, %arg2: memref<32x32xbf16, #tpu.memory_space<vmem>>, %arg3: memref<1x32xf32, #tpu.memory_space<vmem>>, %arg4: memref<16x32xf32, #tpu.memory_space<vmem>>) attributes {dimension_semantics = [#tpu.dimension_semantics<parallel>], iteration_bounds = array<i64: 1>, scalar_prefetch = 0 : i64, scratch_operands = 0 : i64, tpu.core_type = #tpu.core_type<tc>, window_params = [{transform_indices = @transform_0, window_bounds = array<i64: 16, 32>}, {pipeline_mode = #tpu.pipeline_mode<synchronous>, transform_indices = @transform_1, window_bounds = array<i64: 32, 32>}, {pipeline_mode = #tpu.pipeline_mode<synchronous>, transform_indices = @transform_2, window_bounds = array<i64: 1, 32>}, {transform_indices = @transform_3, window_bounds = array<i64: 16, 32>}]} {
    %c0 = arith.constant 0 : index
    %c0_0 = arith.constant 0 : index
    %0 = vector.load %arg1[%c0, %c0_0] : memref<16x32xbf16, #tpu.memory_space<vmem>>, vector<16x32xbf16>
    %c0_1 = arith.constant 0 : index
    %c0_2 = arith.constant 0 : index
    %1 = vector.load %arg2[%c0_1, %c0_2] : memref<32x32xbf16, #tpu.memory_space<vmem>>, vector<32x32xbf16>
    %cst = arith.constant dense<0.000000e+00> : vector<16x32xf32>
    %2 = tpu.matmul %0, %1, %cst {dimension_numbers = #tpu.dot_dimension_numbers<[1], [0], [0], [1], [0, 0, 1, 1], [], []>} : vector<16x32xbf16>, vector<32x32xbf16>, vector<16x32xf32> -> vector<16x32xf32>
    %c0_3 = arith.constant 0 : index
    %c0_4 = arith.constant 0 : index
    %3 = vector.load %arg3[%c0_3, %c0_4] : memref<1x32xf32, #tpu.memory_space<vmem>>, vector<1x32xf32>
    %4 = vector.broadcast %3 : vector<1x32xf32> to vector<16x32xf32>
    %5 = arith.addf %2, %4 : vector<16x32xf32>
    %cst_5 = arith.constant 0.000000e+00 : f32
    %6 = vector.broadcast %cst_5 : f32 to vector<16x32xf32>
    %7 = arith.subf %6, %5 : vector<16x32xf32>
    %8 = math.exp %7 : vector<16x32xf32>
    %cst_6 = arith.constant 1.000000e+00 : f32
    %9 = vector.broadcast %cst_6 : f32 to vector<16x32xf32>
    %10 = arith.addf %9, %8 : vector<16x32xf32>
    %cst_7 = arith.constant 1.000000e+00 : f32
    %11 = vector.broadcast %cst_7 : f32 to vector<16x32xf32>
    %12 = arith.divf %11, %10 : vector<16x32xf32>
    %c0_8 = arith.constant 0 : index
    %c0_9 = arith.constant 0 : index
    %13 = vector.load %arg4[%c0_8, %c0_9] : memref<16x32xf32, #tpu.memory_space<vmem>>, vector<16x32xf32>
    tpu.vector_store %arg4[%c0_8, %c0_9], %12 {strides = array<i32>} : memref<16x32xf32, #tpu.memory_space<vmem>>, vector<16x32xf32>,
    return
  }
  func.func @transform_0(%arg0: i32) -> (i32, i32) {
    %c0_i32 = arith.constant 0 : i32
    %c0_i32_0 = arith.constant 0 : i32
    return %arg0, %c0_i32 : i32, i32
  }
  func.func @transform_1(%arg0: i32) -> (i32, i32) {
    %c0_i32 = arith.constant 0 : i32
    %c0_i32_0 = arith.constant 0 : i32
    %c0_i32_1 = arith.constant 0 : i32
    return %c0_i32, %c0_i32_0 : i32, i32
  }
  func.func @transform_2(%arg0: i32) -> (i32, i32) {
    %c0_i32 = arith.constant 0 : i32
    %c0_i32_0 = arith.constant 0 : i32
    %c0_i32_1 = arith.constant 0 : i32
    return %c0_i32, %c0_i32_0 : i32, i32
  }
  func.func @transform_3(%arg0: i32) -> (i32, i32) {
    %c0_i32 = arith.constant 0 : i32
    %c0_i32_0 = arith.constant 0 : i32
    return %arg0, %c0_i32 : i32, i32
  }
}

module attributes {stable_mosaic.version = 11 : i64} {
  func.func @_mm_bias_act_kernel(%arg0: i32, %arg1: memref<16x576xbf16, #tpu.memory_space<vmem>>, %arg2: memref<576x32xbf16, #tpu.memory_space<vmem>>, %arg3: memref<1x32xf32, #tpu.memory_space<vmem>>, %arg4: memref<16x32xf32, #tpu.memory_space<vmem>>) attributes {dimension_semantics = [#tpu.dimension_semantics<parallel>], iteration_bounds = array<i64: 1>, scalar_prefetch = 0 : i64, scratch_operands = 0 : i64, tpu.core_type = #tpu.core_type<tc>, window_params = [{transform_indices = @transform_0, window_bounds = array<i64: 16, 576>}, {pipeline_mode = #tpu.pipeline_mode<synchronous>, transform_indices = @transform_1, window_bounds = array<i64: 576, 32>}, {pipeline_mode = #tpu.pipeline_mode<synchronous>, transform_indices = @transform_2, window_bounds = array<i64: 1, 32>}, {transform_indices = @transform_3, window_bounds = array<i64: 16, 32>}]} {
    %c0 = arith.constant 0 : index
    %c0_0 = arith.constant 0 : index
    %0 = vector.load %arg1[%c0, %c0_0] : memref<16x576xbf16, #tpu.memory_space<vmem>>, vector<16x576xbf16>
    %c0_1 = arith.constant 0 : index
    %c0_2 = arith.constant 0 : index
    %1 = vector.load %arg2[%c0_1, %c0_2] : memref<576x32xbf16, #tpu.memory_space<vmem>>, vector<576x32xbf16>
    %cst = arith.constant dense<0.000000e+00> : vector<16x32xf32>
    %2 = tpu.matmul %0, %1, %cst {dimension_numbers = #tpu.dot_dimension_numbers<[1], [0], [0], [1], [0, 0, 1, 1], [], []>} : vector<16x576xbf16>, vector<576x32xbf16>, vector<16x32xf32> -> vector<16x32xf32>
    %c0_3 = arith.constant 0 : index
    %c0_4 = arith.constant 0 : index
    %3 = vector.load %arg3[%c0_3, %c0_4] : memref<1x32xf32, #tpu.memory_space<vmem>>, vector<1x32xf32>
    %4 = vector.broadcast %3 : vector<1x32xf32> to vector<16x32xf32>
    %5 = arith.addf %2, %4 : vector<16x32xf32>
    %cst_5 = arith.constant 0.000000e+00 : f32
    %6 = vector.broadcast %cst_5 : f32 to vector<16x32xf32>
    %7 = arith.maximumf %5, %6 : vector<16x32xf32>
    %c0_6 = arith.constant 0 : index
    %c0_7 = arith.constant 0 : index
    %8 = vector.load %arg4[%c0_6, %c0_7] : memref<16x32xf32, #tpu.memory_space<vmem>>, vector<16x32xf32>
    tpu.vector_store %arg4[%c0_6, %c0_7], %7 {strides = array<i32>} : memref<16x32xf32, #tpu.memory_space<vmem>>, vector<16x32xf32>,
    return
  }
  func.func @transform_0(%arg0: i32) -> (i32, i32) {
    %c0_i32 = arith.constant 0 : i32
    %c0_i32_0 = arith.constant 0 : i32
    return %arg0, %c0_i32 : i32, i32
  }
  func.func @transform_1(%arg0: i32) -> (i32, i32) {
    %c0_i32 = arith.constant 0 : i32
    %c0_i32_0 = arith.constant 0 : i32
    %c0_i32_1 = arith.constant 0 : i32
    return %c0_i32, %c0_i32_0 : i32, i32
  }
  func.func @transform_2(%arg0: i32) -> (i32, i32) {
    %c0_i32 = arith.constant 0 : i32
    %c0_i32_0 = arith.constant 0 : i32
    %c0_i32_1 = arith.constant 0 : i32
    return %c0_i32, %c0_i32_0 : i32, i32
  }
  func.func @transform_3(%arg0: i32) -> (i32, i32) {
    %c0_i32 = arith.constant 0 : i32
    %c0_i32_0 = arith.constant 0 : i32
    return %arg0, %c0_i32 : i32, i32
  }
}

module attributes {stable_mosaic.version = 11 : i64} {
  func.func @_mm_bias_act_kernel(%arg0: i32, %arg1: memref<16x32xbf16, #tpu.memory_space<vmem>>, %arg2: memref<32x32xbf16, #tpu.memory_space<vmem>>, %arg3: memref<1x32xf32, #tpu.memory_space<vmem>>, %arg4: memref<16x32xf32, #tpu.memory_space<vmem>>) attributes {dimension_semantics = [#tpu.dimension_semantics<parallel>], iteration_bounds = array<i64: 1>, scalar_prefetch = 0 : i64, scratch_operands = 0 : i64, tpu.core_type = #tpu.core_type<tc>, window_params = [{transform_indices = @transform_0, window_bounds = array<i64: 16, 32>}, {pipeline_mode = #tpu.pipeline_mode<synchronous>, transform_indices = @transform_1, window_bounds = array<i64: 32, 32>}, {pipeline_mode = #tpu.pipeline_mode<synchronous>, transform_indices = @transform_2, window_bounds = array<i64: 1, 32>}, {transform_indices = @transform_3, window_bounds = array<i64: 16, 32>}]} {
    %c0 = arith.constant 0 : index
    %c0_0 = arith.constant 0 : index
    %0 = vector.load %arg1[%c0, %c0_0] : memref<16x32xbf16, #tpu.memory_space<vmem>>, vector<16x32xbf16>
    %c0_1 = arith.constant 0 : index
    %c0_2 = arith.constant 0 : index
    %1 = vector.load %arg2[%c0_1, %c0_2] : memref<32x32xbf16, #tpu.memory_space<vmem>>, vector<32x32xbf16>
    %cst = arith.constant dense<0.000000e+00> : vector<16x32xf32>
    %2 = tpu.matmul %0, %1, %cst {dimension_numbers = #tpu.dot_dimension_numbers<[1], [0], [0], [1], [0, 0, 1, 1], [], []>} : vector<16x32xbf16>, vector<32x32xbf16>, vector<16x32xf32> -> vector<16x32xf32>
    %c0_3 = arith.constant 0 : index
    %c0_4 = arith.constant 0 : index
    %3 = vector.load %arg3[%c0_3, %c0_4] : memref<1x32xf32, #tpu.memory_space<vmem>>, vector<1x32xf32>
    %4 = vector.broadcast %3 : vector<1x32xf32> to vector<16x32xf32>
    %5 = arith.addf %2, %4 : vector<16x32xf32>
    %cst_5 = arith.constant 0.000000e+00 : f32
    %6 = vector.broadcast %cst_5 : f32 to vector<16x32xf32>
    %7 = arith.cmpf ogt, %5, %6 : vector<16x32xf32>
    %cst_6 = arith.constant 0.00999999977 : f32
    %8 = vector.broadcast %cst_6 : f32 to vector<16x32xf32>
    %9 = arith.mulf %8, %5 : vector<16x32xf32>
    %10 = arith.select %7, %5, %9 : vector<16x32xi1>, vector<16x32xf32>
    %c0_7 = arith.constant 0 : index
    %c0_8 = arith.constant 0 : index
    %11 = vector.load %arg4[%c0_7, %c0_8] : memref<16x32xf32, #tpu.memory_space<vmem>>, vector<16x32xf32>
    tpu.vector_store %arg4[%c0_7, %c0_8], %10 {strides = array<i32>} : memref<16x32xf32, #tpu.memory_space<vmem>>, vector<16x32xf32>,
    return
  }
  func.func @transform_0(%arg0: i32) -> (i32, i32) {
    %c0_i32 = arith.constant 0 : i32
    %c0_i32_0 = arith.constant 0 : i32
    return %arg0, %c0_i32 : i32, i32
  }
  func.func @transform_1(%arg0: i32) -> (i32, i32) {
    %c0_i32 = arith.constant 0 : i32
    %c0_i32_0 = arith.constant 0 : i32
    %c0_i32_1 = arith.constant 0 : i32
    return %c0_i32, %c0_i32_0 : i32, i32
  }
  func.func @transform_2(%arg0: i32) -> (i32, i32) {
    %c0_i32 = arith.constant 0 : i32
    %c0_i32_0 = arith.constant 0 : i32
    %c0_i32_1 = arith.constant 0 : i32
    return %c0_i32, %c0_i32_0 : i32, i32
  }
  func.func @transform_3(%arg0: i32) -> (i32, i32) {
    %c0_i32 = arith.constant 0 : i32
    %c0_i32_0 = arith.constant 0 : i32
    return %arg0, %c0_i32 : i32, i32
  }
}

</mosaic_0001>

<llo_original>
// kernel: gdnet_forward.13
$region0: #{gdnet_forward.13}
  #allocation0 [shape = 'u32[]', space=smem, size = 0x4, offset = 0x4, fixed_abs, tag = 'smem constant byte address 0x4 - core index']
  #allocation1 [shape = 'u32[144,128]{1,0:T(1,128)}', space=vmem, size = 0x12000, scoped, tag = 'internal scratch']
  %s0 = inlined_call_operand.vmem [shape: f32[256,28], index: 0, kind: input, shape index: {}]
  %s1 = inlined_call_operand.vmem [shape: f32[28,2], index: 1, kind: input, shape index: {}]
  %s2 = inlined_call_operand.vmem [shape: f32[1,2], index: 2, kind: input, shape index: {}]
  %s3 = inlined_call_operand.vmem [shape: f32[256,2], index: 3, kind: output, shape index: {}]
  %s4 = sld [smem:[#allocation0]]
  $region22: #{gdnet_forward.13} parent=0
    _
  %s6 = ssub.s32 1, %s4
  %s7 = scalar_select 0, %s6, %s4
  // Predicated region
  $region2: #{gdnet_forward.13} parent=0 // pred_check
    _
  $region3: #{gdnet_forward.13} parent=0 // pred_check_branch
    %9 = sbr.rel (0) target = $region5
  $region4: #{gdnet_forward.13} parent=0 // pred_region
    _
  $region5: #{gdnet_forward.13} parent=0 // pred_fallthru
    _
  // Predicated region
  $region6: #{gdnet_forward.13} parent=0 // pred_check
    _
  $region7: #{gdnet_forward.13} parent=0 // pred_check_branch
    %11 = sbr.rel (0) target = $region9
  $region8: #{gdnet_forward.13} parent=0 // pred_region
    _
  $region9: #{gdnet_forward.13} parent=0 // pred_fallthru
    _
  // Predicated region
  $region10: #{gdnet_forward.13} parent=0 // pred_check
    _
  $region11: #{gdnet_forward.13} parent=0 // pred_check_branch
    %13 = sbr.rel (0) target = $region13
  $region12: #{gdnet_forward.13} parent=0 // pred_region
    _
  $region13: #{gdnet_forward.13} parent=0 // pred_fallthru
    _
  %v14 = vld [vmem:[%s0] sm:$0xff]
  %v15 = vld [vmem:[%s0 + $0x8] sm:$0xff]
  %v16 = vld [vmem:[%s0 + $0x10] sm:$0xff]
  %v17 = vld [vmem:[%s0 + $0x18] sm:$0xff]
  %v18 = vld [vmem:[%s0 + $0x20] sm:$0xff]
  %v19 = vld [vmem:[%s0 + $0x28] sm:$0xff]
  %v20 = vld [vmem:[%s0 + $0x30] sm:$0xff]
  %v21 = vld [vmem:[%s0 + $0x38] sm:$0xff]
  %v22 = vld [vmem:[%s0 + $0x40] sm:$0xff]
  %v23 = vld [vmem:[%s0 + $0x48] sm:$0xff]
  %v24 = vld [vmem:[%s0 + $0x50] sm:$0xff]
  %v25 = vld [vmem:[%s0 + $0x58] sm:$0xff]
  %v26 = vld [vmem:[%s0 + $0x60] sm:$0xff]
  %v27 = vld [vmem:[%s0 + $0x68] sm:$0xff]
  %v28 = vld [vmem:[%s0 + $0x70] sm:$0xff]
  %v29 = vld [vmem:[%s0 + $0x78] sm:$0xff]
  %v30 = vld [vmem:[%s0 + $0x80] sm:$0xff]
  %v31 = vld [vmem:[%s0 + $0x88] sm:$0xff]
  %v32 = vld [vmem:[%s0 + $0x90] sm:$0xff]
  %v33 = vld [vmem:[%s0 + $0x98] sm:$0xff]
  %v34 = vld [vmem:[%s0 + $0xa0] sm:$0xff]
  %v35 = vld [vmem:[%s0 + $0xa8] sm:$0xff]
  %v36 = vld [vmem:[%s0 + $0xb0] sm:$0xff]
  %v37 = vld [vmem:[%s0 + $0xb8] sm:$0xff]
  %v38 = vld [vmem:[%s0 + $0xc0] sm:$0xff]
  %v39 = vld [vmem:[%s0 + $0xc8] sm:$0xff]
  %v40 = vld [vmem:[%s0 + $0xd0] sm:$0xff]
  %v41 = vld [vmem:[%s0 + $0xd8] sm:$0xff]
  %v42 = vld [vmem:[%s0 + $0xe0] sm:$0xff]
  %v43 = vld [vmem:[%s0 + $0xe8] sm:$0xff]
  %v44 = vld [vmem:[%s0 + $0xf0] sm:$0xff]
  %v45 = vld [vmem:[%s0 + $0xf8] sm:$0xff]
  %v46 = vld [vmem:[%s1] sm:$0xff]
  %v47 = vld [vmem:[%s1 + $0x8] sm:$0xff]
  %v48 = vld [vmem:[%s1 + $0x10] sm:$0xff]
  %v49 = vld [vmem:[%s1 + $0x18] sm:$0xf]
  %v50 = vld [vmem:[%s2] sm:$0x1]
  %v52 = vlaneseq
  %v53 = vshrl.u32 %v52, 7
  %v54 = vsub.s32 0, %v53
  %v55 = vrot.slane %v50, %v54
  %vm57 = vcmask 228352
  %v59 = vsel %vm57, %v14, 0
  %v62 = vsel %vm57, %v15, 0
  %v65 = vsel %vm57, %v16, 0
  %v68 = vsel %vm57, %v17, 0
  %v71 = vsel %vm57, %v18, 0
  %v74 = vsel %vm57, %v19, 0
  %v77 = vsel %vm57, %v20, 0
  %v80 = vsel %vm57, %v21, 0
  %v83 = vsel %vm57, %v22, 0
  %v86 = vsel %vm57, %v23, 0
  %v89 = vsel %vm57, %v24, 0
  %v92 = vsel %vm57, %v25, 0
  %v95 = vsel %vm57, %v26, 0
  %v98 = vsel %vm57, %v27, 0
  %v101 = vsel %vm57, %v28, 0
  %v104 = vsel %vm57, %v29, 0
  %v107 = vsel %vm57, %v30, 0
  %v110 = vsel %vm57, %v31, 0
  %v113 = vsel %vm57, %v32, 0
  %v116 = vsel %vm57, %v33, 0
  %v119 = vsel %vm57, %v34, 0
  %v122 = vsel %vm57, %v35, 0
  %v125 = vsel %vm57, %v36, 0
  %v128 = vsel %vm57, %v37, 0
  %v131 = vsel %vm57, %v38, 0
  %v134 = vsel %vm57, %v39, 0
  %v137 = vsel %vm57, %v40, 0
  %v140 = vsel %vm57, %v41, 0
  %v143 = vsel %vm57, %v42, 0
  %v146 = vsel %vm57, %v43, 0
  %v149 = vsel %vm57, %v44, 0
  %v152 = vsel %vm57, %v45, 0
  %vm154 = vcmask 1043456
  %v156 = vsel %vm154, %v49, 0
  %158 = vmatprep.subr.mxu0 0.0
  %159 = vmatpush1.msra.mxu0 %v46
  %160 = vmatprep.subr.mxu0 0.0
  %161 = vmatpush1.msra.mxu0 %v47
  %162 = vmatprep.subr.mxu0 0.0
  %163 = vmatpush1.msra.mxu0 %v48
  %164 = vmatprep.subr.mxu0 0.0
  %165 = vmatpush1.msra.mxu0 %v156
  %166 = vmatprep.subr.mxu0 0.0
  %167 = vmatpush1.msra.mxu0 0.0
  %168 = vmatprep.subr.mxu0 0.0
  %169 = vmatpush1.msra.mxu0 0.0
  %170 = vmatprep.subr.mxu0 0.0
  %171 = vmatpush1.msra.mxu0 0.0
  %172 = vmatprep.subr.mxu0 0.0
  %173 = vmatpush1.msra.mxu0 0.0
  %174 = vmatprep.subr.mxu0 0.0
  %175 = vmatpush1.msra.mxu0 0.0
  %176 = vmatprep.subr.mxu0 0.0
  %177 = vmatpush1.msra.mxu0 0.0
  %178 = vmatprep.subr.mxu0 0.0
  %179 = vmatpush1.msra.mxu0 0.0
  %180 = vmatprep.subr.mxu0 0.0
  %181 = vmatpush1.msra.mxu0 0.0
  %182 = vmatprep.subr.mxu0 0.0
  %183 = vmatpush1.msra.mxu0 0.0
  %184 = vmatprep.subr.mxu0 0.0
  %185 = vmatpush1.msra.mxu0 0.0
  %186 = vmatprep.subr.mxu0 0.0
  %187 = vmatpush1.msra.mxu0 0.0
  %188 = vmatprep.subr.mxu0 0.0
  %189 = vmatpush1.msra.mxu0 0.0
  %190 = vmatprep.subr.mxu0 0.0
  %191 = vmatpush1.msra.mxu0 0.0
  %192 = vmatprep.subr.mxu0 0.0
  %193 = vmatpush1.msra.mxu0 0.0
  %194 = vmatprep.subr.mxu0 0.0
  %195 = vmatpush1.msra.mxu0 0.0
  %196 = vmatprep.subr.mxu0 0.0
  %197 = vmatpush1.msra.mxu0 0.0
  %198 = vmatprep.subr.mxu0 0.0
  %199 = vmatpush1.msra.mxu0 0.0
  %200 = vmatprep.subr.mxu0 0.0
  %201 = vmatpush1.msra.mxu0 0.0
  %202 = vmatprep.subr.mxu0 0.0
  %203 = vmatpush1.msra.mxu0 0.0
  %204 = vmatprep.subr.mxu0 0.0
  %205 = vmatpush1.msra.mxu0 0.0
  %206 = vmatprep.subr.mxu0 0.0
  %207 = vmatpush1.msra.mxu0 0.0
  %208 = vmatprep.subr.mxu0 0.0
  %209 = vmatpush1.msra.mxu0 0.0
  %210 = vmatprep.subr.mxu0 0.0
  %211 = vmatpush1.msra.mxu0 0.0
  %212 = vmatprep.subr.mxu0 0.0
  %213 = vmatpush1.msra.mxu0 0.0
  %214 = vmatprep.subr.mxu0 0.0
  %215 = vmatpush1.msra.mxu0 0.0
  %216 = vmatprep.subr.mxu0 0.0
  %217 = vmatpush1.msra.mxu0 0.0
  %218 = vmatprep.subr.mxu0 0.0
  %219 = vmatpush1.msra.mxu0 0.0
  %220 = vmatprep.subr.mxu0 0.0
  %221 = vmatpush1.msra.mxu0 0.0
  %222 = vmatprep.mubr.f32.mxu0 0.0
  %223 = vmatmul.mubr.f32.gmra.mrb[0].mxu0 %v59
  %v224 = vpop.f32.mrb[0].mxu0
  %v225 = vadd.f32 %v55, %v224
  %v226 = vpop.f32.mrb[0].mxu0
  %227 = vmatprep.mubr.f32.mxu0 0.0
  %228 = vmatmul.mubr.f32.gmra.mrb[0].mxu0 %v62
  %v229 = vpop.f32.mrb[0].mxu0
  %v230 = vadd.f32 %v55, %v229
  %v231 = vpop.f32.mrb[0].mxu0
  %232 = vmatprep.mubr.f32.mxu0 0.0
  %233 = vmatmul.mubr.f32.gmra.mrb[0].mxu0 %v65
  %v234 = vpop.f32.mrb[0].mxu0
  %v235 = vadd.f32 %v55, %v234
  %v236 = vpop.f32.mrb[0].mxu0
  %237 = vmatprep.mubr.f32.mxu0 0.0
  %238 = vmatmul.mubr.f32.gmra.mrb[0].mxu0 %v68
  %v239 = vpop.f32.mrb[0].mxu0
  %v240 = vadd.f32 %v55, %v239
  %v241 = vpop.f32.mrb[0].mxu0
  %242 = vmatprep.mubr.f32.mxu0 0.0
  %243 = vmatmul.mubr.f32.gmra.mrb[0].mxu0 %v71
  %v244 = vpop.f32.mrb[0].mxu0
  %v245 = vadd.f32 %v55, %v244
  %v246 = vpop.f32.mrb[0].mxu0
  %247 = vmatprep.mubr.f32.mxu0 0.0
  %248 = vmatmul.mubr.f32.gmra.mrb[0].mxu0 %v74
  %v249 = vpop.f32.mrb[0].mxu0
  %v250 = vadd.f32 %v55, %v249
  %v251 = vpop.f32.mrb[0].mxu0
  %252 = vmatprep.mubr.f32.mxu0 0.0
  %253 = vmatmul.mubr.f32.gmra.mrb[0].mxu0 %v77
  %v254 = vpop.f32.mrb[0].mxu0
  %v255 = vadd.f32 %v55, %v254
  %v256 = vpop.f32.mrb[0].mxu0
  %257 = vmatprep.mubr.f32.mxu0 0.0
  %258 = vmatmul.mubr.f32.gmra.mrb[0].mxu0 %v80
  %v259 = vpop.f32.mrb[0].mxu0
  %v260 = vadd.f32 %v55, %v259
  %v261 = vpop.f32.mrb[0].mxu0
  %262 = vmatprep.mubr.f32.mxu0 0.0
  %263 = vmatmul.mubr.f32.gmra.mrb[0].mxu0 %v83
  %v264 = vpop.f32.mrb[0].mxu0
  %v265 = vadd.f32 %v55, %v264
  %v266 = vpop.f32.mrb[0].mxu0
  %267 = vmatprep.mubr.f32.mxu0 0.0
  %268 = vmatmul.mubr.f32.gmra.mrb[0].mxu0 %v86
  %v269 = vpop.f32.mrb[0].mxu0
  %v270 = vadd.f32 %v55, %v269
  %v271 = vpop.f32.mrb[0].mxu0
  %272 = vmatprep.mubr.f32.mxu0 0.0
  %273 = vmatmul.mubr.f32.gmra.mrb[0].mxu0 %v89
  %v274 = vpop.f32.mrb[0].mxu0
  %v275 = vadd.f32 %v55, %v274
  %v276 = vpop.f32.mrb[0].mxu0
  %277 = vmatprep.mubr.f32.mxu0 0.0
  %278 = vmatmul.mubr.f32.gmra.mrb[0].mxu0 %v92
  %v279 = vpop.f32.mrb[0].mxu0
  %v280 = vadd.f32 %v55, %v279
  %v281 = vpop.f32.mrb[0].mxu0
  %282 = vmatprep.mubr.f32.mxu0 0.0
  %283 = vmatmul.mubr.f32.gmra.mrb[0].mxu0 %v95
  %v284 = vpop.f32.mrb[0].mxu0
  %v285 = vadd.f32 %v55, %v284
  %v286 = vpop.f32.mrb[0].mxu0
  %287 = vmatprep.mubr.f32.mxu0 0.0
  %288 = vmatmul.mubr.f32.gmra.mrb[0].mxu0 %v98
  %v289 = vpop.f32.mrb[0].mxu0
  %v290 = vadd.f32 %v55, %v289
  %v291 = vpop.f32.mrb[0].mxu0
  %292 = vmatprep.mubr.f32.mxu0 0.0
  %293 = vmatmul.mubr.f32.gmra.mrb[0].mxu0 %v101
  %v294 = vpop.f32.mrb[0].mxu0
  %v295 = vadd.f32 %v55, %v294
  %v296 = vpop.f32.mrb[0].mxu0
  %297 = vmatprep.mubr.f32.mxu0 0.0
  %298 = vmatmul.mubr.f32.gmra.mrb[0].mxu0 %v104
  %v299 = vpop.f32.mrb[0].mxu0
  %v300 = vadd.f32 %v55, %v299
  %v301 = vpop.f32.mrb[0].mxu0
  %302 = vmatprep.mubr.f32.mxu0 0.0
  %303 = vmatmul.mubr.f32.gmra.mrb[0].mxu0 %v107
  %v304 = vpop.f32.mrb[0].mxu0
  %v305 = vadd.f32 %v55, %v304
  %v306 = vpop.f32.mrb[0].mxu0
  %307 = vmatprep.mubr.f32.mxu0 0.0
  %308 = vmatmul.mubr.f32.gmra.mrb[0].mxu0 %v110
  %v309 = vpop.f32.mrb[0].mxu0
  %v310 = vadd.f32 %v55, %v309
  %v311 = vpop.f32.mrb[0].mxu0
  %312 = vmatprep.mubr.f32.mxu0 0.0
  %313 = vmatmul.mubr.f32.gmra.mrb[0].mxu0 %v113
  %v314 = vpop.f32.mrb[0].mxu0
  %v315 = vadd.f32 %v55, %v314
  %v316 = vpop.f32.mrb[0].mxu0
  %317 = vmatprep.mubr.f32.mxu0 0.0
  %318 = vmatmul.mubr.f32.gmra.mrb[0].mxu0 %v116
  %v319 = vpop.f32.mrb[0].mxu0
  %v320 = vadd.f32 %v55, %v319
  %v321 = vpop.f32.mrb[0].mxu0
  %322 = vmatprep.mubr.f32.mxu0 0.0
  %323 = vmatmul.mubr.f32.gmra.mrb[0].mxu0 %v119
  %v324 = vpop.f32.mrb[0].mxu0
  %v325 = vadd.f32 %v55, %v324
  %v326 = vpop.f32.mrb[0].mxu0
  %327 = vmatprep.mubr.f32.mxu0 0.0
  %328 = vmatmul.mubr.f32.gmra.mrb[0].mxu0 %v122
  %v329 = vpop.f32.mrb[0].mxu0
  %v330 = vadd.f32 %v55, %v329
  %v331 = vpop.f32.mrb[0].mxu0
  %332 = vmatprep.mubr.f32.mxu0 0.0
  %333 = vmatmul.mubr.f32.gmra.mrb[0].mxu0 %v125
  %v334 = vpop.f32.mrb[0].mxu0
  %v335 = vadd.f32 %v55, %v334
  %v336 = vpop.f32.mrb[0].mxu0
  %337 = vmatprep.mubr.f32.mxu0 0.0
  %338 = vmatmul.mubr.f32.gmra.mrb[0].mxu0 %v128
  %v339 = vpop.f32.mrb[0].mxu0
  %v340 = vadd.f32 %v55, %v339
  %v341 = vpop.f32.mrb[0].mxu0
  %342 = vmatprep.mubr.f32.mxu0 0.0
  %343 = vmatmul.mubr.f32.gmra.mrb[0].mxu0 %v131
  %v344 = vpop.f32.mrb[0].mxu0
  %v345 = vadd.f32 %v55, %v344
  %v346 = vpop.f32.mrb[0].mxu0
  %347 = vmatprep.mubr.f32.mxu0 0.0
  %348 = vmatmul.mubr.f32.gmra.mrb[0].mxu0 %v134
  %v349 = vpop.f32.mrb[0].mxu0
  %v350 = vadd.f32 %v55, %v349
  %v351 = vpop.f32.mrb[0].mxu0
  %352 = vmatprep.mubr.f32.mxu0 0.0
  %353 = vmatmul.mubr.f32.gmra.mrb[0].mxu0 %v137
  %v354 = vpop.f32.mrb[0].mxu0
  %v355 = vadd.f32 %v55, %v354
  %v356 = vpop.f32.mrb[0].mxu0
  %357 = vmatprep.mubr.f32.mxu0 0.0
  %358 = vmatmul.mubr.f32.gmra.mrb[0].mxu0 %v140
  %v359 = vpop.f32.mrb[0].mxu0
  %v360 = vadd.f32 %v55, %v359
  %v361 = vpop.f32.mrb[0].mxu0
  %362 = vmatprep.mubr.f32.mxu0 0.0
  %363 = vmatmul.mubr.f32.gmra.mrb[0].mxu0 %v143
  %v364 = vpop.f32.mrb[0].mxu0
  %v365 = vadd.f32 %v55, %v364
  %v366 = vpop.f32.mrb[0].mxu0
  %367 = vmatprep.mubr.f32.mxu0 0.0
  %368 = vmatmul.mubr.f32.gmra.mrb[0].mxu0 %v146
  %v369 = vpop.f32.mrb[0].mxu0
  %v370 = vadd.f32 %v55, %v369
  %v371 = vpop.f32.mrb[0].mxu0
  %372 = vmatprep.mubr.f32.mxu0 0.0
  %373 = vmatmul.mubr.f32.gmra.mrb[0].mxu0 %v149
  %v374 = vpop.f32.mrb[0].mxu0
  %v375 = vadd.f32 %v55, %v374
  %v376 = vpop.f32.mrb[0].mxu0
  %377 = vmatprep.mubr.f32.mxu0 0.0
  %378 = vmatmul.mubr.f32.gmra.mrb[0].mxu0 %v152
  %v379 = vpop.f32.mrb[0].mxu0
  %v380 = vadd.f32 %v55, %v379
  %v381 = vpop.f32.mrb[0].mxu0
  %382 = vdwg.mxu0
  %vm383 = vcmask 15360
  %384 = vst.msk [vmem:[%s3] sm:$0xff] %vm383, %v225
  %385 = vst.msk [vmem:[%s3 + $0x8] sm:$0xff] %vm383, %v230
  %386 = vst.msk [vmem:[%s3 + $0x10] sm:$0xff] %vm383, %v235
  %387 = vst.msk [vmem:[%s3 + $0x18] sm:$0xff] %vm383, %v240
  %388 = vst.msk [vmem:[%s3 + $0x20] sm:$0xff] %vm383, %v245
  %389 = vst.msk [vmem:[%s3 + $0x28] sm:$0xff] %vm383, %v250
  %390 = vst.msk [vmem:[%s3 + $0x30] sm:$0xff] %vm383, %v255
  %391 = vst.msk [vmem:[%s3 + $0x38] sm:$0xff] %vm383, %v260
  %392 = vst.msk [vmem:[%s3 + $0x40] sm:$0xff] %vm383, %v265
  %393 = vst.msk [vmem:[%s3 + $0x48] sm:$0xff] %vm383, %v270
  %394 = vst.msk [vmem:[%s3 + $0x50] sm:$0xff] %vm383, %v275
  %395 = vst.msk [vmem:[%s3 + $0x58] sm:$0xff] %vm383, %v280
  %396 = vst.msk [vmem:[%s3 + $0x60] sm:$0xff] %vm383, %v285
  %397 = vst.msk [vmem:[%s3 + $0x68] sm:$0xff] %vm383, %v290
  %398 = vst.msk [vmem:[%s3 + $0x70] sm:$0xff] %vm383, %v295
  %399 = vst.msk [vmem:[%s3 + $0x78] sm:$0xff] %vm383, %v300
  %400 = vst.msk [vmem:[%s3 + $0x80] sm:$0xff] %vm383, %v305
  %401 = vst.msk [vmem:[%s3 + $0x88] sm:$0xff] %vm383, %v310
  %402 = vst.msk [vmem:[%s3 + $0x90] sm:$0xff] %vm383, %v315
  %403 = vst.msk [vmem:[%s3 + $0x98] sm:$0xff] %vm383, %v320
  %404 = vst.msk [vmem:[%s3 + $0xa0] sm:$0xff] %vm383, %v325
  %405 = vst.msk [vmem:[%s3 + $0xa8] sm:$0xff] %vm383, %v330
  %406 = vst.msk [vmem:[%s3 + $0xb0] sm:$0xff] %vm383, %v335
  %407 = vst.msk [vmem:[%s3 + $0xb8] sm:$0xff] %vm383, %v340
  %408 = vst.msk [vmem:[%s3 + $0xc0] sm:$0xff] %vm383, %v345
  %409 = vst.msk [vmem:[%s3 + $0xc8] sm:$0xff] %vm383, %v350
  %410 = vst.msk [vmem:[%s3 + $0xd0] sm:$0xff] %vm383, %v355
  %411 = vst.msk [vmem:[%s3 + $0xd8] sm:$0xff] %vm383, %v360
  %412 = vst.msk [vmem:[%s3 + $0xe0] sm:$0xff] %vm383, %v365
  %413 = vst.msk [vmem:[%s3 + $0xe8] sm:$0xff] %vm383, %v370
  %414 = vst.msk [vmem:[%s3 + $0xf0] sm:$0xff] %vm383, %v375
  %415 = vst.msk [vmem:[%s3 + $0xf8] sm:$0xff] %vm383, %v380
  // Predicated region
  $region14: #{gdnet_forward.13} parent=0 // pred_check
    _
  $region15: #{gdnet_forward.13} parent=0 // pred_check_branch
    %417 = sbr.rel (0) target = $region17
  $region16: #{gdnet_forward.13} parent=0 // pred_region
    _
  $region17: #{gdnet_forward.13} parent=0 // pred_fallthru
    _
  // Predicated region
  $region18: #{gdnet_forward.13} parent=0 // pred_check
    _
  $region19: #{gdnet_forward.13} parent=0 // pred_check_branch
    %419 = sbr.rel (0) target = $region21
  $region20: #{gdnet_forward.13} parent=0 // pred_region
    _
  $region21: #{gdnet_forward.13} parent=0 // pred_fallthru
    _

// kernel: gdnet_forward.15
$region0: #{gdnet_forward.15}
  #allocation0 [shape = 'u32[]', space=smem, size = 0x4, offset = 0x4, fixed_abs, tag = 'smem constant byte address 0x4 - core index']
  #allocation1 [shape = 'u32[144,128]{1,0:T(1,128)}', space=vmem, size = 0x12000, scoped, tag = 'internal scratch']
  %s0 = inlined_call_operand.vmem [shape: f32[1,16,32], index: 0, kind: input, shape index: {}]
  %s1 = inlined_call_operand.vmem [shape: f32[1,1,32], index: 1, kind: output, shape index: {0}]
  %s2 = inlined_call_operand.vmem [shape: f32[1,1,32], index: 2, kind: output, shape index: {1}]
  %3 = xla_tuple %s1, %s2
  %s4 = sld [smem:[#allocation0]]
  $region22: #{gdnet_forward.15} parent=0
    _
  %s6 = ssub.s32 1, %s4
  %s7 = scalar_select 0, %s6, %s4
  // Predicated region
  $region2: #{gdnet_forward.15} parent=0 // pred_check
    _
  $region3: #{gdnet_forward.15} parent=0 // pred_check_branch
    %9 = sbr.rel (0) target = $region5
  $region4: #{gdnet_forward.15} parent=0 // pred_region
    _
  $region5: #{gdnet_forward.15} parent=0 // pred_fallthru
    _
  %v10 = vld [vmem:[%s0] sm:$0xff]
  %v11 = vld [vmem:[%s0 + $0x8] sm:$0xff]
  %vm12 = vcmask 261120
  %v13 = vsel %vm12, %v10, 0.0
  %v14 = vsel %vm12, %v11, 0.0
  %v15 = vadd.f32 %v13, %v14
  %v16 = vrot.slane %v15, 4
  %v17 = vadd.f32 %v15, %v16
  %v18 = vrot.slane %v17, 2
  %v19 = vadd.f32 %v17, %v18
  %v20 = vrot.slane %v19, 1
  %v21 = vadd.f32 %v19, %v20
  %vm22 = vcmask 253952
  %23 = vst.msk [vmem:[%s1] sm:$0x1] %vm22, %v21
  %v24 = vmul.f32 %v10, %v10
  %v25 = vmul.f32 %v11, %v11
  %v26 = vsel %vm12, %v24, 0.0
  %v27 = vsel %vm12, %v25, 0.0
  %v28 = vadd.f32 %v26, %v27
  %v29 = vrot.slane %v28, 4
  %v30 = vadd.f32 %v28, %v29
  %v31 = vrot.slane %v30, 2
  %v32 = vadd.f32 %v30, %v31
  %v33 = vrot.slane %v32, 1
  %v34 = vadd.f32 %v32, %v33
  %35 = vst.msk [vmem:[%s2] sm:$0x1] %vm22, %v34
  // Predicated region
  $region6: #{gdnet_forward.15} parent=0 // pred_check
    _
  $region7: #{gdnet_forward.15} parent=0 // pred_check_branch
    %37 = sbr.rel (0) target = $region9
  $region8: #{gdnet_forward.15} parent=0 // pred_region
    _
  $region9: #{gdnet_forward.15} parent=0 // pred_fallthru
    _
  // Predicated region
  $region10: #{gdnet_forward.15} parent=0 // pred_check
    _
  $region11: #{gdnet_forward.15} parent=0 // pred_check_branch
    %39 = sbr.rel (0) target = $region13
  $region12: #{gdnet_forward.15} parent=0 // pred_region
    _
  $region13: #{gdnet_forward.15} parent=0 // pred_fallthru
    _
  // Predicated region
  $region14: #{gdnet_forward.15} parent=0 // pred_check
    _
  $region15: #{gdnet_forward.15} parent=0 // pred_check_branch
    %41 = sbr.rel (0) target = $region17
  $region16: #{gdnet_forward.15} parent=0 // pred_region
    _
  $region17: #{gdnet_forward.15} parent=0 // pred_fallthru
    _
  // Predicated region
  $region18: #{gdnet_forward.15} parent=0 // pred_check
    _
  $region19: #{gdnet_forward.15} parent=0 // pred_check_branch
    %43 = sbr.rel (0) target = $region21
  $region20: #{gdnet_forward.15} parent=0 // pred_region
    _
  $region21: #{gdnet_forward.15} parent=0 // pred_fallthru
    _

// kernel: gdnet_forward.14
$region0: #{gdnet_forward.14}
  #allocation0 [shape = 'u32[]', space=smem, size = 0x4, offset = 0x4, fixed_abs, tag = 'smem constant byte address 0x4 - core index']
  #allocation1 [shape = 'u32[144,128]{1,0:T(1,128)}', space=vmem, size = 0x12000, scoped, tag = 'internal scratch']
  %s0 = inlined_call_operand.vmem [shape: bf16[16,98], index: 0, kind: input, shape index: {}]
  %s1 = inlined_call_operand.vmem [shape: bf16[98,32], index: 1, kind: input, shape index: {}]
  %s2 = inlined_call_operand.vmem [shape: f32[1,32], index: 2, kind: input, shape index: {}]
  %s3 = inlined_call_operand.vmem [shape: f32[16,32], index: 3, kind: output, shape index: {}]
  %s4 = sld [smem:[#allocation0]]
  $region22: #{gdnet_forward.14} parent=0
    _
  %s6 = ssub.s32 1, %s4
  %s7 = scalar_select 0, %s6, %s4
  // Predicated region
  $region2: #{gdnet_forward.14} parent=0 // pred_check
    _
  $region3: #{gdnet_forward.14} parent=0 // pred_check_branch
    %9 = sbr.rel (0) target = $region5
  $region4: #{gdnet_forward.14} parent=0 // pred_region
    _
  $region5: #{gdnet_forward.14} parent=0 // pred_fallthru
    _
  // Predicated region
  $region6: #{gdnet_forward.14} parent=0 // pred_check
    _
  $region7: #{gdnet_forward.14} parent=0 // pred_check_branch
    %11 = sbr.rel (0) target = $region9
  $region8: #{gdnet_forward.14} parent=0 // pred_region
    _
  $region9: #{gdnet_forward.14} parent=0 // pred_fallthru
    _
  // Predicated region
  $region10: #{gdnet_forward.14} parent=0 // pred_check
    _
  $region11: #{gdnet_forward.14} parent=0 // pred_check_branch
    %13 = sbr.rel (0) target = $region13
  $region12: #{gdnet_forward.14} parent=0 // pred_region
    _
  $region13: #{gdnet_forward.14} parent=0 // pred_fallthru
    _
  %v15 = vld [vmem:[%s0] sm:$0xf]
  %v16 = vld [vmem:[%s0 + $0x4] sm:$0xf]
  %v17 = vld [vmem:[%s1] sm:$0xf]
  %v18 = vld [vmem:[%s1 + $0x4] sm:$0xf]
  %v19 = vld [vmem:[%s1 + $0x8] sm:$0xf]
  %v20 = vld [vmem:[%s1 + $0xc] sm:$0xf]
  %v21 = vld [vmem:[%s1 + $0x10] sm:$0xf]
  %v22 = vld [vmem:[%s1 + $0x14] sm:$0xf]
  %v23 = vld [vmem:[%s1 + $0x18] sm:$0xf]
  %v24 = vld [vmem:[%s1 + $0x1c] sm:$0xf]
  %v25 = vld [vmem:[%s1 + $0x20] sm:$0xf]
  %v26 = vld [vmem:[%s1 + $0x24] sm:$0xf]
  %v27 = vld [vmem:[%s1 + $0x28] sm:$0xf]
  %v28 = vld [vmem:[%s1 + $0x2c] sm:$0xf]
  %v29 = vld [vmem:[%s1 + $0x30] sm:$0x1]
  %v30 = vld [vmem:[%s2] sm:$0x1]
  %v32 = vlaneseq
  %v33 = vshrl.u32 %v32, 7
  %v34 = vsub.s32 0, %v33
  %v35 = vrot.slane %v30, %v34
  %v39 = vunpack.c.l.b16 %v15
  %v40 = vunpack.c.l.b16 %v16
  %v41 = vpack.c.b16 %v40, %v39
  %v55 = vunpack.c.l.b16 %v17
  %v56 = vunpack.c.l.b16 %v18
  %v57 = vunpack.c.l.b16 %v19
  %v58 = vunpack.c.l.b16 %v20
  %v59 = vunpack.c.l.b16 %v21
  %v60 = vunpack.c.l.b16 %v22
  %v61 = vunpack.c.l.b16 %v23
  %v62 = vunpack.c.l.b16 %v24
  %v63 = vunpack.c.l.b16 %v25
  %v64 = vunpack.c.l.b16 %v26
  %v65 = vunpack.c.l.b16 %v27
  %v66 = vunpack.c.l.b16 %v28
  %v67 = vunpack.c.l.b16 %v29
  %v68 = vpack.c.b16 %v56, %v55
  %v69 = vpack.c.b16 %v58, %v57
  %v70 = vpack.c.b16 %v60, %v59
  %v71 = vpack.c.b16 %v62, %v61
  %v72 = vpack.c.b16 %v64, %v63
  %v73 = vpack.c.b16 %v66, %v65
  %v74 = vpack.c.b16 %v67, %v67
  %vm81 = vcmask 801792
  %v83 = vsel %vm81, %v41, 0
  %vm85 = vcmask 1040384
  %v87 = vsel %vm85, %v74, 0
  %89 = vmatprep.subr.bf16.mxu0 0
  %90 = vmatpush1.bf16.msra.mxu0 %v68
  %91 = vmatprep.subr.bf16.mxu0 0
  %92 = vmatpush1.bf16.msra.mxu0 %v69
  %93 = vmatprep.subr.bf16.mxu0 0
  %94 = vmatpush1.bf16.msra.mxu0 %v70
  %95 = vmatprep.subr.bf16.mxu0 0
  %96 = vmatpush1.bf16.msra.mxu0 %v71
  %97 = vmatprep.subr.bf16.mxu0 0
  %98 = vmatpush1.bf16.msra.mxu0 %v72
  %99 = vmatprep.subr.bf16.mxu0 0
  %100 = vmatpush1.bf16.msra.mxu0 %v73
  %101 = vmatprep.subr.bf16.mxu0 0
  %102 = vmatpush1.bf16.msra.mxu0 %v87
  %103 = vmatprep.subr.bf16.mxu0 0
  %104 = vmatpush1.bf16.msra.mxu0 0
  %105 = vmatprep.subr.bf16.mxu0 0
  %106 = vmatpush1.bf16.msra.mxu0 0
  %107 = vmatprep.subr.bf16.mxu0 0
  %108 = vmatpush1.bf16.msra.mxu0 0
  %109 = vmatprep.subr.bf16.mxu0 0
  %110 = vmatpush1.bf16.msra.mxu0 0
  %111 = vmatprep.subr.bf16.mxu0 0
  %112 = vmatpush1.bf16.msra.mxu0 0
  %113 = vmatprep.subr.bf16.mxu0 0
  %114 = vmatpush1.bf16.msra.mxu0 0
  %115 = vmatprep.subr.bf16.mxu0 0
  %116 = vmatpush1.bf16.msra.mxu0 0
  %117 = vmatprep.subr.bf16.mxu0 0
  %118 = vmatpush1.bf16.msra.mxu0 0
  %119 = vmatprep.subr.bf16.mxu0 0
  %120 = vmatpush1.bf16.msra.mxu0 0
  %121 = vmatprep.mubr.bf16.mxu0 0
  %122 = vmatmul.mubr.bf16.gmra.mrb[0].mxu0 %v83
  %v123 = vpop.f32.mrb[0].mxu0
  %v124 = vadd.f32 %v35, %v123
  %v125 = vpop.f32.mrb[0].mxu0
  %v126 = vpop.f32.mrb[0].mxu0
  %v127 = vadd.f32 %v35, %v126
  %v128 = vpop.f32.mrb[0].mxu0
  %129 = vdwg.mxu0
  %v130 = vmax.f32 %v124, 0.0
  %v131 = vmax.f32 %v127, 0.0
  %vm132 = vcmask 261120
  %133 = vst.msk [vmem:[%s3] sm:$0xff] %vm132, %v130
  %134 = vst.msk [vmem:[%s3 + $0x8] sm:$0xff] %vm132, %v131
  // Predicated region
  $region14: #{gdnet_forward.14} parent=0 // pred_check
    _
  $region15: #{gdnet_forward.14} parent=0 // pred_check_branch
    %136 = sbr.rel (0) target = $region17
  $region16: #{gdnet_forward.14} parent=0 // pred_region
    _
  $region17: #{gdnet_forward.14} parent=0 // pred_fallthru
    _
  // Predicated region
  $region18: #{gdnet_forward.14} parent=0 // pred_check
    _
  $region19: #{gdnet_forward.14} parent=0 // pred_check_branch
    %138 = sbr.rel (0) target = $region21
  $region20: #{gdnet_forward.14} parent=0 // pred_region
    _
  $region21: #{gdnet_forward.14} parent=0 // pred_fallthru
    _

// kernel: gdnet_forward.16
$region0: #{gdnet_forward.16}
  #allocation0 [shape = 'u32[]', space=smem, size = 0x4, offset = 0x4, fixed_abs, tag = 'smem constant byte address 0x4 - core index']
  #allocation1 [shape = 'u32[144,128]{1,0:T(1,128)}', space=vmem, size = 0x12000, scoped, tag = 'internal scratch']
  %s0 = inlined_call_operand.vmem [shape: f32[1,16,32], index: 0, kind: input, shape index: {}]
  %s1 = inlined_call_operand.vmem [shape: f32[1,1,32], index: 1, kind: input, shape index: {}]
  %s2 = inlined_call_operand.vmem [shape: f32[1,1,32], index: 2, kind: input, shape index: {}]
  %s3 = inlined_call_operand.vmem [shape: f32[1,16,32], index: 3, kind: output, shape index: {}]
  %s4 = sld [smem:[#allocation0]]
  $region22: #{gdnet_forward.16} parent=0
    _
  %s6 = ssub.s32 1, %s4
  %s7 = scalar_select 0, %s6, %s4
  // Predicated region
  $region2: #{gdnet_forward.16} parent=0 // pred_check
    _
  $region3: #{gdnet_forward.16} parent=0 // pred_check_branch
    %9 = sbr.rel (0) target = $region5
  $region4: #{gdnet_forward.16} parent=0 // pred_region
    _
  $region5: #{gdnet_forward.16} parent=0 // pred_fallthru
    _
  // Predicated region
  $region6: #{gdnet_forward.16} parent=0 // pred_check
    _
  $region7: #{gdnet_forward.16} parent=0 // pred_check_branch
    %11 = sbr.rel (0) target = $region9
  $region8: #{gdnet_forward.16} parent=0 // pred_region
    _
  $region9: #{gdnet_forward.16} parent=0 // pred_fallthru
    _
  // Predicated region
  $region10: #{gdnet_forward.16} parent=0 // pred_check
    _
  $region11: #{gdnet_forward.16} parent=0 // pred_check_branch
    %13 = sbr.rel (0) target = $region13
  $region12: #{gdnet_forward.16} parent=0 // pred_region
    _
  $region13: #{gdnet_forward.16} parent=0 // pred_fallthru
    _
  %v14 = vld [vmem:[%s0] sm:$0xff]
  %v15 = vld [vmem:[%s0 + $0x8] sm:$0xff]
  %v16 = vld [vmem:[%s1] sm:$0x1]
  %v18 = vlaneseq
  %v19 = vshrl.u32 %v18, 7
  %v20 = vsub.s32 0, %v19
  %v21 = vrot.slane %v16, %v20
  %v23 = vmul.f32 %v14, %v21
  %v24 = vmul.f32 %v15, %v21
  %v25 = vld [vmem:[%s2] sm:$0x1]
  %v27 = vlaneseq
  %v28 = vshrl.u32 %v27, 7
  %v29 = vsub.s32 0, %v28
  %v30 = vrot.slane %v25, %v29
  %v32 = vadd.f32 %v23, %v30
  %v33 = vadd.f32 %v24, %v30
  %vm34 = vcmask 261120
  %35 = vst.msk [vmem:[%s3] sm:$0xff] %vm34, %v32
  %36 = vst.msk [vmem:[%s3 + $0x8] sm:$0xff] %vm34, %v33
  // Predicated region
  $region14: #{gdnet_forward.16} parent=0 // pred_check
    _
  $region15: #{gdnet_forward.16} parent=0 // pred_check_branch
    %38 = sbr.rel (0) target = $region17
  $region16: #{gdnet_forward.16} parent=0 // pred_region
    _
  $region17: #{gdnet_forward.16} parent=0 // pred_fallthru
    _
  // Predicated region
  $region18: #{gdnet_forward.16} parent=0 // pred_check
    _
  $region19: #{gdnet_forward.16} parent=0 // pred_check_branch
    %40 = sbr.rel (0) target = $region21
  $region20: #{gdnet_forward.16} parent=0 // pred_region
    _
  $region21: #{gdnet_forward.16} parent=0 // pred_fallthru
    _

// kernel: gdnet_forward.17
$region0: #{gdnet_forward.17}
  #allocation0 [shape = 'u32[]', space=smem, size = 0x4, offset = 0x4, fixed_abs, tag = 'smem constant byte address 0x4 - core index']
  #allocation1 [shape = 'u32[144,128]{1,0:T(1,128)}', space=vmem, size = 0x12000, scoped, tag = 'internal scratch']
  %s0 = inlined_call_operand.vmem [shape: bf16[16,288], index: 0, kind: input, shape index: {}]
  %s1 = inlined_call_operand.vmem [shape: bf16[288,64], index: 1, kind: input, shape index: {}]
  %s2 = inlined_call_operand.vmem [shape: f32[1,64], index: 2, kind: input, shape index: {}]
  %s3 = inlined_call_operand.vmem [shape: f32[16,64], index: 3, kind: output, shape index: {}]
  %s4 = sld [smem:[#allocation0]]
  $region22: #{gdnet_forward.17} parent=0
    _
  %s6 = ssub.s32 1, %s4
  %s7 = scalar_select 0, %s6, %s4
  // Predicated region
  $region2: #{gdnet_forward.17} parent=0 // pred_check
    _
  $region3: #{gdnet_forward.17} parent=0 // pred_check_branch
    %9 = sbr.rel (0) target = $region5
  $region4: #{gdnet_forward.17} parent=0 // pred_region
    _
  $region5: #{gdnet_forward.17} parent=0 // pred_fallthru
    _
  // Predicated region
  $region6: #{gdnet_forward.17} parent=0 // pred_check
    _
  $region7: #{gdnet_forward.17} parent=0 // pred_check_branch
    %11 = sbr.rel (0) target = $region9
  $region8: #{gdnet_forward.17} parent=0 // pred_region
    _
  $region9: #{gdnet_forward.17} parent=0 // pred_fallthru
    _
  // Predicated region
  $region10: #{gdnet_forward.17} parent=0 // pred_check
    _
  $region11: #{gdnet_forward.17} parent=0 // pred_check_branch
    %13 = sbr.rel (0) target = $region13
  $region12: #{gdnet_forward.17} parent=0 // pred_region
    _
  $region13: #{gdnet_forward.17} parent=0 // pred_fallthru
    _
  %v15 = vld [vmem:[%s0] sm:$0xff]
  %v16 = vld [vmem:[%s0 + $0x8] sm:$0xf]
  %v17 = vld [vmem:[%s0 + $0xc] sm:$0xff]
  %v18 = vld [vmem:[%s0 + $0x14] sm:$0xf]
  %v19 = vld [vmem:[%s1] sm:$0xf]
  %v20 = vld [vmem:[%s1 + $0x4] sm:$0xf]
  %v21 = vld [vmem:[%s1 + $0x8] sm:$0xf]
  %v22 = vld [vmem:[%s1 + $0xc] sm:$0xf]
  %v23 = vld [vmem:[%s1 + $0x10] sm:$0xf]
  %v24 = vld [vmem:[%s1 + $0x14] sm:$0xf]
  %v25 = vld [vmem:[%s1 + $0x18] sm:$0xf]
  %v26 = vld [vmem:[%s1 + $0x1c] sm:$0xf]
  %v27 = vld [vmem:[%s1 + $0x20] sm:$0xf]
  %v28 = vld [vmem:[%s1 + $0x24] sm:$0xf]
  %v29 = vld [vmem:[%s1 + $0x28] sm:$0xf]
  %v30 = vld [vmem:[%s1 + $0x2c] sm:$0xf]
  %v31 = vld [vmem:[%s1 + $0x30] sm:$0xf]
  %v32 = vld [vmem:[%s1 + $0x34] sm:$0xf]
  %v33 = vld [vmem:[%s1 + $0x38] sm:$0xf]
  %v34 = vld [vmem:[%s1 + $0x3c] sm:$0xf]
  %v35 = vld [vmem:[%s1 + $0x40] sm:$0xf]
  %v36 = vld [vmem:[%s1 + $0x44] sm:$0xf]
  %v37 = vld [vmem:[%s1 + $0x48] sm:$0xf]
  %v38 = vld [vmem:[%s1 + $0x4c] sm:$0xf]
  %v39 = vld [vmem:[%s1 + $0x50] sm:$0xf]
  %v40 = vld [vmem:[%s1 + $0x54] sm:$0xf]
  %v41 = vld [vmem:[%s1 + $0x58] sm:$0xf]
  %v42 = vld [vmem:[%s1 + $0x5c] sm:$0xf]
  %v43 = vld [vmem:[%s1 + $0x60] sm:$0xf]
  %v44 = vld [vmem:[%s1 + $0x64] sm:$0xf]
  %v45 = vld [vmem:[%s1 + $0x68] sm:$0xf]
  %v46 = vld [vmem:[%s1 + $0x6c] sm:$0xf]
  %v47 = vld [vmem:[%s1 + $0x70] sm:$0xf]
  %v48 = vld [vmem:[%s1 + $0x74] sm:$0xf]
  %v49 = vld [vmem:[%s1 + $0x78] sm:$0xf]
  %v50 = vld [vmem:[%s1 + $0x7c] sm:$0xf]
  %v51 = vld [vmem:[%s1 + $0x80] sm:$0xf]
  %v52 = vld [vmem:[%s1 + $0x84] sm:$0xf]
  %v53 = vld [vmem:[%s1 + $0x88] sm:$0xf]
  %v54 = vld [vmem:[%s1 + $0x8c] sm:$0xf]
  %v55 = vld [vmem:[%s2] sm:$0x1]
  %v57 = vlaneseq
  %v58 = vshrl.u32 %v57, 7
  %v59 = vsub.s32 0, %v58
  %v60 = vrot.slane %v55, %v59
  %v66 = vunpack.c.l.b16 %v15
  %v67 = vunpack.c.h.b16 %v15
  %v68 = vunpack.c.l.b16 %v16
  %v69 = vunpack.c.l.b16 %v17
  %v70 = vunpack.c.h.b16 %v17
  %v71 = vunpack.c.l.b16 %v18
  %v72 = vpack.c.b16 %v69, %v66
  %v73 = vpack.c.b16 %v70, %v67
  %v74 = vpack.c.b16 %v71, %v68
  %v113 = vunpack.c.l.b16 %v19
  %v114 = vunpack.c.l.b16 %v20
  %v115 = vunpack.c.l.b16 %v21
  %v116 = vunpack.c.l.b16 %v22
  %v117 = vunpack.c.l.b16 %v23
  %v118 = vunpack.c.l.b16 %v24
  %v119 = vunpack.c.l.b16 %v25
  %v120 = vunpack.c.l.b16 %v26
  %v121 = vunpack.c.l.b16 %v27
  %v122 = vunpack.c.l.b16 %v28
  %v123 = vunpack.c.l.b16 %v29
  %v124 = vunpack.c.l.b16 %v30
  %v125 = vunpack.c.l.b16 %v31
  %v126 = vunpack.c.l.b16 %v32
  %v127 = vunpack.c.l.b16 %v33
  %v128 = vunpack.c.l.b16 %v34
  %v129 = vunpack.c.l.b16 %v35
  %v130 = vunpack.c.l.b16 %v36
  %v131 = vunpack.c.l.b16 %v37
  %v132 = vunpack.c.l.b16 %v38
  %v133 = vunpack.c.l.b16 %v39
  %v134 = vunpack.c.l.b16 %v40
  %v135 = vunpack.c.l.b16 %v41
  %v136 = vunpack.c.l.b16 %v42
  %v137 = vunpack.c.l.b16 %v43
  %v138 = vunpack.c.l.b16 %v44
  %v139 = vunpack.c.l.b16 %v45
  %v140 = vunpack.c.l.b16 %v46
  %v141 = vunpack.c.l.b16 %v47
  %v142 = vunpack.c.l.b16 %v48
  %v143 = vunpack.c.l.b16 %v49
  %v144 = vunpack.c.l.b16 %v50
  %v145 = vunpack.c.l.b16 %v51
  %v146 = vunpack.c.l.b16 %v52
  %v147 = vunpack.c.l.b16 %v53
  %v148 = vunpack.c.l.b16 %v54
  %v149 = vpack.c.b16 %v114, %v113
  %v150 = vpack.c.b16 %v116, %v115
  %v151 = vpack.c.b16 %v118, %v117
  %v152 = vpack.c.b16 %v120, %v119
  %v153 = vpack.c.b16 %v122, %v121
  %v154 = vpack.c.b16 %v124, %v123
  %v155 = vpack.c.b16 %v126, %v125
  %v156 = vpack.c.b16 %v128, %v127
  %v157 = vpack.c.b16 %v130, %v129
  %v158 = vpack.c.b16 %v132, %v131
  %v159 = vpack.c.b16 %v134, %v133
  %v160 = vpack.c.b16 %v136, %v135
  %v161 = vpack.c.b16 %v138, %v137
  %v162 = vpack.c.b16 %v140, %v139
  %v163 = vpack.c.b16 %v142, %v141
  %v164 = vpack.c.b16 %v144, %v143
  %v165 = vpack.c.b16 %v146, %v145
  %v166 = vpack.c.b16 %v148, %v147
  %vm185 = vcmask 261120
  %v187 = vsel %vm185, %v74, 0
  %189 = vmatprep.subr.bf16.mxu0 0
  %190 = vmatpush1.bf16.msra.mxu0 %v149
  %191 = vmatprep.subr.bf16.mxu0 0
  %192 = vmatpush1.bf16.msra.mxu0 %v150
  %193 = vmatprep.subr.bf16.mxu0 0
  %194 = vmatpush1.bf16.msra.mxu0 %v151
  %195 = vmatprep.subr.bf16.mxu0 0
  %196 = vmatpush1.bf16.msra.mxu0 %v152
  %197 = vmatprep.subr.bf16.mxu0 0
  %198 = vmatpush1.bf16.msra.mxu0 %v153
  %199 = vmatprep.subr.bf16.mxu0 0
  %200 = vmatpush1.bf16.msra.mxu0 %v154
  %201 = vmatprep.subr.bf16.mxu0 0
  %202 = vmatpush1.bf16.msra.mxu0 %v155
  %203 = vmatprep.subr.bf16.mxu0 0
  %204 = vmatpush1.bf16.msra.mxu0 %v156
  %205 = vmatprep.subr.bf16.mxu0 0
  %206 = vmatpush1.bf16.msra.mxu0 %v157
  %207 = vmatprep.subr.bf16.mxu0 0
  %208 = vmatpush1.bf16.msra.mxu0 %v158
  %209 = vmatprep.subr.bf16.mxu0 0
  %210 = vmatpush1.bf16.msra.mxu0 %v159
  %211 = vmatprep.subr.bf16.mxu0 0
  %212 = vmatpush1.bf16.msra.mxu0 %v160
  %213 = vmatprep.subr.bf16.mxu0 0
  %214 = vmatpush1.bf16.msra.mxu0 %v161
  %215 = vmatprep.subr.bf16.mxu0 0
  %216 = vmatpush1.bf16.msra.mxu0 %v162
  %217 = vmatprep.subr.bf16.mxu0 0
  %218 = vmatpush1.bf16.msra.mxu0 %v163
  %219 = vmatprep.subr.bf16.mxu0 0
  %220 = vmatpush1.bf16.msra.mxu0 %v164
  %221 = vmatprep.mubr.bf16.mxu0 %v73
  %222 = vmatmul.mubr.bf16.gmra.mrb[0].mxu0 %v72
  %v223 = vpop.f32.mrb[0].mxu0
  %v224 = vadd.f32 %v60, %v223
  %v225 = vpop.f32.mrb[0].mxu0
  %v226 = vpop.f32.mrb[0].mxu0
  %v227 = vadd.f32 %v60, %v226
  %v228 = vpop.f32.mrb[0].mxu0
  %229 = vdwg.mxu0
  %230 = vmatprep.subr.bf16.mxu0 0
  %231 = vmatpush1.bf16.msra.mxu0 %v165
  %232 = vmatprep.subr.bf16.mxu0 0
  %233 = vmatpush1.bf16.msra.mxu0 %v166
  %234 = vmatprep.subr.bf16.mxu0 0
  %235 = vmatpush1.bf16.msra.mxu0 0
  %236 = vmatprep.subr.bf16.mxu0 0
  %237 = vmatpush1.bf16.msra.mxu0 0
  %238 = vmatprep.subr.bf16.mxu0 0
  %239 = vmatpush1.bf16.msra.mxu0 0
  %240 = vmatprep.subr.bf16.mxu0 0
  %241 = vmatpush1.bf16.msra.mxu0 0
  %242 = vmatprep.subr.bf16.mxu0 0
  %243 = vmatpush1.bf16.msra.mxu0 0
  %244 = vmatprep.subr.bf16.mxu0 0
  %245 = vmatpush1.bf16.msra.mxu0 0
  %246 = vmatprep.subr.bf16.mxu0 0
  %247 = vmatpush1.bf16.msra.mxu0 0
  %248 = vmatprep.subr.bf16.mxu0 0
  %249 = vmatpush1.bf16.msra.mxu0 0
  %250 = vmatprep.subr.bf16.mxu0 0
  %251 = vmatpush1.bf16.msra.mxu0 0
  %252 = vmatprep.subr.bf16.mxu0 0
  %253 = vmatpush1.bf16.msra.mxu0 0
  %254 = vmatprep.subr.bf16.mxu0 0
  %255 = vmatpush1.bf16.msra.mxu0 0
  %256 = vmatprep.subr.bf16.mxu0 0
  %257 = vmatpush1.bf16.msra.mxu0 0
  %258 = vmatprep.subr.bf16.mxu0 0
  %259 = vmatpush1.bf16.msra.mxu0 0
  %260 = vmatprep.subr.bf16.mxu0 0
  %261 = vmatpush1.bf16.msra.mxu0 0
  %262 = vmatprep.mubr.bf16.mxu0 0
  %263 = vmatmul.mubr.bf16.gmra.mrb[0].mxu0 %v187
  %v264 = vpop.f32.mrb[0].mxu0
  %v265 = vadd.f32 %v224, %v264
  %v266 = vpop.f32.mrb[0].mxu0
  %v267 = vpop.f32.mrb[0].mxu0
  %v268 = vadd.f32 %v227, %v267
  %v269 = vpop.f32.mrb[0].mxu0
  %270 = vdwg.mxu0
  %v271 = vmax.f32 %v265, 0.0
  %v272 = vmax.f32 %v268, 0.0
  %vm273 = vcmask 523264
  %274 = vst.msk [vmem:[%s3] sm:$0xff] %vm273, %v271
  %275 = vst.msk [vmem:[%s3 + $0x8] sm:$0xff] %vm273, %v272
  // Predicated region
  $region14: #{gdnet_forward.17} parent=0 // pred_check
    _
  $region15: #{gdnet_forward.17} parent=0 // pred_check_branch
    %277 = sbr.rel (0) target = $region17
  $region16: #{gdnet_forward.17} parent=0 // pred_region
    _
  $region17: #{gdnet_forward.17} parent=0 // pred_fallthru
    _
  // Predicated region
  $region18: #{gdnet_forward.17} parent=0 // pred_check
    _
  $region19: #{gdnet_forward.17} parent=0 // pred_check_branch
    %279 = sbr.rel (0) target = $region21
  $region20: #{gdnet_forward.17} parent=0 // pred_region
    _
  $region21: #{gdnet_forward.17} parent=0 // pred_fallthru
    _

// kernel: gdnet_forward.19
$region0: #{gdnet_forward.19}
  #allocation0 [shape = 'u32[]', space=smem, size = 0x4, offset = 0x4, fixed_abs, tag = 'smem constant byte address 0x4 - core index']
  #allocation1 [shape = 'u32[144,128]{1,0:T(1,128)}', space=vmem, size = 0x12000, scoped, tag = 'internal scratch']
  %s0 = inlined_call_operand.vmem [shape: bf16[8,576], index: 0, kind: input, shape index: {}]
  %s1 = inlined_call_operand.vmem [shape: bf16[576,128], index: 1, kind: input, shape index: {}]
  %s2 = inlined_call_operand.vmem [shape: f32[1,128], index: 2, kind: input, shape index: {}]
  %s3 = inlined_call_operand.vmem [shape: f32[8,128], index: 3, kind: output, shape index: {}]
  %s4 = sld [smem:[#allocation0]]
  $region22: #{gdnet_forward.19} parent=0
    _
  %s6 = ssub.s32 1, %s4
  %s7 = scalar_select 0, %s6, %s4
  // Predicated region
  $region2: #{gdnet_forward.19} parent=0 // pred_check
    _
  $region3: #{gdnet_forward.19} parent=0 // pred_check_branch
    %9 = sbr.rel (0) target = $region5
  $region4: #{gdnet_forward.19} parent=0 // pred_region
    _
  $region5: #{gdnet_forward.19} parent=0 // pred_fallthru
    _
  // Predicated region
  $region6: #{gdnet_forward.19} parent=0 // pred_check
    _
  $region7: #{gdnet_forward.19} parent=0 // pred_check_branch
    %11 = sbr.rel (0) target = $region9
  $region8: #{gdnet_forward.19} parent=0 // pred_region
    _
  $region9: #{gdnet_forward.19} parent=0 // pred_fallthru
    _
  // Predicated region
  $region10: #{gdnet_forward.19} parent=0 // pred_check
    _
  $region11: #{gdnet_forward.19} parent=0 // pred_check_branch
    %13 = sbr.rel (0) target = $region13
  $region12: #{gdnet_forward.19} parent=0 // pred_region
    _
  $region13: #{gdnet_forward.19} parent=0 // pred_fallthru
    _
  %v15 = vld [vmem:[%s0] sm:$0xff]
  %v16 = vld [vmem:[%s0 + $0x8] sm:$0xff]
  %v17 = vld [vmem:[%s0 + $0x10] sm:$0xf]
  %v18 = vld [vmem:[%s1] sm:$0xf]
  %v19 = vld [vmem:[%s1 + $0x4] sm:$0xf]
  %v20 = vld [vmem:[%s1 + $0x8] sm:$0xf]
  %v21 = vld [vmem:[%s1 + $0xc] sm:$0xf]
  %v22 = vld [vmem:[%s1 + $0x10] sm:$0xf]
  %v23 = vld [vmem:[%s1 + $0x14] sm:$0xf]
  %v24 = vld [vmem:[%s1 + $0x18] sm:$0xf]
  %v25 = vld [vmem:[%s1 + $0x1c] sm:$0xf]
  %v26 = vld [vmem:[%s1 + $0x20] sm:$0xf]
  %v27 = vld [vmem:[%s1 + $0x24] sm:$0xf]
  %v28 = vld [vmem:[%s1 + $0x28] sm:$0xf]
  %v29 = vld [vmem:[%s1 + $0x2c] sm:$0xf]
  %v30 = vld [vmem:[%s1 + $0x30] sm:$0xf]
  %v31 = vld [vmem:[%s1 + $0x34] sm:$0xf]
  %v32 = vld [vmem:[%s1 + $0x38] sm:$0xf]
  %v33 = vld [vmem:[%s1 + $0x3c] sm:$0xf]
  %v34 = vld [vmem:[%s1 + $0x40] sm:$0xf]
  %v35 = vld [vmem:[%s1 + $0x44] sm:$0xf]
  %v36 = vld [vmem:[%s1 + $0x48] sm:$0xf]
  %v37 = vld [vmem:[%s1 + $0x4c] sm:$0xf]
  %v38 = vld [vmem:[%s1 + $0x50] sm:$0xf]
  %v39 = vld [vmem:[%s1 + $0x54] sm:$0xf]
  %v40 = vld [vmem:[%s1 + $0x58] sm:$0xf]
  %v41 = vld [vmem:[%s1 + $0x5c] sm:$0xf]
  %v42 = vld [vmem:[%s1 + $0x60] sm:$0xf]
  %v43 = vld [vmem:[%s1 + $0x64] sm:$0xf]
  %v44 = vld [vmem:[%s1 + $0x68] sm:$0xf]
  %v45 = vld [vmem:[%s1 + $0x6c] sm:$0xf]
  %v46 = vld [vmem:[%s1 + $0x70] sm:$0xf]
  %v47 = vld [vmem:[%s1 + $0x74] sm:$0xf]
  %v48 = vld [vmem:[%s1 + $0x78] sm:$0xf]
  %v49 = vld [vmem:[%s1 + $0x7c] sm:$0xf]
  %v50 = vld [vmem:[%s1 + $0x80] sm:$0xf]
  %v51 = vld [vmem:[%s1 + $0x84] sm:$0xf]
  %v52 = vld [vmem:[%s1 + $0x88] sm:$0xf]
  %v53 = vld [vmem:[%s1 + $0x8c] sm:$0xf]
  %v54 = vld [vmem:[%s1 + $0x90] sm:$0xf]
  %v55 = vld [vmem:[%s1 + $0x94] sm:$0xf]
  %v56 = vld [vmem:[%s1 + $0x98] sm:$0xf]
  %v57 = vld [vmem:[%s1 + $0x9c] sm:$0xf]
  %v58 = vld [vmem:[%s1 + $0xa0] sm:$0xf]
  %v59 = vld [vmem:[%s1 + $0xa4] sm:$0xf]
  %v60 = vld [vmem:[%s1 + $0xa8] sm:$0xf]
  %v61 = vld [vmem:[%s1 + $0xac] sm:$0xf]
  %v62 = vld [vmem:[%s1 + $0xb0] sm:$0xf]
  %v63 = vld [vmem:[%s1 + $0xb4] sm:$0xf]
  %v64 = vld [vmem:[%s1 + $0xb8] sm:$0xf]
  %v65 = vld [vmem:[%s1 + $0xbc] sm:$0xf]
  %v66 = vld [vmem:[%s1 + $0xc0] sm:$0xf]
  %v67 = vld [vmem:[%s1 + $0xc4] sm:$0xf]
  %v68 = vld [vmem:[%s1 + $0xc8] sm:$0xf]
  %v69 = vld [vmem:[%s1 + $0xcc] sm:$0xf]
  %v70 = vld [vmem:[%s1 + $0xd0] sm:$0xf]
  %v71 = vld [vmem:[%s1 + $0xd4] sm:$0xf]
  %v72 = vld [vmem:[%s1 + $0xd8] sm:$0xf]
  %v73 = vld [vmem:[%s1 + $0xdc] sm:$0xf]
  %v74 = vld [vmem:[%s1 + $0xe0] sm:$0xf]
  %v75 = vld [vmem:[%s1 + $0xe4] sm:$0xf]
  %v76 = vld [vmem:[%s1 + $0xe8] sm:$0xf]
  %v77 = vld [vmem:[%s1 + $0xec] sm:$0xf]
  %v78 = vld [vmem:[%s1 + $0xf0] sm:$0xf]
  %v79 = vld [vmem:[%s1 + $0xf4] sm:$0xf]
  %v80 = vld [vmem:[%s1 + $0xf8] sm:$0xf]
  %v81 = vld [vmem:[%s1 + $0xfc] sm:$0xf]
  %v82 = vld [vmem:[%s1 + $0x100] sm:$0xf]
  %v83 = vld [vmem:[%s1 + $0x104] sm:$0xf]
  %v84 = vld [vmem:[%s1 + $0x108] sm:$0xf]
  %v85 = vld [vmem:[%s1 + $0x10c] sm:$0xf]
  %v86 = vld [vmem:[%s1 + $0x110] sm:$0xf]
  %v87 = vld [vmem:[%s1 + $0x114] sm:$0xf]
  %v88 = vld [vmem:[%s1 + $0x118] sm:$0xf]
  %v89 = vld [vmem:[%s1 + $0x11c] sm:$0xf]
  %v90 = vld [vmem:[%s2] sm:$0x1]
  %v92 = vlaneseq
  %v93 = vshrl.u32 %v92, 7
  %v94 = vsub.s32 0, %v93
  %v95 = vrot.slane %v90, %v94
  %v100 = vunpack.c.l.b16 %v15
  %v101 = vunpack.c.h.b16 %v15
  %v102 = vunpack.c.l.b16 %v16
  %v103 = vunpack.c.h.b16 %v16
  %v104 = vunpack.c.l.b16 %v17
  %v105 = vpack.c.b16 %v100, %v100
  %v106 = vpack.c.b16 %v101, %v101
  %v107 = vpack.c.b16 %v102, %v102
  %v108 = vpack.c.b16 %v103, %v103
  %v109 = vpack.c.b16 %v104, %v104
  %v186 = vunpack.c.l.b16 %v18
  %v187 = vunpack.c.l.b16 %v19
  %v188 = vunpack.c.l.b16 %v20
  %v189 = vunpack.c.l.b16 %v21
  %v190 = vunpack.c.l.b16 %v22
  %v191 = vunpack.c.l.b16 %v23
  %v192 = vunpack.c.l.b16 %v24
  %v193 = vunpack.c.l.b16 %v25
  %v194 = vunpack.c.l.b16 %v26
  %v195 = vunpack.c.l.b16 %v27
  %v196 = vunpack.c.l.b16 %v28
  %v197 = vunpack.c.l.b16 %v29
  %v198 = vunpack.c.l.b16 %v30
  %v199 = vunpack.c.l.b16 %v31
  %v200 = vunpack.c.l.b16 %v32
  %v201 = vunpack.c.l.b16 %v33
  %v202 = vunpack.c.l.b16 %v34
  %v203 = vunpack.c.l.b16 %v35
  %v204 = vunpack.c.l.b16 %v36
  %v205 = vunpack.c.l.b16 %v37
  %v206 = vunpack.c.l.b16 %v38
  %v207 = vunpack.c.l.b16 %v39
  %v208 = vunpack.c.l.b16 %v40
  %v209 = vunpack.c.l.b16 %v41
  %v210 = vunpack.c.l.b16 %v42
  %v211 = vunpack.c.l.b16 %v43
  %v212 = vunpack.c.l.b16 %v44
  %v213 = vunpack.c.l.b16 %v45
  %v214 = vunpack.c.l.b16 %v46
  %v215 = vunpack.c.l.b16 %v47
  %v216 = vunpack.c.l.b16 %v48
  %v217 = vunpack.c.l.b16 %v49
  %v218 = vunpack.c.l.b16 %v50
  %v219 = vunpack.c.l.b16 %v51
  %v220 = vunpack.c.l.b16 %v52
  %v221 = vunpack.c.l.b16 %v53
  %v222 = vunpack.c.l.b16 %v54
  %v223 = vunpack.c.l.b16 %v55
  %v224 = vunpack.c.l.b16 %v56
  %v225 = vunpack.c.l.b16 %v57
  %v226 = vunpack.c.l.b16 %v58
  %v227 = vunpack.c.l.b16 %v59
  %v228 = vunpack.c.l.b16 %v60
  %v229 = vunpack.c.l.b16 %v61
  %v230 = vunpack.c.l.b16 %v62
  %v231 = vunpack.c.l.b16 %v63
  %v232 = vunpack.c.l.b16 %v64
  %v233 = vunpack.c.l.b16 %v65
  %v234 = vunpack.c.l.b16 %v66
  %v235 = vunpack.c.l.b16 %v67
  %v236 = vunpack.c.l.b16 %v68
  %v237 = vunpack.c.l.b16 %v69
  %v238 = vunpack.c.l.b16 %v70
  %v239 = vunpack.c.l.b16 %v71
  %v240 = vunpack.c.l.b16 %v72
  %v241 = vunpack.c.l.b16 %v73
  %v242 = vunpack.c.l.b16 %v74
  %v243 = vunpack.c.l.b16 %v75
  %v244 = vunpack.c.l.b16 %v76
  %v245 = vunpack.c.l.b16 %v77
  %v246 = vunpack.c.l.b16 %v78
  %v247 = vunpack.c.l.b16 %v79
  %v248 = vunpack.c.l.b16 %v80
  %v249 = vunpack.c.l.b16 %v81
  %v250 = vunpack.c.l.b16 %v82
  %v251 = vunpack.c.l.b16 %v83
  %v252 = vunpack.c.l.b16 %v84
  %v253 = vunpack.c.l.b16 %v85
  %v254 = vunpack.c.l.b16 %v86
  %v255 = vunpack.c.l.b16 %v87
  %v256 = vunpack.c.l.b16 %v88
  %v257 = vunpack.c.l.b16 %v89
  %v258 = vpack.c.b16 %v187, %v186
  %v259 = vpack.c.b16 %v189, %v188
  %v260 = vpack.c.b16 %v191, %v190
  %v261 = vpack.c.b16 %v193, %v192
  %v262 = vpack.c.b16 %v195, %v194
  %v263 = vpack.c.b16 %v197, %v196
  %v264 = vpack.c.b16 %v199, %v198
  %v265 = vpack.c.b16 %v201, %v200
  %v266 = vpack.c.b16 %v203, %v202
  %v267 = vpack.c.b16 %v205, %v204
  %v268 = vpack.c.b16 %v207, %v206
  %v269 = vpack.c.b16 %v209, %v208
  %v270 = vpack.c.b16 %v211, %v210
  %v271 = vpack.c.b16 %v213, %v212
  %v272 = vpack.c.b16 %v215, %v214
  %v273 = vpack.c.b16 %v217, %v216
  %v274 = vpack.c.b16 %v219, %v218
  %v275 = vpack.c.b16 %v221, %v220
  %v276 = vpack.c.b16 %v223, %v222
  %v277 = vpack.c.b16 %v225, %v224
  %v278 = vpack.c.b16 %v227, %v226
  %v279 = vpack.c.b16 %v229, %v228
  %v280 = vpack.c.b16 %v231, %v230
  %v281 = vpack.c.b16 %v233, %v232
  %v282 = vpack.c.b16 %v235, %v234
  %v283 = vpack.c.b16 %v237, %v236
  %v284 = vpack.c.b16 %v239, %v238
  %v285 = vpack.c.b16 %v241, %v240
  %v286 = vpack.c.b16 %v243, %v242
  %v287 = vpack.c.b16 %v245, %v244
  %v288 = vpack.c.b16 %v247, %v246
  %v289 = vpack.c.b16 %v249, %v248
  %v290 = vpack.c.b16 %v251, %v250
  %v291 = vpack.c.b16 %v253, %v252
  %v292 = vpack.c.b16 %v255, %v254
  %v293 = vpack.c.b16 %v257, %v256
  %vm330 = vcmask 523264
  %v332 = vsel %vm330, %v109, 0
  %334 = vmatprep.subr.bf16.mxu0 0
  %335 = vmatpush1.bf16.msra.mxu0 %v258
  %336 = vmatprep.subr.bf16.mxu0 0
  %337 = vmatpush1.bf16.msra.mxu0 %v259
  %338 = vmatprep.subr.bf16.mxu0 0
  %339 = vmatpush1.bf16.msra.mxu0 %v260
  %340 = vmatprep.subr.bf16.mxu0 0
  %341 = vmatpush1.bf16.msra.mxu0 %v261
  %342 = vmatprep.subr.bf16.mxu0 0
  %343 = vmatpush1.bf16.msra.mxu0 %v262
  %344 = vmatprep.subr.bf16.mxu0 0
  %345 = vmatpush1.bf16.msra.mxu0 %v263
  %346 = vmatprep.subr.bf16.mxu0 0
  %347 = vmatpush1.bf16.msra.mxu0 %v264
  %348 = vmatprep.subr.bf16.mxu0 0
  %349 = vmatpush1.bf16.msra.mxu0 %v265
  %350 = vmatprep.subr.bf16.mxu0 0
  %351 = vmatpush1.bf16.msra.mxu0 %v266
  %352 = vmatprep.subr.bf16.mxu0 0
  %353 = vmatpush1.bf16.msra.mxu0 %v267
  %354 = vmatprep.subr.bf16.mxu0 0
  %355 = vmatpush1.bf16.msra.mxu0 %v268
  %356 = vmatprep.subr.bf16.mxu0 0
  %357 = vmatpush1.bf16.msra.mxu0 %v269
  %358 = vmatprep.subr.bf16.mxu0 0
  %359 = vmatpush1.bf16.msra.mxu0 %v270
  %360 = vmatprep.subr.bf16.mxu0 0
  %361 = vmatpush1.bf16.msra.mxu0 %v271
  %362 = vmatprep.subr.bf16.mxu0 0
  %363 = vmatpush1.bf16.msra.mxu0 %v272
  %364 = vmatprep.subr.bf16.mxu0 0
  %365 = vmatpush1.bf16.msra.mxu0 %v273
  %366 = vmatprep.mubr.bf16.mxu0 %v106
  %367 = vmatmul.mubr.bf16.gmra.mrb[0].mxu0 %v105
  %v368 = vpop.f32.mrb[0].mxu0
  %v369 = vadd.f32 %v95, %v368
  %v370 = vpop.f32.mrb[0].mxu0
  %v371 = vpop.f32.mrb[0].mxu0
  %v372 = vpop.f32.mrb[0].mxu0
  %373 = vdwg.mxu0
  %374 = vmatprep.subr.bf16.mxu0 0
  %375 = vmatpush1.bf16.msra.mxu0 %v274
  %376 = vmatprep.subr.bf16.mxu0 0
  %377 = vmatpush1.bf16.msra.mxu0 %v275
  %378 = vmatprep.subr.bf16.mxu0 0
  %379 = vmatpush1.bf16.msra.mxu0 %v276
  %380 = vmatprep.subr.bf16.mxu0 0
  %381 = vmatpush1.bf16.msra.mxu0 %v277
  %382 = vmatprep.subr.bf16.mxu0 0
  %383 = vmatpush1.bf16.msra.mxu0 %v278
  %384 = vmatprep.subr.bf16.mxu0 0
  %385 = vmatpush1.bf16.msra.mxu0 %v279
  %386 = vmatprep.subr.bf16.mxu0 0
  %387 = vmatpush1.bf16.msra.mxu0 %v280
  %388 = vmatprep.subr.bf16.mxu0 0
  %389 = vmatpush1.bf16.msra.mxu0 %v281
  %390 = vmatprep.subr.bf16.mxu0 0
  %391 = vmatpush1.bf16.msra.mxu0 %v282
  %392 = vmatprep.subr.bf16.mxu0 0
  %393 = vmatpush1.bf16.msra.mxu0 %v283
  %394 = vmatprep.subr.bf16.mxu0 0
  %395 = vmatpush1.bf16.msra.mxu0 %v284
  %396 = vmatprep.subr.bf16.mxu0 0
  %397 = vmatpush1.bf16.msra.mxu0 %v285
  %398 = vmatprep.subr.bf16.mxu0 0
  %399 = vmatpush1.bf16.msra.mxu0 %v286
  %400 = vmatprep.subr.bf16.mxu0 0
  %401 = vmatpush1.bf16.msra.mxu0 %v287
  %402 = vmatprep.subr.bf16.mxu0 0
  %403 = vmatpush1.bf16.msra.mxu0 %v288
  %404 = vmatprep.subr.bf16.mxu0 0
  %405 = vmatpush1.bf16.msra.mxu0 %v289
  %406 = vmatprep.mubr.bf16.mxu0 %v108
  %407 = vmatmul.mubr.bf16.gmra.mrb[0].mxu0 %v107
  %v408 = vpop.f32.mrb[0].mxu0
  %v409 = vadd.f32 %v369, %v408
  %v410 = vpop.f32.mrb[0].mxu0
  %v411 = vpop.f32.mrb[0].mxu0
  %v412 = vpop.f32.mrb[0].mxu0
  %413 = vdwg.mxu0
  %414 = vmatprep.subr.bf16.mxu0 0
  %415 = vmatpush1.bf16.msra.mxu0 %v290
  %416 = vmatprep.subr.bf16.mxu0 0
  %417 = vmatpush1.bf16.msra.mxu0 %v291
  %418 = vmatprep.subr.bf16.mxu0 0
  %419 = vmatpush1.bf16.msra.mxu0 %v292
  %420 = vmatprep.subr.bf16.mxu0 0
  %421 = vmatpush1.bf16.msra.mxu0 %v293
  %422 = vmatprep.subr.bf16.mxu0 0
  %423 = vmatpush1.bf16.msra.mxu0 0
  %424 = vmatprep.subr.bf16.mxu0 0
  %425 = vmatpush1.bf16.msra.mxu0 0
  %426 = vmatprep.subr.bf16.mxu0 0
  %427 = vmatpush1.bf16.msra.mxu0 0
  %428 = vmatprep.subr.bf16.mxu0 0
  %429 = vmatpush1.bf16.msra.mxu0 0
  %430 = vmatprep.subr.bf16.mxu0 0
  %431 = vmatpush1.bf16.msra.mxu0 0
  %432 = vmatprep.subr.bf16.mxu0 0
  %433 = vmatpush1.bf16.msra.mxu0 0
  %434 = vmatprep.subr.bf16.mxu0 0
  %435 = vmatpush1.bf16.msra.mxu0 0
  %436 = vmatprep.subr.bf16.mxu0 0
  %437 = vmatpush1.bf16.msra.mxu0 0
  %438 = vmatprep.subr.bf16.mxu0 0
  %439 = vmatpush1.bf16.msra.mxu0 0
  %440 = vmatprep.subr.bf16.mxu0 0
  %441 = vmatpush1.bf16.msra.mxu0 0
  %442 = vmatprep.subr.bf16.mxu0 0
  %443 = vmatpush1.bf16.msra.mxu0 0
  %444 = vmatprep.subr.bf16.mxu0 0
  %445 = vmatpush1.bf16.msra.mxu0 0
  %446 = vmatprep.mubr.bf16.mxu0 0
  %447 = vmatmul.mubr.bf16.gmra.mrb[0].mxu0 %v332
  %v448 = vpop.f32.mrb[0].mxu0
  %v449 = vadd.f32 %v409, %v448
  %v450 = vpop.f32.mrb[0].mxu0
  %v451 = vpop.f32.mrb[0].mxu0
  %v452 = vpop.f32.mrb[0].mxu0
  %453 = vdwg.mxu0
  %v454 = vmax.f32 %v449, 0.0
  %455 = vst [vmem:[%s3] sm:$0xff] %v454
  // Predicated region
  $region14: #{gdnet_forward.19} parent=0 // pred_check
    _
  $region15: #{gdnet_forward.19} parent=0 // pred_check_branch
    %457 = sbr.rel (0) target = $region17
  $region16: #{gdnet_forward.19} parent=0 // pred_region
    _
  $region17: #{gdnet_forward.19} parent=0 // pred_fallthru
    _
  // Predicated region
  $region18: #{gdnet_forward.19} parent=0 // pred_check
    _
  $region19: #{gdnet_forward.19} parent=0 // pred_check_branch
    %459 = sbr.rel (0) target = $region21
  $region20: #{gdnet_forward.19} parent=0 // pred_region
    _
  $region21: #{gdnet_forward.19} parent=0 // pred_fallthru
    _

// kernel: gdnet_forward.18
$region0: #{gdnet_forward.18}
  #allocation0 [shape = 'u32[]', space=smem, size = 0x4, offset = 0x4, fixed_abs, tag = 'smem constant byte address 0x4 - core index']
  #allocation1 [shape = 'u32[144,128]{1,0:T(1,128)}', space=vmem, size = 0x12000, scoped, tag = 'internal scratch']
  %s0 = inlined_call_operand.vmem [shape: bf16[8,3136], index: 0, kind: input, shape index: {}]
  %s1 = inlined_call_operand.vmem [shape: bf16[3136,64], index: 1, kind: input, shape index: {}]
  %s2 = inlined_call_operand.vmem [shape: f32[1,64], index: 2, kind: input, shape index: {}]
  %s3 = inlined_call_operand.vmem [shape: f32[8,64], index: 3, kind: output, shape index: {}]
  %s4 = sld [smem:[#allocation0]]
  $region22: #{gdnet_forward.18} parent=0
    _
  %s6 = ssub.s32 1, %s4
  %s7 = scalar_select 0, %s6, %s4
  // Predicated region
  $region2: #{gdnet_forward.18} parent=0 // pred_check
    _
  $region3: #{gdnet_forward.18} parent=0 // pred_check_branch
    %9 = sbr.rel (0) target = $region5
  $region4: #{gdnet_forward.18} parent=0 // pred_region
    _
  $region5: #{gdnet_forward.18} parent=0 // pred_fallthru
    _
  // Predicated region
  $region6: #{gdnet_forward.18} parent=0 // pred_check
    _
  $region7: #{gdnet_forward.18} parent=0 // pred_check_branch
    %11 = sbr.rel (0) target = $region9
  $region8: #{gdnet_forward.18} parent=0 // pred_region
    _
  $region9: #{gdnet_forward.18} parent=0 // pred_fallthru
    _
  // Predicated region
  $region10: #{gdnet_forward.18} parent=0 // pred_check
    _
  $region11: #{gdnet_forward.18} parent=0 // pred_check_branch
    %13 = sbr.rel (0) target = $region13
  $region12: #{gdnet_forward.18} parent=0 // pred_region
    _
  $region13: #{gdnet_forward.18} parent=0 // pred_fallthru
    _
  %v15 = vld [vmem:[%s0] sm:$0xff]
  %v16 = vld [vmem:[%s0 + $0x8] sm:$0xff]
  %v17 = vld [vmem:[%s0 + $0x10] sm:$0xff]
  %v18 = vld [vmem:[%s0 + $0x18] sm:$0xff]
  %v19 = vld [vmem:[%s0 + $0x20] sm:$0xff]
  %v20 = vld [vmem:[%s0 + $0x28] sm:$0xff]
  %v21 = vld [vmem:[%s0 + $0x30] sm:$0xff]
  %v22 = vld [vmem:[%s0 + $0x38] sm:$0xff]
  %v23 = vld [vmem:[%s0 + $0x40] sm:$0xff]
  %v24 = vld [vmem:[%s0 + $0x48] sm:$0xff]
  %v25 = vld [vmem:[%s0 + $0x50] sm:$0xff]
  %v26 = vld [vmem:[%s0 + $0x58] sm:$0xff]
  %v27 = vld [vmem:[%s0 + $0x60] sm:$0xf]
  %v28 = vld [vmem:[%s1] sm:$0xf]
  %v29 = vld [vmem:[%s1 + $0x4] sm:$0xf]
  %v30 = vld [vmem:[%s1 + $0x8] sm:$0xf]
  %v31 = vld [vmem:[%s1 + $0xc] sm:$0xf]
  %v32 = vld [vmem:[%s1 + $0x10] sm:$0xf]
  %v33 = vld [vmem:[%s1 + $0x14] sm:$0xf]
  %v34 = vld [vmem:[%s1 + $0x18] sm:$0xf]
  %v35 = vld [vmem:[%s1 + $0x1c] sm:$0xf]
  %v36 = vld [vmem:[%s1 + $0x20] sm:$0xf]
  %v37 = vld [vmem:[%s1 + $0x24] sm:$0xf]
  %v38 = vld [vmem:[%s1 + $0x28] sm:$0xf]
  %v39 = vld [vmem:[%s1 + $0x2c] sm:$0xf]
  %v40 = vld [vmem:[%s1 + $0x30] sm:$0xf]
  %v41 = vld [vmem:[%s1 + $0x34] sm:$0xf]
  %v42 = vld [vmem:[%s1 + $0x38] sm:$0xf]
  %v43 = vld [vmem:[%s1 + $0x3c] sm:$0xf]
  %v44 = vld [vmem:[%s1 + $0x40] sm:$0xf]
  %v45 = vld [vmem:[%s1 + $0x44] sm:$0xf]
  %v46 = vld [vmem:[%s1 + $0x48] sm:$0xf]
  %v47 = vld [vmem:[%s1 + $0x4c] sm:$0xf]
  %v48 = vld [vmem:[%s1 + $0x50] sm:$0xf]
  %v49 = vld [vmem:[%s1 + $0x54] sm:$0xf]
  %v50 = vld [vmem:[%s1 + $0x58] sm:$0xf]
  %v51 = vld [vmem:[%s1 + $0x5c] sm:$0xf]
  %v52 = vld [vmem:[%s1 + $0x60] sm:$0xf]
  %v53 = vld [vmem:[%s1 + $0x64] sm:$0xf]
  %v54 = vld [vmem:[%s1 + $0x68] sm:$0xf]
  %v55 = vld [vmem:[%s1 + $0x6c] sm:$0xf]
  %v56 = vld [vmem:[%s1 + $0x70] sm:$0xf]
  %v57 = vld [vmem:[%s1 + $0x74] sm:$0xf]
  %v58 = vld [vmem:[%s1 + $0x78] sm:$0xf]
  %v59 = vld [vmem:[%s1 + $0x7c] sm:$0xf]
  %v60 = vld [vmem:[%s1 + $0x80] sm:$0xf]
  %v61 = vld [vmem:[%s1 + $0x84] sm:$0xf]
  %v62 = vld [vmem:[%s1 + $0x88] sm:$0xf]
  %v63 = vld [vmem:[%s1 + $0x8c] sm:$0xf]
  %v64 = vld [vmem:[%s1 + $0x90] sm:$0xf]
  %v65 = vld [vmem:[%s1 + $0x94] sm:$0xf]
  %v66 = vld [vmem:[%s1 + $0x98] sm:$0xf]
  %v67 = vld [vmem:[%s1 + $0x9c] sm:$0xf]
  %v68 = vld [vmem:[%s1 + $0xa0] sm:$0xf]
  %v69 = vld [vmem:[%s1 + $0xa4] sm:$0xf]
  %v70 = vld [vmem:[%s1 + $0xa8] sm:$0xf]
  %v71 = vld [vmem:[%s1 + $0xac] sm:$0xf]
  %v72 = vld [vmem:[%s1 + $0xb0] sm:$0xf]
  %v73 = vld [vmem:[%s1 + $0xb4] sm:$0xf]
  %v74 = vld [vmem:[%s1 + $0xb8] sm:$0xf]
  %v75 = vld [vmem:[%s1 + $0xbc] sm:$0xf]
  %v76 = vld [vmem:[%s1 + $0xc0] sm:$0xf]
  %v77 = vld [vmem:[%s1 + $0xc4] sm:$0xf]
  %v78 = vld [vmem:[%s1 + $0xc8] sm:$0xf]
  %v79 = vld [vmem:[%s1 + $0xcc] sm:$0xf]
  %v80 = vld [vmem:[%s1 + $0xd0] sm:$0xf]
  %v81 = vld [vmem:[%s1 + $0xd4] sm:$0xf]
  %v82 = vld [vmem:[%s1 + $0xd8] sm:$0xf]
  %v83 = vld [vmem:[%s1 + $0xdc] sm:$0xf]
  %v84 = vld [vmem:[%s1 + $0xe0] sm:$0xf]
  %v85 = vld [vmem:[%s1 + $0xe4] sm:$0xf]
  %v86 = vld [vmem:[%s1 + $0xe8] sm:$0xf]
  %v87 = vld [vmem:[%s1 + $0xec] sm:$0xf]
  %v88 = vld [vmem:[%s1 + $0xf0] sm:$0xf]
  %v89 = vld [vmem:[%s1 + $0xf4] sm:$0xf]
  %v90 = vld [vmem:[%s1 + $0xf8] sm:$0xf]
  %v91 = vld [vmem:[%s1 + $0xfc] sm:$0xf]
  %v92 = vld [vmem:[%s1 + $0x100] sm:$0xf]
  %v93 = vld [vmem:[%s1 + $0x104] sm:$0xf]
  %v94 = vld [vmem:[%s1 + $0x108] sm:$0xf]
  %v95 = vld [vmem:[%s1 + $0x10c] sm:$0xf]
  %v96 = vld [vmem:[%s1 + $0x110] sm:$0xf]
  %v97 = vld [vmem:[%s1 + $0x114] sm:$0xf]
  %v98 = vld [vmem:[%s1 + $0x118] sm:$0xf]
  %v99 = vld [vmem:[%s1 + $0x11c] sm:$0xf]
  %v100 = vld [vmem:[%s1 + $0x120] sm:$0xf]
  %v101 = vld [vmem:[%s1 + $0x124] sm:$0xf]
  %v102 = vld [vmem:[%s1 + $0x128] sm:$0xf]
  %v103 = vld [vmem:[%s1 + $0x12c] sm:$0xf]
  %v104 = vld [vmem:[%s1 + $0x130] sm:$0xf]
  %v105 = vld [vmem:[%s1 + $0x134] sm:$0xf]
  %v106 = vld [vmem:[%s1 + $0x138] sm:$0xf]
  %v107 = vld [vmem:[%s1 + $0x13c] sm:$0xf]
  %v108 = vld [vmem:[%s1 + $0x140] sm:$0xf]
  %v109 = vld [vmem:[%s1 + $0x144] sm:$0xf]
  %v110 = vld [vmem:[%s1 + $0x148] sm:$0xf]
  %v111 = vld [vmem:[%s1 + $0x14c] sm:$0xf]
  %v112 = vld [vmem:[%s1 + $0x150] sm:$0xf]
  %v113 = vld [vmem:[%s1 + $0x154] sm:$0xf]
  %v114 = vld [vmem:[%s1 + $0x158] sm:$0xf]
  %v115 = vld [vmem:[%s1 + $0x15c] sm:$0xf]
  %v116 = vld [vmem:[%s1 + $0x160] sm:$0xf]
  %v117 = vld [vmem:[%s1 + $0x164] sm:$0xf]
  %v118 = vld [vmem:[%s1 + $0x168] sm:$0xf]
  %v119 = vld [vmem:[%s1 + $0x16c] sm:$0xf]
  %v120 = vld [vmem:[%s1 + $0x170] sm:$0xf]
  %v121 = vld [vmem:[%s1 + $0x174] sm:$0xf]
  %v122 = vld [vmem:[%s1 + $0x178] sm:$0xf]
  %v123 = vld [vmem:[%s1 + $0x17c] sm:$0xf]
  %v124 = vld [vmem:[%s1 + $0x180] sm:$0xf]
  %v125 = vld [vmem:[%s1 + $0x184] sm:$0xf]
  %v126 = vld [vmem:[%s1 + $0x188] sm:$0xf]
  %v127 = vld [vmem:[%s1 + $0x18c] sm:$0xf]
  %v128 = vld [vmem:[%s1 + $0x190] sm:$0xf]
  %v129 = vld [vmem:[%s1 + $0x194] sm:$0xf]
  %v130 = vld [vmem:[%s1 + $0x198] sm:$0xf]
  %v131 = vld [vmem:[%s1 + $0x19c] sm:$0xf]
  %v132 = vld [vmem:[%s1 + $0x1a0] sm:$0xf]
  %v133 = vld [vmem:[%s1 + $0x1a4] sm:$0xf]
  %v134 = vld [vmem:[%s1 + $0x1a8] sm:$0xf]
  %v135 = vld [vmem:[%s1 + $0x1ac] sm:$0xf]
  %v136 = vld [vmem:[%s1 + $0x1b0] sm:$0xf]
  %v137 = vld [vmem:[%s1 + $0x1b4] sm:$0xf]
  %v138 = vld [vmem:[%s1 + $0x1b8] sm:$0xf]
  %v139 = vld [vmem:[%s1 + $0x1bc] sm:$0xf]
  %v140 = vld [vmem:[%s1 + $0x1c0] sm:$0xf]
  %v141 = vld [vmem:[%s1 + $0x1c4] sm:$0xf]
  %v142 = vld [vmem:[%s1 + $0x1c8] sm:$0xf]
  %v143 = vld [vmem:[%s1 + $0x1cc] sm:$0xf]
  %v144 = vld [vmem:[%s1 + $0x1d0] sm:$0xf]
  %v145 = vld [vmem:[%s1 + $0x1d4] sm:$0xf]
  %v146 = vld [vmem:[%s1 + $0x1d8] sm:$0xf]
  %v147 = vld [vmem:[%s1 + $0x1dc] sm:$0xf]
  %v148 = vld [vmem:[%s1 + $0x1e0] sm:$0xf]
  %v149 = vld [vmem:[%s1 + $0x1e4] sm:$0xf]
  %v150 = vld [vmem:[%s1 + $0x1e8] sm:$0xf]
  %v151 = vld [vmem:[%s1 + $0x1ec] sm:$0xf]
  %v152 = vld [vmem:[%s1 + $0x1f0] sm:$0xf]
  %v153 = vld [vmem:[%s1 + $0x1f4] sm:$0xf]
  %v154 = vld [vmem:[%s1 + $0x1f8] sm:$0xf]
  %v155 = vld [vmem:[%s1 + $0x1fc] sm:$0xf]
  %v156 = vld [vmem:[%s1 + $0x200] sm:$0xf]
  %v157 = vld [vmem:[%s1 + $0x204] sm:$0xf]
  %v158 = vld [vmem:[%s1 + $0x208] sm:$0xf]
  %v159 = vld [vmem:[%s1 + $0x20c] sm:$0xf]
  %v160 = vld [vmem:[%s1 + $0x210] sm:$0xf]
  %v161 = vld [vmem:[%s1 + $0x214] sm:$0xf]
  %v162 = vld [vmem:[%s1 + $0x218] sm:$0xf]
  %v163 = vld [vmem:[%s1 + $0x21c] sm:$0xf]
  %v164 = vld [vmem:[%s1 + $0x220] sm:$0xf]
  %v165 = vld [vmem:[%s1 + $0x224] sm:$0xf]
  %v166 = vld [vmem:[%s1 + $0x228] sm:$0xf]
  %v167 = vld [vmem:[%s1 + $0x22c] sm:$0xf]
  %v168 = vld [vmem:[%s1 + $0x230] sm:$0xf]
  %v169 = vld [vmem:[%s1 + $0x234] sm:$0xf]
  %v170 = vld [vmem:[%s1 + $0x238] sm:$0xf]
  %v171 = vld [vmem:[%s1 + $0x23c] sm:$0xf]
  %v172 = vld [vmem:[%s1 + $0x240] sm:$0xf]
  %v173 = vld [vmem:[%s1 + $0x244] sm:$0xf]
  %v174 = vld [vmem:[%s1 + $0x248] sm:$0xf]
  %v175 = vld [vmem:[%s1 + $0x24c] sm:$0xf]
  %v176 = vld [vmem:[%s1 + $0x250] sm:$0xf]
  %v177 = vld [vmem:[%s1 + $0x254] sm:$0xf]
  %v178 = vld [vmem:[%s1 + $0x258] sm:$0xf]
  %v179 = vld [vmem:[%s1 + $0x25c] sm:$0xf]
  %v180 = vld [vmem:[%s1 + $0x260] sm:$0xf]
  %v181 = vld [vmem:[%s1 + $0x264] sm:$0xf]
  %v182 = vld [vmem:[%s1 + $0x268] sm:$0xf]
  %v183 = vld [vmem:[%s1 + $0x26c] sm:$0xf]
  %v184 = vld [vmem:[%s1 + $0x270] sm:$0xf]
  %v185 = vld [vmem:[%s1 + $0x274] sm:$0xf]
  %v186 = vld [vmem:[%s1 + $0x278] sm:$0xf]
  %v187 = vld [vmem:[%s1 + $0x27c] sm:$0xf]
  %v188 = vld [vmem:[%s1 + $0x280] sm:$0xf]
  %v189 = vld [vmem:[%s1 + $0x284] sm:$0xf]
  %v190 = vld [vmem:[%s1 + $0x288] sm:$0xf]
  %v191 = vld [vmem:[%s1 + $0x28c] sm:$0xf]
  %v192 = vld [vmem:[%s1 + $0x290] sm:$0xf]
  %v193 = vld [vmem:[%s1 + $0x294] sm:$0xf]
  %v194 = vld [vmem:[%s1 + $0x298] sm:$0xf]
  %v195 = vld [vmem:[%s1 + $0x29c] sm:$0xf]
  %v196 = vld [vmem:[%s1 + $0x2a0] sm:$0xf]
  %v197 = vld [vmem:[%s1 + $0x2a4] sm:$0xf]
  %v198 = vld [vmem:[%s1 + $0x2a8] sm:$0xf]
  %v199 = vld [vmem:[%s1 + $0x2ac] sm:$0xf]
  %v200 = vld [vmem:[%s1 + $0x2b0] sm:$0xf]
  %v201 = vld [vmem:[%s1 + $0x2b4] sm:$0xf]
  %v202 = vld [vmem:[%s1 + $0x2b8] sm:$0xf]
  %v203 = vld [vmem:[%s1 + $0x2bc] sm:$0xf]
  %v204 = vld [vmem:[%s1 + $0x2c0] sm:$0xf]
  %v205 = vld [vmem:[%s1 + $0x2c4] sm:$0xf]
  %v206 = vld [vmem:[%s1 + $0x2c8] sm:$0xf]
  %v207 = vld [vmem:[%s1 + $0x2cc] sm:$0xf]
  %v208 = vld [vmem:[%s1 + $0x2d0] sm:$0xf]
  %v209 = vld [vmem:[%s1 + $0x2d4] sm:$0xf]
  %v210 = vld [vmem:[%s1 + $0x2d8] sm:$0xf]
  %v211 = vld [vmem:[%s1 + $0x2dc] sm:$0xf]
  %v212 = vld [vmem:[%s1 + $0x2e0] sm:$0xf]
  %v213 = vld [vmem:[%s1 + $0x2e4] sm:$0xf]
  %v214 = vld [vmem:[%s1 + $0x2e8] sm:$0xf]
  %v215 = vld [vmem:[%s1 + $0x2ec] sm:$0xf]
  %v216 = vld [vmem:[%s1 + $0x2f0] sm:$0xf]
  %v217 = vld [vmem:[%s1 + $0x2f4] sm:$0xf]
  %v218 = vld [vmem:[%s1 + $0x2f8] sm:$0xf]
  %v219 = vld [vmem:[%s1 + $0x2fc] sm:$0xf]
  %v220 = vld [vmem:[%s1 + $0x300] sm:$0xf]
  %v221 = vld [vmem:[%s1 + $0x304] sm:$0xf]
  %v222 = vld [vmem:[%s1 + $0x308] sm:$0xf]
  %v223 = vld [vmem:[%s1 + $0x30c] sm:$0xf]
  %v224 = vld [vmem:[%s1 + $0x310] sm:$0xf]
  %v225 = vld [vmem:[%s1 + $0x314] sm:$0xf]
  %v226 = vld [vmem:[%s1 + $0x318] sm:$0xf]
  %v227 = vld [vmem:[%s1 + $0x31c] sm:$0xf]
  %v228 = vld [vmem:[%s1 + $0x320] sm:$0xf]
  %v229 = vld [vmem:[%s1 + $0x324] sm:$0xf]
  %v230 = vld [vmem:[%s1 + $0x328] sm:$0xf]
  %v231 = vld [vmem:[%s1 + $0x32c] sm:$0xf]
  %v232 = vld [vmem:[%s1 + $0x330] sm:$0xf]
  %v233 = vld [vmem:[%s1 + $0x334] sm:$0xf]
  %v234 = vld [vmem:[%s1 + $0x338] sm:$0xf]
  %v235 = vld [vmem:[%s1 + $0x33c] sm:$0xf]
  %v236 = vld [vmem:[%s1 + $0x340] sm:$0xf]
  %v237 = vld [vmem:[%s1 + $0x344] sm:$0xf]
  %v238 = vld [vmem:[%s1 + $0x348] sm:$0xf]
  %v239 = vld [vmem:[%s1 + $0x34c] sm:$0xf]
  %v240 = vld [vmem:[%s1 + $0x350] sm:$0xf]
  %v241 = vld [vmem:[%s1 + $0x354] sm:$0xf]
  %v242 = vld [vmem:[%s1 + $0x358] sm:$0xf]
  %v243 = vld [vmem:[%s1 + $0x35c] sm:$0xf]
  %v244 = vld [vmem:[%s1 + $0x360] sm:$0xf]
  %v245 = vld [vmem:[%s1 + $0x364] sm:$0xf]
  %v246 = vld [vmem:[%s1 + $0x368] sm:$0xf]
  %v247 = vld [vmem:[%s1 + $0x36c] sm:$0xf]
  %v248 = vld [vmem:[%s1 + $0x370] sm:$0xf]
  %v249 = vld [vmem:[%s1 + $0x374] sm:$0xf]
  %v250 = vld [vmem:[%s1 + $0x378] sm:$0xf]
  %v251 = vld [vmem:[%s1 + $0x37c] sm:$0xf]
  %v252 = vld [vmem:[%s1 + $0x380] sm:$0xf]
  %v253 = vld [vmem:[%s1 + $0x384] sm:$0xf]
  %v254 = vld [vmem:[%s1 + $0x388] sm:$0xf]
  %v255 = vld [vmem:[%s1 + $0x38c] sm:$0xf]
  %v256 = vld [vmem:[%s1 + $0x390] sm:$0xf]
  %v257 = vld [vmem:[%s1 + $0x394] sm:$0xf]
  %v258 = vld [vmem:[%s1 + $0x398] sm:$0xf]
  %v259 = vld [vmem:[%s1 + $0x39c] sm:$0xf]
  %v260 = vld [vmem:[%s1 + $0x3a0] sm:$0xf]
  %v261 = vld [vmem:[%s1 + $0x3a4] sm:$0xf]
  %v262 = vld [vmem:[%s1 + $0x3a8] sm:$0xf]
  %v263 = vld [vmem:[%s1 + $0x3ac] sm:$0xf]
  %v264 = vld [vmem:[%s1 + $0x3b0] sm:$0xf]
  %v265 = vld [vmem:[%s1 + $0x3b4] sm:$0xf]
  %v266 = vld [vmem:[%s1 + $0x3b8] sm:$0xf]
  %v267 = vld [vmem:[%s1 + $0x3bc] sm:$0xf]
  %v268 = vld [vmem:[%s1 + $0x3c0] sm:$0xf]
  %v269 = vld [vmem:[%s1 + $0x3c4] sm:$0xf]
  %v270 = vld [vmem:[%s1 + $0x3c8] sm:$0xf]
  %v271 = vld [vmem:[%s1 + $0x3cc] sm:$0xf]
  %v272 = vld [vmem:[%s1 + $0x3d0] sm:$0xf]
  %v273 = vld [vmem:[%s1 + $0x3d4] sm:$0xf]
  %v274 = vld [vmem:[%s1 + $0x3d8] sm:$0xf]
  %v275 = vld [vmem:[%s1 + $0x3dc] sm:$0xf]
  %v276 = vld [vmem:[%s1 + $0x3e0] sm:$0xf]
  %v277 = vld [vmem:[%s1 + $0x3e4] sm:$0xf]
  %v278 = vld [vmem:[%s1 + $0x3e8] sm:$0xf]
  %v279 = vld [vmem:[%s1 + $0x3ec] sm:$0xf]
  %v280 = vld [vmem:[%s1 + $0x3f0] sm:$0xf]
  %v281 = vld [vmem:[%s1 + $0x3f4] sm:$0xf]
  %v282 = vld [vmem:[%s1 + $0x3f8] sm:$0xf]
  %v283 = vld [vmem:[%s1 + $0x3fc] sm:$0xf]
  %v284 = vld [vmem:[%s1 + $0x400] sm:$0xf]
  %v285 = vld [vmem:[%s1 + $0x404] sm:$0xf]
  %v286 = vld [vmem:[%s1 + $0x408] sm:$0xf]
  %v287 = vld [vmem:[%s1 + $0x40c] sm:$0xf]
  %v288 = vld [vmem:[%s1 + $0x410] sm:$0xf]
  %v289 = vld [vmem:[%s1 + $0x414] sm:$0xf]
  %v290 = vld [vmem:[%s1 + $0x418] sm:$0xf]
  %v291 = vld [vmem:[%s1 + $0x41c] sm:$0xf]
  %v292 = vld [vmem:[%s1 + $0x420] sm:$0xf]
  %v293 = vld [vmem:[%s1 + $0x424] sm:$0xf]
  %v294 = vld [vmem:[%s1 + $0x428] sm:$0xf]
  %v295 = vld [vmem:[%s1 + $0x42c] sm:$0xf]
  %v296 = vld [vmem:[%s1 + $0x430] sm:$0xf]
  %v297 = vld [vmem:[%s1 + $0x434] sm:$0xf]
  %v298 = vld [vmem:[%s1 + $0x438] sm:$0xf]
  %v299 = vld [vmem:[%s1 + $0x43c] sm:$0xf]
  %v300 = vld [vmem:[%s1 + $0x440] sm:$0xf]
  %v301 = vld [vmem:[%s1 + $0x444] sm:$0xf]
  %v302 = vld [vmem:[%s1 + $0x448] sm:$0xf]
  %v303 = vld [vmem:[%s1 + $0x44c] sm:$0xf]
  %v304 = vld [vmem:[%s1 + $0x450] sm:$0xf]
  %v305 = vld [vmem:[%s1 + $0x454] sm:$0xf]
  %v306 = vld [vmem:[%s1 + $0x458] sm:$0xf]
  %v307 = vld [vmem:[%s1 + $0x45c] sm:$0xf]
  %v308 = vld [vmem:[%s1 + $0x460] sm:$0xf]
  %v309 = vld [vmem:[%s1 + $0x464] sm:$0xf]
  %v310 = vld [vmem:[%s1 + $0x468] sm:$0xf]
  %v311 = vld [vmem:[%s1 + $0x46c] sm:$0xf]
  %v312 = vld [vmem:[%s1 + $0x470] sm:$0xf]
  %v313 = vld [vmem:[%s1 + $0x474] sm:$0xf]
  %v314 = vld [vmem:[%s1 + $0x478] sm:$0xf]
  %v315 = vld [vmem:[%s1 + $0x47c] sm:$0xf]
  %v316 = vld [vmem:[%s1 + $0x480] sm:$0xf]
  %v317 = vld [vmem:[%s1 + $0x484] sm:$0xf]
  %v318 = vld [vmem:[%s1 + $0x488] sm:$0xf]
  %v319 = vld [vmem:[%s1 + $0x48c] sm:$0xf]
  %v320 = vld [vmem:[%s1 + $0x490] sm:$0xf]
  %v321 = vld [vmem:[%s1 + $0x494] sm:$0xf]
  %v322 = vld [vmem:[%s1 + $0x498] sm:$0xf]
  %v323 = vld [vmem:[%s1 + $0x49c] sm:$0xf]
  %v324 = vld [vmem:[%s1 + $0x4a0] sm:$0xf]
  %v325 = vld [vmem:[%s1 + $0x4a4] sm:$0xf]
  %v326 = vld [vmem:[%s1 + $0x4a8] sm:$0xf]
  %v327 = vld [vmem:[%s1 + $0x4ac] sm:$0xf]
  %v328 = vld [vmem:[%s1 + $0x4b0] sm:$0xf]
  %v329 = vld [vmem:[%s1 + $0x4b4] sm:$0xf]
  %v330 = vld [vmem:[%s1 + $0x4b8] sm:$0xf]
  %v331 = vld [vmem:[%s1 + $0x4bc] sm:$0xf]
  %v332 = vld [vmem:[%s1 + $0x4c0] sm:$0xf]
  %v333 = vld [vmem:[%s1 + $0x4c4] sm:$0xf]
  %v334 = vld [vmem:[%s1 + $0x4c8] sm:$0xf]
  %v335 = vld [vmem:[%s1 + $0x4cc] sm:$0xf]
  %v336 = vld [vmem:[%s1 + $0x4d0] sm:$0xf]
  %v337 = vld [vmem:[%s1 + $0x4d4] sm:$0xf]
  %v338 = vld [vmem:[%s1 + $0x4d8] sm:$0xf]
  %v339 = vld [vmem:[%s1 + $0x4dc] sm:$0xf]
  %v340 = vld [vmem:[%s1 + $0x4e0] sm:$0xf]
  %v341 = vld [vmem:[%s1 + $0x4e4] sm:$0xf]
  %v342 = vld [vmem:[%s1 + $0x4e8] sm:$0xf]
  %v343 = vld [vmem:[%s1 + $0x4ec] sm:$0xf]
  %v344 = vld [vmem:[%s1 + $0x4f0] sm:$0xf]
  %v345 = vld [vmem:[%s1 + $0x4f4] sm:$0xf]
  %v346 = vld [vmem:[%s1 + $0x4f8] sm:$0xf]
  %v347 = vld [vmem:[%s1 + $0x4fc] sm:$0xf]
  %v348 = vld [vmem:[%s1 + $0x500] sm:$0xf]
  %v349 = vld [vmem:[%s1 + $0x504] sm:$0xf]
  %v350 = vld [vmem:[%s1 + $0x508] sm:$0xf]
  %v351 = vld [vmem:[%s1 + $0x50c] sm:$0xf]
  %v352 = vld [vmem:[%s1 + $0x510] sm:$0xf]
  %v353 = vld [vmem:[%s1 + $0x514] sm:$0xf]
  %v354 = vld [vmem:[%s1 + $0x518] sm:$0xf]
  %v355 = vld [vmem:[%s1 + $0x51c] sm:$0xf]
  %v356 = vld [vmem:[%s1 + $0x520] sm:$0xf]
  %v357 = vld [vmem:[%s1 + $0x524] sm:$0xf]
  %v358 = vld [vmem:[%s1 + $0x528] sm:$0xf]
  %v359 = vld [vmem:[%s1 + $0x52c] sm:$0xf]
  %v360 = vld [vmem:[%s1 + $0x530] sm:$0xf]
  %v361 = vld [vmem:[%s1 + $0x534] sm:$0xf]
  %v362 = vld [vmem:[%s1 + $0x538] sm:$0xf]
  %v363 = vld [vmem:[%s1 + $0x53c] sm:$0xf]
  %v364 = vld [vmem:[%s1 + $0x540] sm:$0xf]
  %v365 = vld [vmem:[%s1 + $0x544] sm:$0xf]
  %v366 = vld [vmem:[%s1 + $0x548] sm:$0xf]
  %v367 = vld [vmem:[%s1 + $0x54c] sm:$0xf]
  %v368 = vld [vmem:[%s1 + $0x550] sm:$0xf]
  %v369 = vld [vmem:[%s1 + $0x554] sm:$0xf]
  %v370 = vld [vmem:[%s1 + $0x558] sm:$0xf]
  %v371 = vld [vmem:[%s1 + $0x55c] sm:$0xf]
  %v372 = vld [vmem:[%s1 + $0x560] sm:$0xf]
  %v373 = vld [vmem:[%s1 + $0x564] sm:$0xf]
  %v374 = vld [vmem:[%s1 + $0x568] sm:$0xf]
  %v375 = vld [vmem:[%s1 + $0x56c] sm:$0xf]
  %v376 = vld [vmem:[%s1 + $0x570] sm:$0xf]
  %v377 = vld [vmem:[%s1 + $0x574] sm:$0xf]
  %v378 = vld [vmem:[%s1 + $0x578] sm:$0xf]
  %v379 = vld [vmem:[%s1 + $0x57c] sm:$0xf]
  %v380 = vld [vmem:[%s1 + $0x580] sm:$0xf]
  %v381 = vld [vmem:[%s1 + $0x584] sm:$0xf]
  %v382 = vld [vmem:[%s1 + $0x588] sm:$0xf]
  %v383 = vld [vmem:[%s1 + $0x58c] sm:$0xf]
  %v384 = vld [vmem:[%s1 + $0x590] sm:$0xf]
  %v385 = vld [vmem:[%s1 + $0x594] sm:$0xf]
  %v386 = vld [vmem:[%s1 + $0x598] sm:$0xf]
  %v387 = vld [vmem:[%s1 + $0x59c] sm:$0xf]
  %v388 = vld [vmem:[%s1 + $0x5a0] sm:$0xf]
  %v389 = vld [vmem:[%s1 + $0x5a4] sm:$0xf]
  %v390 = vld [vmem:[%s1 + $0x5a8] sm:$0xf]
  %v391 = vld [vmem:[%s1 + $0x5ac] sm:$0xf]
  %v392 = vld [vmem:[%s1 + $0x5b0] sm:$0xf]
  %v393 = vld [vmem:[%s1 + $0x5b4] sm:$0xf]
  %v394 = vld [vmem:[%s1 + $0x5b8] sm:$0xf]
  %v395 = vld [vmem:[%s1 + $0x5bc] sm:$0xf]
  %v396 = vld [vmem:[%s1 + $0x5c0] sm:$0xf]
  %v397 = vld [vmem:[%s1 + $0x5c4] sm:$0xf]
  %v398 = vld [vmem:[%s1 + $0x5c8] sm:$0xf]
  %v399 = vld [vmem:[%s1 + $0x5cc] sm:$0xf]
  %v400 = vld [vmem:[%s1 + $0x5d0] sm:$0xf]
  %v401 = vld [vmem:[%s1 + $0x5d4] sm:$0xf]
  %v402 = vld [vmem:[%s1 + $0x5d8] sm:$0xf]
  %v403 = vld [vmem:[%s1 + $0x5dc] sm:$0xf]
  %v404 = vld [vmem:[%s1 + $0x5e0] sm:$0xf]
  %v405 = vld [vmem:[%s1 + $0x5e4] sm:$0xf]
  %v406 = vld [vmem:[%s1 + $0x5e8] sm:$0xf]
  %v407 = vld [vmem:[%s1 + $0x5ec] sm:$0xf]
  %v408 = vld [vmem:[%s1 + $0x5f0] sm:$0xf]
  %v409 = vld [vmem:[%s1 + $0x5f4] sm:$0xf]
  %v410 = vld [vmem:[%s1 + $0x5f8] sm:$0xf]
  %v411 = vld [vmem:[%s1 + $0x5fc] sm:$0xf]
  %v412 = vld [vmem:[%s1 + $0x600] sm:$0xf]
  %v413 = vld [vmem:[%s1 + $0x604] sm:$0xf]
  %v414 = vld [vmem:[%s1 + $0x608] sm:$0xf]
  %v415 = vld [vmem:[%s1 + $0x60c] sm:$0xf]
  %v416 = vld [vmem:[%s1 + $0x610] sm:$0xf]
  %v417 = vld [vmem:[%s1 + $0x614] sm:$0xf]
  %v418 = vld [vmem:[%s1 + $0x618] sm:$0xf]
  %v419 = vld [vmem:[%s1 + $0x61c] sm:$0xf]
  %v420 = vld [vmem:[%s2] sm:$0x1]
  %v422 = vlaneseq
  %v423 = vshrl.u32 %v422, 7
  %v424 = vsub.s32 0, %v423
  %v425 = vrot.slane %v420, %v424
  %v440 = vunpack.c.l.b16 %v15
  %v441 = vunpack.c.h.b16 %v15
  %v442 = vunpack.c.l.b16 %v16
  %v443 = vunpack.c.h.b16 %v16
  %v444 = vunpack.c.l.b16 %v17
  %v445 = vunpack.c.h.b16 %v17
  %v446 = vunpack.c.l.b16 %v18
  %v447 = vunpack.c.h.b16 %v18
  %v448 = vunpack.c.l.b16 %v19
  %v449 = vunpack.c.h.b16 %v19
  %v450 = vunpack.c.l.b16 %v20
  %v451 = vunpack.c.h.b16 %v20
  %v452 = vunpack.c.l.b16 %v21
  %v453 = vunpack.c.h.b16 %v21
  %v454 = vunpack.c.l.b16 %v22
  %v455 = vunpack.c.h.b16 %v22
  %v456 = vunpack.c.l.b16 %v23
  %v457 = vunpack.c.h.b16 %v23
  %v458 = vunpack.c.l.b16 %v24
  %v459 = vunpack.c.h.b16 %v24
  %v460 = vunpack.c.l.b16 %v25
  %v461 = vunpack.c.h.b16 %v25
  %v462 = vunpack.c.l.b16 %v26
  %v463 = vunpack.c.h.b16 %v26
  %v464 = vunpack.c.l.b16 %v27
  %v465 = vpack.c.b16 %v440, %v440
  %v466 = vpack.c.b16 %v441, %v441
  %v467 = vpack.c.b16 %v442, %v442
  %v468 = vpack.c.b16 %v443, %v443
  %v469 = vpack.c.b16 %v444, %v444
  %v470 = vpack.c.b16 %v445, %v445
  %v471 = vpack.c.b16 %v446, %v446
  %v472 = vpack.c.b16 %v447, %v447
  %v473 = vpack.c.b16 %v448, %v448
  %v474 = vpack.c.b16 %v449, %v449
  %v475 = vpack.c.b16 %v450, %v450
  %v476 = vpack.c.b16 %v451, %v451
  %v477 = vpack.c.b16 %v452, %v452
  %v478 = vpack.c.b16 %v453, %v453
  %v479 = vpack.c.b16 %v454, %v454
  %v480 = vpack.c.b16 %v455, %v455
  %v481 = vpack.c.b16 %v456, %v456
  %v482 = vpack.c.b16 %v457, %v457
  %v483 = vpack.c.b16 %v458, %v458
  %v484 = vpack.c.b16 %v459, %v459
  %v485 = vpack.c.b16 %v460, %v460
  %v486 = vpack.c.b16 %v461, %v461
  %v487 = vpack.c.b16 %v462, %v462
  %v488 = vpack.c.b16 %v463, %v463
  %v489 = vpack.c.b16 %v464, %v464
  %v906 = vunpack.c.l.b16 %v28
  %v907 = vunpack.c.l.b16 %v29
  %v908 = vunpack.c.l.b16 %v30
  %v909 = vunpack.c.l.b16 %v31
  %v910 = vunpack.c.l.b16 %v32
  %v911 = vunpack.c.l.b16 %v33
  %v912 = vunpack.c.l.b16 %v34
  %v913 = vunpack.c.l.b16 %v35
  %v914 = vunpack.c.l.b16 %v36
  %v915 = vunpack.c.l.b16 %v37
  %v916 = vunpack.c.l.b16 %v38
  %v917 = vunpack.c.l.b16 %v39
  %v918 = vunpack.c.l.b16 %v40
  %v919 = vunpack.c.l.b16 %v41
  %v920 = vunpack.c.l.b16 %v42
  %v921 = vunpack.c.l.b16 %v43
  %v922 = vunpack.c.l.b16 %v44
  %v923 = vunpack.c.l.b16 %v45
  %v924 = vunpack.c.l.b16 %v46
  %v925 = vunpack.c.l.b16 %v47
  %v926 = vunpack.c.l.b16 %v48
  %v927 = vunpack.c.l.b16 %v49
  %v928 = vunpack.c.l.b16 %v50
  %v929 = vunpack.c.l.b16 %v51
  %v930 = vunpack.c.l.b16 %v52
  %v931 = vunpack.c.l.b16 %v53
  %v932 = vunpack.c.l.b16 %v54
  %v933 = vunpack.c.l.b16 %v55
  %v934 = vunpack.c.l.b16 %v56
  %v935 = vunpack.c.l.b16 %v57
  %v936 = vunpack.c.l.b16 %v58
  %v937 = vunpack.c.l.b16 %v59
  %v938 = vunpack.c.l.b16 %v60
  %v939 = vunpack.c.l.b16 %v61
  %v940 = vunpack.c.l.b16 %v62
  %v941 = vunpack.c.l.b16 %v63
  %v942 = vunpack.c.l.b16 %v64
  %v943 = vunpack.c.l.b16 %v65
  %v944 = vunpack.c.l.b16 %v66
  %v945 = vunpack.c.l.b16 %v67
  %v946 = vunpack.c.l.b16 %v68
  %v947 = vunpack.c.l.b16 %v69
  %v948 = vunpack.c.l.b16 %v70
  %v949 = vunpack.c.l.b16 %v71
  %v950 = vunpack.c.l.b16 %v72
  %v951 = vunpack.c.l.b16 %v73
  %v952 = vunpack.c.l.b16 %v74
  %v953 = vunpack.c.l.b16 %v75
  %v954 = vunpack.c.l.b16 %v76
  %v955 = vunpack.c.l.b16 %v77
  %v956 = vunpack.c.l.b16 %v78
  %v957 = vunpack.c.l.b16 %v79
  %v958 = vunpack.c.l.b16 %v80
  %v959 = vunpack.c.l.b16 %v81
  %v960 = vunpack.c.l.b16 %v82
  %v961 = vunpack.c.l.b16 %v83
  %v962 = vunpack.c.l.b16 %v84
  %v963 = vunpack.c.l.b16 %v85
  %v964 = vunpack.c.l.b16 %v86
  %v965 = vunpack.c.l.b16 %v87
  %v966 = vunpack.c.l.b16 %v88
  %v967 = vunpack.c.l.b16 %v89
  %v968 = vunpack.c.l.b16 %v90
  %v969 = vunpack.c.l.b16 %v91
  %v970 = vunpack.c.l.b16 %v92
  %v971 = vunpack.c.l.b16 %v93
  %v972 = vunpack.c.l.b16 %v94
  %v973 = vunpack.c.l.b16 %v95
  %v974 = vunpack.c.l.b16 %v96
  %v975 = vunpack.c.l.b16 %v97
  %v976 = vunpack.c.l.b16 %v98
  %v977 = vunpack.c.l.b16 %v99
  %v978 = vunpack.c.l.b16 %v100
  %v979 = vunpack.c.l.b16 %v101
  %v980 = vunpack.c.l.b16 %v102
  %v981 = vunpack.c.l.b16 %v103
  %v982 = vunpack.c.l.b16 %v104
  %v983 = vunpack.c.l.b16 %v105
  %v984 = vunpack.c.l.b16 %v106
  %v985 = vunpack.c.l.b16 %v107
  %v986 = vunpack.c.l.b16 %v108
  %v987 = vunpack.c.l.b16 %v109
  %v988 = vunpack.c.l.b16 %v110
  %v989 = vunpack.c.l.b16 %v111
  %v990 = vunpack.c.l.b16 %v112
  %v991 = vunpack.c.l.b16 %v113
  %v992 = vunpack.c.l.b16 %v114
  %v993 = vunpack.c.l.b16 %v115
  %v994 = vunpack.c.l.b16 %v116
  %v995 = vunpack.c.l.b16 %v117
  %v996 = vunpack.c.l.b16 %v118
  %v997 = vunpack.c.l.b16 %v119
  %v998 = vunpack.c.l.b16 %v120
  %v999 = vunpack.c.l.b16 %v121
  %v1000 = vunpack.c.l.b16 %v122
  %v1001 = vunpack.c.l.b16 %v123
  %v1002 = vunpack.c.l.b16 %v124
  %v1003 = vunpack.c.l.b16 %v125
  %v1004 = vunpack.c.l.b16 %v126
  %v1005 = vunpack.c.l.b16 %v127
  %v1006 = vunpack.c.l.b16 %v128
  %v1007 = vunpack.c.l.b16 %v129
  %v1008 = vunpack.c.l.b16 %v130
  %v1009 = vunpack.c.l.b16 %v131
  %v1010 = vunpack.c.l.b16 %v132
  %v1011 = vunpack.c.l.b16 %v133
  %v1012 = vunpack.c.l.b16 %v134
  %v1013 = vunpack.c.l.b16 %v135
  %v1014 = vunpack.c.l.b16 %v136
  %v1015 = vunpack.c.l.b16 %v137
  %v1016 = vunpack.c.l.b16 %v138
  %v1017 = vunpack.c.l.b16 %v139
  %v1018 = vunpack.c.l.b16 %v140
  %v1019 = vunpack.c.l.b16 %v141
  %v1020 = vunpack.c.l.b16 %v142
  %v1021 = vunpack.c.l.b16 %v143
  %v1022 = vunpack.c.l.b16 %v144
  %v1023 = vunpack.c.l.b16 %v145
  %v1024 = vunpack.c.l.b16 %v146
  %v1025 = vunpack.c.l.b16 %v147
  %v1026 = vunpack.c.l.b16 %v148
  %v1027 = vunpack.c.l.b16 %v149
  %v1028 = vunpack.c.l.b16 %v150
  %v1029 = vunpack.c.l.b16 %v151
  %v1030 = vunpack.c.l.b16 %v152
  %v1031 = vunpack.c.l.b16 %v153
  %v1032 = vunpack.c.l.b16 %v154
  %v1033 = vunpack.c.l.b16 %v155
  %v1034 = vunpack.c.l.b16 %v156
  %v1035 = vunpack.c.l.b16 %v157
  %v1036 = vunpack.c.l.b16 %v158
  %v1037 = vunpack.c.l.b16 %v159
  %v1038 = vunpack.c.l.b16 %v160
  %v1039 = vunpack.c.l.b16 %v161
  %v1040 = vunpack.c.l.b16 %v162
  %v1041 = vunpack.c.l.b16 %v163
  %v1042 = vunpack.c.l.b16 %v164
  %v1043 = vunpack.c.l.b16 %v165
  %v1044 = vunpack.c.l.b16 %v166
  %v1045 = vunpack.c.l.b16 %v167
  %v1046 = vunpack.c.l.b16 %v168
  %v1047 = vunpack.c.l.b16 %v169
  %v1048 = vunpack.c.l.b16 %v170
  %v1049 = vunpack.c.l.b16 %v171
  %v1050 = vunpack.c.l.b16 %v172
  %v1051 = vunpack.c.l.b16 %v173
  %v1052 = vunpack.c.l.b16 %v174
  %v1053 = vunpack.c.l.b16 %v175
  %v1054 = vunpack.c.l.b16 %v176
  %v1055 = vunpack.c.l.b16 %v177
  %v1056 = vunpack.c.l.b16 %v178
  %v1057 = vunpack.c.l.b16 %v179
  %v1058 = vunpack.c.l.b16 %v180
  %v1059 = vunpack.c.l.b16 %v181
  %v1060 = vunpack.c.l.b16 %v182
  %v1061 = vunpack.c.l.b16 %v183
  %v1062 = vunpack.c.l.b16 %v184
  %v1063 = vunpack.c.l.b16 %v185
  %v1064 = vunpack.c.l.b16 %v186
  %v1065 = vunpack.c.l.b16 %v187
  %v1066 = vunpack.c.l.b16 %v188
  %v1067 = vunpack.c.l.b16 %v189
  %v1068 = vunpack.c.l.b16 %v190
  %v1069 = vunpack.c.l.b16 %v191
  %v1070 = vunpack.c.l.b16 %v192
  %v1071 = vunpack.c.l.b16 %v193
  %v1072 = vunpack.c.l.b16 %v194
  %v1073 = vunpack.c.l.b16 %v195
  %v1074 = vunpack.c.l.b16 %v196
  %v1075 = vunpack.c.l.b16 %v197
  %v1076 = vunpack.c.l.b16 %v198
  %v1077 = vunpack.c.l.b16 %v199
  %v1078 = vunpack.c.l.b16 %v200
  %v1079 = vunpack.c.l.b16 %v201
  %v1080 = vunpack.c.l.b16 %v202
  %v1081 = vunpack.c.l.b16 %v203
  %v1082 = vunpack.c.l.b16 %v204
  %v1083 = vunpack.c.l.b16 %v205
  %v1084 = vunpack.c.l.b16 %v206
  %v1085 = vunpack.c.l.b16 %v207
  %v1086 = vunpack.c.l.b16 %v208
  %v1087 = vunpack.c.l.b16 %v209
  %v1088 = vunpack.c.l.b16 %v210
  %v1089 = vunpack.c.l.b16 %v211
  %v1090 = vunpack.c.l.b16 %v212
  %v1091 = vunpack.c.l.b16 %v213
  %v1092 = vunpack.c.l.b16 %v214
  %v1093 = vunpack.c.l.b16 %v215
  %v1094 = vunpack.c.l.b16 %v216
  %v1095 = vunpack.c.l.b16 %v217
  %v1096 = vunpack.c.l.b16 %v218
  %v1097 = vunpack.c.l.b16 %v219
  %v1098 = vunpack.c.l.b16 %v220
  %v1099 = vunpack.c.l.b16 %v221
  %v1100 = vunpack.c.l.b16 %v222
  %v1101 = vunpack.c.l.b16 %v223
  %v1102 = vunpack.c.l.b16 %v224
  %v1103 = vunpack.c.l.b16 %v225
  %v1104 = vunpack.c.l.b16 %v226
  %v1105 = vunpack.c.l.b16 %v227
  %v1106 = vunpack.c.l.b16 %v228
  %v1107 = vunpack.c.l.b16 %v229
  %v1108 = vunpack.c.l.b16 %v230
  %v1109 = vunpack.c.l.b16 %v231
  %v1110 = vunpack.c.l.b16 %v232
  %v1111 = vunpack.c.l.b16 %v233
  %v1112 = vunpack.c.l.b16 %v234
  %v1113 = vunpack.c.l.b16 %v235
  %v1114 = vunpack.c.l.b16 %v236
  %v1115 = vunpack.c.l.b16 %v237
  %v1116 = vunpack.c.l.b16 %v238
  %v1117 = vunpack.c.l.b16 %v239
  %v1118 = vunpack.c.l.b16 %v240
  %v1119 = vunpack.c.l.b16 %v241
  %v1120 = vunpack.c.l.b16 %v242
  %v1121 = vunpack.c.l.b16 %v243
  %v1122 = vunpack.c.l.b16 %v244
  %v1123 = vunpack.c.l.b16 %v245
  %v1124 = vunpack.c.l.b16 %v246
  %v1125 = vunpack.c.l.b16 %v247
  %v1126 = vunpack.c.l.b16 %v248
  %v1127 = vunpack.c.l.b16 %v249
  %v1128 = vunpack.c.l.b16 %v250
  %v1129 = vunpack.c.l.b16 %v251
  %v1130 = vunpack.c.l.b16 %v252
  %v1131 = vunpack.c.l.b16 %v253
  %v1132 = vunpack.c.l.b16 %v254
  %v1133 = vunpack.c.l.b16 %v255
  %v1134 = vunpack.c.l.b16 %v256
  %v1135 = vunpack.c.l.b16 %v257
  %v1136 = vunpack.c.l.b16 %v258
  %v1137 = vunpack.c.l.b16 %v259
  %v1138 = vunpack.c.l.b16 %v260
  %v1139 = vunpack.c.l.b16 %v261
  %v1140 = vunpack.c.l.b16 %v262
  %v1141 = vunpack.c.l.b16 %v263
  %v1142 = vunpack.c.l.b16 %v264
  %v1143 = vunpack.c.l.b16 %v265
  %v1144 = vunpack.c.l.b16 %v266
  %v1145 = vunpack.c.l.b16 %v267
  %v1146 = vunpack.c.l.b16 %v268
  %v1147 = vunpack.c.l.b16 %v269
  %v1148 = vunpack.c.l.b16 %v270
  %v1149 = vunpack.c.l.b16 %v271
  %v1150 = vunpack.c.l.b16 %v272
  %v1151 = vunpack.c.l.b16 %v273
  %v1152 = vunpack.c.l.b16 %v274
  %v1153 = vunpack.c.l.b16 %v275
  %v1154 = vunpack.c.l.b16 %v276
  %v1155 = vunpack.c.l.b16 %v277
  %v1156 = vunpack.c.l.b16 %v278
  %v1157 = vunpack.c.l.b16 %v279
  %v1158 = vunpack.c.l.b16 %v280
  %v1159 = vunpack.c.l.b16 %v281
  %v1160 = vunpack.c.l.b16 %v282
  %v1161 = vunpack.c.l.b16 %v283
  %v1162 = vunpack.c.l.b16 %v284
  %v1163 = vunpack.c.l.b16 %v285
  %v1164 = vunpack.c.l.b16 %v286
  %v1165 = vunpack.c.l.b16 %v287
  %v1166 = vunpack.c.l.b16 %v288
  %v1167 = vunpack.c.l.b16 %v289
  %v1168 = vunpack.c.l.b16 %v290
  %v1169 = vunpack.c.l.b16 %v291
  %v1170 = vunpack.c.l.b16 %v292
  %v1171 = vunpack.c.l.b16 %v293
  %v1172 = vunpack.c.l.b16 %v294
  %v1173 = vunpack.c.l.b16 %v295
  %v1174 = vunpack.c.l.b16 %v296
  %v1175 = vunpack.c.l.b16 %v297
  %v1176 = vunpack.c.l.b16 %v298
  %v1177 = vunpack.c.l.b16 %v299
  %v1178 = vunpack.c.l.b16 %v300
  %v1179 = vunpack.c.l.b16 %v301
  %v1180 = vunpack.c.l.b16 %v302
  %v1181 = vunpack.c.l.b16 %v303
  %v1182 = vunpack.c.l.b16 %v304
  %v1183 = vunpack.c.l.b16 %v305
  %v1184 = vunpack.c.l.b16 %v306
  %v1185 = vunpack.c.l.b16 %v307
  %v1186 = vunpack.c.l.b16 %v308
  %v1187 = vunpack.c.l.b16 %v309
  %v1188 = vunpack.c.l.b16 %v310
  %v1189 = vunpack.c.l.b16 %v311
  %v1190 = vunpack.c.l.b16 %v312
  %v1191 = vunpack.c.l.b16 %v313
  %v1192 = vunpack.c.l.b16 %v314
  %v1193 = vunpack.c.l.b16 %v315
  %v1194 = vunpack.c.l.b16 %v316
  %v1195 = vunpack.c.l.b16 %v317
  %v1196 = vunpack.c.l.b16 %v318
  %v1197 = vunpack.c.l.b16 %v319
  %v1198 = vunpack.c.l.b16 %v320
  %v1199 = vunpack.c.l.b16 %v321
  %v1200 = vunpack.c.l.b16 %v322
  %v1201 = vunpack.c.l.b16 %v323
  %v1202 = vunpack.c.l.b16 %v324
  %v1203 = vunpack.c.l.b16 %v325
  %v1204 = vunpack.c.l.b16 %v326
  %v1205 = vunpack.c.l.b16 %v327
  %v1206 = vunpack.c.l.b16 %v328
  %v1207 = vunpack.c.l.b16 %v329
  %v1208 = vunpack.c.l.b16 %v330
  %v1209 = vunpack.c.l.b16 %v331
  %v1210 = vunpack.c.l.b16 %v332
  %v1211 = vunpack.c.l.b16 %v333
  %v1212 = vunpack.c.l.b16 %v334
  %v1213 = vunpack.c.l.b16 %v335
  %v1214 = vunpack.c.l.b16 %v336
  %v1215 = vunpack.c.l.b16 %v337
  %v1216 = vunpack.c.l.b16 %v338
  %v1217 = vunpack.c.l.b16 %v339
  %v1218 = vunpack.c.l.b16 %v340
  %v1219 = vunpack.c.l.b16 %v341
  %v1220 = vunpack.c.l.b16 %v342
  %v1221 = vunpack.c.l.b16 %v343
  %v1222 = vunpack.c.l.b16 %v344
  %v1223 = vunpack.c.l.b16 %v345
  %v1224 = vunpack.c.l.b16 %v346
  %v1225 = vunpack.c.l.b16 %v347
  %v1226 = vunpack.c.l.b16 %v348
  %v1227 = vunpack.c.l.b16 %v349
  %v1228 = vunpack.c.l.b16 %v350
  %v1229 = vunpack.c.l.b16 %v351
  %v1230 = vunpack.c.l.b16 %v352
  %v1231 = vunpack.c.l.b16 %v353
  %v1232 = vunpack.c.l.b16 %v354
  %v1233 = vunpack.c.l.b16 %v355
  %v1234 = vunpack.c.l.b16 %v356
  %v1235 = vunpack.c.l.b16 %v357
  %v1236 = vunpack.c.l.b16 %v358
  %v1237 = vunpack.c.l.b16 %v359
  %v1238 = vunpack.c.l.b16 %v360
  %v1239 = vunpack.c.l.b16 %v361
  %v1240 = vunpack.c.l.b16 %v362
  %v1241 = vunpack.c.l.b16 %v363
  %v1242 = vunpack.c.l.b16 %v364
  %v1243 = vunpack.c.l.b16 %v365
  %v1244 = vunpack.c.l.b16 %v366
  %v1245 = vunpack.c.l.b16 %v367
  %v1246 = vunpack.c.l.b16 %v368
  %v1247 = vunpack.c.l.b16 %v369
  %v1248 = vunpack.c.l.b16 %v370
  %v1249 = vunpack.c.l.b16 %v371
  %v1250 = vunpack.c.l.b16 %v372
  %v1251 = vunpack.c.l.b16 %v373
  %v1252 = vunpack.c.l.b16 %v374
  %v1253 = vunpack.c.l.b16 %v375
  %v1254 = vunpack.c.l.b16 %v376
  %v1255 = vunpack.c.l.b16 %v377
  %v1256 = vunpack.c.l.b16 %v378
  %v1257 = vunpack.c.l.b16 %v379
  %v1258 = vunpack.c.l.b16 %v380
  %v1259 = vunpack.c.l.b16 %v381
  %v1260 = vunpack.c.l.b16 %v382
  %v1261 = vunpack.c.l.b16 %v383
  %v1262 = vunpack.c.l.b16 %v384
  %v1263 = vunpack.c.l.b16 %v385
  %v1264 = vunpack.c.l.b16 %v386
  %v1265 = vunpack.c.l.b16 %v387
  %v1266 = vunpack.c.l.b16 %v388
  %v1267 = vunpack.c.l.b16 %v389
  %v1268 = vunpack.c.l.b16 %v390
  %v1269 = vunpack.c.l.b16 %v391
  %v1270 = vunpack.c.l.b16 %v392
  %v1271 = vunpack.c.l.b16 %v393
  %v1272 = vunpack.c.l.b16 %v394
  %v1273 = vunpack.c.l.b16 %v395
  %v1274 = vunpack.c.l.b16 %v396
  %v1275 = vunpack.c.l.b16 %v397
  %v1276 = vunpack.c.l.b16 %v398
  %v1277 = vunpack.c.l.b16 %v399
  %v1278 = vunpack.c.l.b16 %v400
  %v1279 = vunpack.c.l.b16 %v401
  %v1280 = vunpack.c.l.b16 %v402
  %v1281 = vunpack.c.l.b16 %v403
  %v1282 = vunpack.c.l.b16 %v404
  %v1283 = vunpack.c.l.b16 %v405
  %v1284 = vunpack.c.l.b16 %v406
  %v1285 = vunpack.c.l.b16 %v407
  %v1286 = vunpack.c.l.b16 %v408
  %v1287 = vunpack.c.l.b16 %v409
  %v1288 = vunpack.c.l.b16 %v410
  %v1289 = vunpack.c.l.b16 %v411
  %v1290 = vunpack.c.l.b16 %v412
  %v1291 = vunpack.c.l.b16 %v413
  %v1292 = vunpack.c.l.b16 %v414
  %v1293 = vunpack.c.l.b16 %v415
  %v1294 = vunpack.c.l.b16 %v416
  %v1295 = vunpack.c.l.b16 %v417
  %v1296 = vunpack.c.l.b16 %v418
  %v1297 = vunpack.c.l.b16 %v419
  %v1298 = vpack.c.b16 %v907, %v906
  %v1299 = vpack.c.b16 %v909, %v908
  %v1300 = vpack.c.b16 %v911, %v910
  %v1301 = vpack.c.b16 %v913, %v912
  %v1302 = vpack.c.b16 %v915, %v914
  %v1303 = vpack.c.b16 %v917, %v916
  %v1304 = vpack.c.b16 %v919, %v918
  %v1305 = vpack.c.b16 %v921, %v920
  %v1306 = vpack.c.b16 %v923, %v922
  %v1307 = vpack.c.b16 %v925, %v924
  %v1308 = vpack.c.b16 %v927, %v926
  %v1309 = vpack.c.b16 %v929, %v928
  %v1310 = vpack.c.b16 %v931, %v930
  %v1311 = vpack.c.b16 %v933, %v932
  %v1312 = vpack.c.b16 %v935, %v934
  %v1313 = vpack.c.b16 %v937, %v936
  %v1314 = vpack.c.b16 %v939, %v938
  %v1315 = vpack.c.b16 %v941, %v940
  %v1316 = vpack.c.b16 %v943, %v942
  %v1317 = vpack.c.b16 %v945, %v944
  %v1318 = vpack.c.b16 %v947, %v946
  %v1319 = vpack.c.b16 %v949, %v948
  %v1320 = vpack.c.b16 %v951, %v950
  %v1321 = vpack.c.b16 %v953, %v952
  %v1322 = vpack.c.b16 %v955, %v954
  %v1323 = vpack.c.b16 %v957, %v956
  %v1324 = vpack.c.b16 %v959, %v958
  %v1325 = vpack.c.b16 %v961, %v960
  %v1326 = vpack.c.b16 %v963, %v962
  %v1327 = vpack.c.b16 %v965, %v964
  %v1328 = vpack.c.b16 %v967, %v966
  %v1329 = vpack.c.b16 %v969, %v968
  %v1330 = vpack.c.b16 %v971, %v970
  %v1331 = vpack.c.b16 %v973, %v972
  %v1332 = vpack.c.b16 %v975, %v974
  %v1333 = vpack.c.b16 %v977, %v976
  %v1334 = vpack.c.b16 %v979, %v978
  %v1335 = vpack.c.b16 %v981, %v980
  %v1336 = vpack.c.b16 %v983, %v982
  %v1337 = vpack.c.b16 %v985, %v984
  %v1338 = vpack.c.b16 %v987, %v986
  %v1339 = vpack.c.b16 %v989, %v988
  %v1340 = vpack.c.b16 %v991, %v990
  %v1341 = vpack.c.b16 %v993, %v992
  %v1342 = vpack.c.b16 %v995, %v994
  %v1343 = vpack.c.b16 %v997, %v996
  %v1344 = vpack.c.b16 %v999, %v998
  %v1345 = vpack.c.b16 %v1001, %v1000
  %v1346 = vpack.c.b16 %v1003, %v1002
  %v1347 = vpack.c.b16 %v1005, %v1004
  %v1348 = vpack.c.b16 %v1007, %v1006
  %v1349 = vpack.c.b16 %v1009, %v1008
  %v1350 = vpack.c.b16 %v1011, %v1010
  %v1351 = vpack.c.b16 %v1013, %v1012
  %v1352 = vpack.c.b16 %v1015, %v1014
  %v1353 = vpack.c.b16 %v1017, %v1016
  %v1354 = vpack.c.b16 %v1019, %v1018
  %v1355 = vpack.c.b16 %v1021, %v1020
  %v1356 = vpack.c.b16 %v1023, %v1022
  %v1357 = vpack.c.b16 %v1025, %v1024
  %v1358 = vpack.c.b16 %v1027, %v1026
  %v1359 = vpack.c.b16 %v1029, %v1028
  %v1360 = vpack.c.b16 %v1031, %v1030
  %v1361 = vpack.c.b16 %v1033, %v1032
  %v1362 = vpack.c.b16 %v1035, %v1034
  %v1363 = vpack.c.b16 %v1037, %v1036
  %v1364 = vpack.c.b16 %v1039, %v1038
  %v1365 = vpack.c.b16 %v1041, %v1040
  %v1366 = vpack.c.b16 %v1043, %v1042
  %v1367 = vpack.c.b16 %v1045, %v1044
  %v1368 = vpack.c.b16 %v1047, %v1046
  %v1369 = vpack.c.b16 %v1049, %v1048
  %v1370 = vpack.c.b16 %v1051, %v1050
  %v1371 = vpack.c.b16 %v1053, %v1052
  %v1372 = vpack.c.b16 %v1055, %v1054
  %v1373 = vpack.c.b16 %v1057, %v1056
  %v1374 = vpack.c.b16 %v1059, %v1058
  %v1375 = vpack.c.b16 %v1061, %v1060
  %v1376 = vpack.c.b16 %v1063, %v1062
  %v1377 = vpack.c.b16 %v1065, %v1064
  %v1378 = vpack.c.b16 %v1067, %v1066
  %v1379 = vpack.c.b16 %v1069, %v1068
  %v1380 = vpack.c.b16 %v1071, %v1070
  %v1381 = vpack.c.b16 %v1073, %v1072
  %v1382 = vpack.c.b16 %v1075, %v1074
  %v1383 = vpack.c.b16 %v1077, %v1076
  %v1384 = vpack.c.b16 %v1079, %v1078
  %v1385 = vpack.c.b16 %v1081, %v1080
  %v1386 = vpack.c.b16 %v1083, %v1082
  %v1387 = vpack.c.b16 %v1085, %v1084
  %v1388 = vpack.c.b16 %v1087, %v1086
  %v1389 = vpack.c.b16 %v1089, %v1088
  %v1390 = vpack.c.b16 %v1091, %v1090
  %v1391 = vpack.c.b16 %v1093, %v1092
  %v1392 = vpack.c.b16 %v1095, %v1094
  %v1393 = vpack.c.b16 %v1097, %v1096
  %v1394 = vpack.c.b16 %v1099, %v1098
  %v1395 = vpack.c.b16 %v1101, %v1100
  %v1396 = vpack.c.b16 %v1103, %v1102
  %v1397 = vpack.c.b16 %v1105, %v1104
  %v1398 = vpack.c.b16 %v1107, %v1106
  %v1399 = vpack.c.b16 %v1109, %v1108
  %v1400 = vpack.c.b16 %v1111, %v1110
  %v1401 = vpack.c.b16 %v1113, %v1112
  %v1402 = vpack.c.b16 %v1115, %v1114
  %v1403 = vpack.c.b16 %v1117, %v1116
  %v1404 = vpack.c.b16 %v1119, %v1118
  %v1405 = vpack.c.b16 %v1121, %v1120
  %v1406 = vpack.c.b16 %v1123, %v1122
  %v1407 = vpack.c.b16 %v1125, %v1124
  %v1408 = vpack.c.b16 %v1127, %v1126
  %v1409 = vpack.c.b16 %v1129, %v1128
  %v1410 = vpack.c.b16 %v1131, %v1130
  %v1411 = vpack.c.b16 %v1133, %v1132
  %v1412 = vpack.c.b16 %v1135, %v1134
  %v1413 = vpack.c.b16 %v1137, %v1136
  %v1414 = vpack.c.b16 %v1139, %v1138
  %v1415 = vpack.c.b16 %v1141, %v1140
  %v1416 = vpack.c.b16 %v1143, %v1142
  %v1417 = vpack.c.b16 %v1145, %v1144
  %v1418 = vpack.c.b16 %v1147, %v1146
  %v1419 = vpack.c.b16 %v1149, %v1148
  %v1420 = vpack.c.b16 %v1151, %v1150
  %v1421 = vpack.c.b16 %v1153, %v1152
  %v1422 = vpack.c.b16 %v1155, %v1154
  %v1423 = vpack.c.b16 %v1157, %v1156
  %v1424 = vpack.c.b16 %v1159, %v1158
  %v1425 = vpack.c.b16 %v1161, %v1160
  %v1426 = vpack.c.b16 %v1163, %v1162
  %v1427 = vpack.c.b16 %v1165, %v1164
  %v1428 = vpack.c.b16 %v1167, %v1166
  %v1429 = vpack.c.b16 %v1169, %v1168
  %v1430 = vpack.c.b16 %v1171, %v1170
  %v1431 = vpack.c.b16 %v1173, %v1172
  %v1432 = vpack.c.b16 %v1175, %v1174
  %v1433 = vpack.c.b16 %v1177, %v1176
  %v1434 = vpack.c.b16 %v1179, %v1178
  %v1435 = vpack.c.b16 %v1181, %v1180
  %v1436 = vpack.c.b16 %v1183, %v1182
  %v1437 = vpack.c.b16 %v1185, %v1184
  %v1438 = vpack.c.b16 %v1187, %v1186
  %v1439 = vpack.c.b16 %v1189, %v1188
  %v1440 = vpack.c.b16 %v1191, %v1190
  %v1441 = vpack.c.b16 %v1193, %v1192
  %v1442 = vpack.c.b16 %v1195, %v1194
  %v1443 = vpack.c.b16 %v1197, %v1196
  %v1444 = vpack.c.b16 %v1199, %v1198
  %v1445 = vpack.c.b16 %v1201, %v1200
  %v1446 = vpack.c.b16 %v1203, %v1202
  %v1447 = vpack.c.b16 %v1205, %v1204
  %v1448 = vpack.c.b16 %v1207, %v1206
  %v1449 = vpack.c.b16 %v1209, %v1208
  %v1450 = vpack.c.b16 %v1211, %v1210
  %v1451 = vpack.c.b16 %v1213, %v1212
  %v1452 = vpack.c.b16 %v1215, %v1214
  %v1453 = vpack.c.b16 %v1217, %v1216
  %v1454 = vpack.c.b16 %v1219, %v1218
  %v1455 = vpack.c.b16 %v1221, %v1220
  %v1456 = vpack.c.b16 %v1223, %v1222
  %v1457 = vpack.c.b16 %v1225, %v1224
  %v1458 = vpack.c.b16 %v1227, %v1226
  %v1459 = vpack.c.b16 %v1229, %v1228
  %v1460 = vpack.c.b16 %v1231, %v1230
  %v1461 = vpack.c.b16 %v1233, %v1232
  %v1462 = vpack.c.b16 %v1235, %v1234
  %v1463 = vpack.c.b16 %v1237, %v1236
  %v1464 = vpack.c.b16 %v1239, %v1238
  %v1465 = vpack.c.b16 %v1241, %v1240
  %v1466 = vpack.c.b16 %v1243, %v1242
  %v1467 = vpack.c.b16 %v1245, %v1244
  %v1468 = vpack.c.b16 %v1247, %v1246
  %v1469 = vpack.c.b16 %v1249, %v1248
  %v1470 = vpack.c.b16 %v1251, %v1250
  %v1471 = vpack.c.b16 %v1253, %v1252
  %v1472 = vpack.c.b16 %v1255, %v1254
  %v1473 = vpack.c.b16 %v1257, %v1256
  %v1474 = vpack.c.b16 %v1259, %v1258
  %v1475 = vpack.c.b16 %v1261, %v1260
  %v1476 = vpack.c.b16 %v1263, %v1262
  %v1477 = vpack.c.b16 %v1265, %v1264
  %v1478 = vpack.c.b16 %v1267, %v1266
  %v1479 = vpack.c.b16 %v1269, %v1268
  %v1480 = vpack.c.b16 %v1271, %v1270
  %v1481 = vpack.c.b16 %v1273, %v1272
  %v1482 = vpack.c.b16 %v1275, %v1274
  %v1483 = vpack.c.b16 %v1277, %v1276
  %v1484 = vpack.c.b16 %v1279, %v1278
  %v1485 = vpack.c.b16 %v1281, %v1280
  %v1486 = vpack.c.b16 %v1283, %v1282
  %v1487 = vpack.c.b16 %v1285, %v1284
  %v1488 = vpack.c.b16 %v1287, %v1286
  %v1489 = vpack.c.b16 %v1289, %v1288
  %v1490 = vpack.c.b16 %v1291, %v1290
  %v1491 = vpack.c.b16 %v1293, %v1292
  %v1492 = vpack.c.b16 %v1295, %v1294
  %v1493 = vpack.c.b16 %v1297, %v1296
  %vm1690 = vcmask 523264
  %v1692 = vsel %vm1690, %v489, 0
  %1694 = vmatprep.subr.bf16.mxu0 0
  %1695 = vmatpush1.bf16.msra.mxu0 %v1298
  %1696 = vmatprep.subr.bf16.mxu0 0
  %1697 = vmatpush1.bf16.msra.mxu0 %v1299
  %1698 = vmatprep.subr.bf16.mxu0 0
  %1699 = vmatpush1.bf16.msra.mxu0 %v1300
  %1700 = vmatprep.subr.bf16.mxu0 0
  %1701 = vmatpush1.bf16.msra.mxu0 %v1301
  %1702 = vmatprep.subr.bf16.mxu0 0
  %1703 = vmatpush1.bf16.msra.mxu0 %v1302
  %1704 = vmatprep.subr.bf16.mxu0 0
  %1705 = vmatpush1.bf16.msra.mxu0 %v1303
  %1706 = vmatprep.subr.bf16.mxu0 0
  %1707 = vmatpush1.bf16.msra.mxu0 %v1304
  %1708 = vmatprep.subr.bf16.mxu0 0
  %1709 = vmatpush1.bf16.msra.mxu0 %v1305
  %1710 = vmatprep.subr.bf16.mxu0 0
  %1711 = vmatpush1.bf16.msra.mxu0 %v1306
  %1712 = vmatprep.subr.bf16.mxu0 0
  %1713 = vmatpush1.bf16.msra.mxu0 %v1307
  %1714 = vmatprep.subr.bf16.mxu0 0
  %1715 = vmatpush1.bf16.msra.mxu0 %v1308
  %1716 = vmatprep.subr.bf16.mxu0 0
  %1717 = vmatpush1.bf16.msra.mxu0 %v1309
  %1718 = vmatprep.subr.bf16.mxu0 0
  %1719 = vmatpush1.bf16.msra.mxu0 %v1310
  %1720 = vmatprep.subr.bf16.mxu0 0
  %1721 = vmatpush1.bf16.msra.mxu0 %v1311
  %1722 = vmatprep.subr.bf16.mxu0 0
  %1723 = vmatpush1.bf16.msra.mxu0 %v1312
  %1724 = vmatprep.subr.bf16.mxu0 0
  %1725 = vmatpush1.bf16.msra.mxu0 %v1313
  %1726 = vmatprep.mubr.bf16.mxu0 %v466
  %1727 = vmatmul.mubr.bf16.gmra.mrb[0].mxu0 %v465
  %v1728 = vpop.f32.mrb[0].mxu0
  %v1729 = vadd.f32 %v425, %v1728
  %v1730 = vpop.f32.mrb[0].mxu0
  %v1731 = vpop.f32.mrb[0].mxu0
  %v1732 = vpop.f32.mrb[0].mxu0
  %1733 = vdwg.mxu0
  %1734 = vmatprep.subr.bf16.mxu0 0
  %1735 = vmatpush1.bf16.msra.mxu0 %v1314
  %1736 = vmatprep.subr.bf16.mxu0 0
  %1737 = vmatpush1.bf16.msra.mxu0 %v1315
  %1738 = vmatprep.subr.bf16.mxu0 0
  %1739 = vmatpush1.bf16.msra.mxu0 %v1316
  %1740 = vmatprep.subr.bf16.mxu0 0
  %1741 = vmatpush1.bf16.msra.mxu0 %v1317
  %1742 = vmatprep.subr.bf16.mxu0 0
  %1743 = vmatpush1.bf16.msra.mxu0 %v1318
  %1744 = vmatprep.subr.bf16.mxu0 0
  %1745 = vmatpush1.bf16.msra.mxu0 %v1319
  %1746 = vmatprep.subr.bf16.mxu0 0
  %1747 = vmatpush1.bf16.msra.mxu0 %v1320
  %1748 = vmatprep.subr.bf16.mxu0 0
  %1749 = vmatpush1.bf16.msra.mxu0 %v1321
  %1750 = vmatprep.subr.bf16.mxu0 0
  %1751 = vmatpush1.bf16.msra.mxu0 %v1322
  %1752 = vmatprep.subr.bf16.mxu0 0
  %1753 = vmatpush1.bf16.msra.mxu0 %v1323
  %1754 = vmatprep.subr.bf16.mxu0 0
  %1755 = vmatpush1.bf16.msra.mxu0 %v1324
  %1756 = vmatprep.subr.bf16.mxu0 0
  %1757 = vmatpush1.bf16.msra.mxu0 %v1325
  %1758 = vmatprep.subr.bf16.mxu0 0
  %1759 = vmatpush1.bf16.msra.mxu0 %v1326
  %1760 = vmatprep.subr.bf16.mxu0 0
  %1761 = vmatpush1.bf16.msra.mxu0 %v1327
  %1762 = vmatprep.subr.bf16.mxu0 0
  %1763 = vmatpush1.bf16.msra.mxu0 %v1328
  %1764 = vmatprep.subr.bf16.mxu0 0
  %1765 = vmatpush1.bf16.msra.mxu0 %v1329
  %1766 = vmatprep.mubr.bf16.mxu0 %v468
  %1767 = vmatmul.mubr.bf16.gmra.mrb[0].mxu0 %v467
  %v1768 = vpop.f32.mrb[0].mxu0
  %v1769 = vadd.f32 %v1729, %v1768
  %v1770 = vpop.f32.mrb[0].mxu0
  %v1771 = vpop.f32.mrb[0].mxu0
  %v1772 = vpop.f32.mrb[0].mxu0
  %1773 = vdwg.mxu0
  %1774 = vmatprep.subr.bf16.mxu0 0
  %1775 = vmatpush1.bf16.msra.mxu0 %v1330
  %1776 = vmatprep.subr.bf16.mxu0 0
  %1777 = vmatpush1.bf16.msra.mxu0 %v1331
  %1778 = vmatprep.subr.bf16.mxu0 0
  %1779 = vmatpush1.bf16.msra.mxu0 %v1332
  %1780 = vmatprep.subr.bf16.mxu0 0
  %1781 = vmatpush1.bf16.msra.mxu0 %v1333
  %1782 = vmatprep.subr.bf16.mxu0 0
  %1783 = vmatpush1.bf16.msra.mxu0 %v1334
  %1784 = vmatprep.subr.bf16.mxu0 0
  %1785 = vmatpush1.bf16.msra.mxu0 %v1335
  %1786 = vmatprep.subr.bf16.mxu0 0
  %1787 = vmatpush1.bf16.msra.mxu0 %v1336
  %1788 = vmatprep.subr.bf16.mxu0 0
  %1789 = vmatpush1.bf16.msra.mxu0 %v1337
  %1790 = vmatprep.subr.bf16.mxu0 0
  %1791 = vmatpush1.bf16.msra.mxu0 %v1338
  %1792 = vmatprep.subr.bf16.mxu0 0
  %1793 = vmatpush1.bf16.msra.mxu0 %v1339
  %1794 = vmatprep.subr.bf16.mxu0 0
  %1795 = vmatpush1.bf16.msra.mxu0 %v1340
  %1796 = vmatprep.subr.bf16.mxu0 0
  %1797 = vmatpush1.bf16.msra.mxu0 %v1341
  %1798 = vmatprep.subr.bf16.mxu0 0
  %1799 = vmatpush1.bf16.msra.mxu0 %v1342
  %1800 = vmatprep.subr.bf16.mxu0 0
  %1801 = vmatpush1.bf16.msra.mxu0 %v1343
  %1802 = vmatprep.subr.bf16.mxu0 0
  %1803 = vmatpush1.bf16.msra.mxu0 %v1344
  %1804 = vmatprep.subr.bf16.mxu0 0
  %1805 = vmatpush1.bf16.msra.mxu0 %v1345
  %1806 = vmatprep.mubr.bf16.mxu0 %v470
  %1807 = vmatmul.mubr.bf16.gmra.mrb[0].mxu0 %v469
  %v1808 = vpop.f32.mrb[0].mxu0
  %v1809 = vadd.f32 %v1769, %v1808
  %v1810 = vpop.f32.mrb[0].mxu0
  %v1811 = vpop.f32.mrb[0].mxu0
  %v1812 = vpop.f32.mrb[0].mxu0
  %1813 = vdwg.mxu0
  %1814 = vmatprep.subr.bf16.mxu0 0
  %1815 = vmatpush1.bf16.msra.mxu0 %v1346
  %1816 = vmatprep.subr.bf16.mxu0 0
  %1817 = vmatpush1.bf16.msra.mxu0 %v1347
  %1818 = vmatprep.subr.bf16.mxu0 0
  %1819 = vmatpush1.bf16.msra.mxu0 %v1348
  %1820 = vmatprep.subr.bf16.mxu0 0
  %1821 = vmatpush1.bf16.msra.mxu0 %v1349
  %1822 = vmatprep.subr.bf16.mxu0 0
  %1823 = vmatpush1.bf16.msra.mxu0 %v1350
  %1824 = vmatprep.subr.bf16.mxu0 0
  %1825 = vmatpush1.bf16.msra.mxu0 %v1351
  %1826 = vmatprep.subr.bf16.mxu0 0
  %1827 = vmatpush1.bf16.msra.mxu0 %v1352
  %1828 = vmatprep.subr.bf16.mxu0 0
  %1829 = vmatpush1.bf16.msra.mxu0 %v1353
  %1830 = vmatprep.subr.bf16.mxu0 0
  %1831 = vmatpush1.bf16.msra.mxu0 %v1354
  %1832 = vmatprep.subr.bf16.mxu0 0
  %1833 = vmatpush1.bf16.msra.mxu0 %v1355
  %1834 = vmatprep.subr.bf16.mxu0 0
  %1835 = vmatpush1.bf16.msra.mxu0 %v1356
  %1836 = vmatprep.subr.bf16.mxu0 0
  %1837 = vmatpush1.bf16.msra.mxu0 %v1357
  %1838 = vmatprep.subr.bf16.mxu0 0
  %1839 = vmatpush1.bf16.msra.mxu0 %v1358
  %1840 = vmatprep.subr.bf16.mxu0 0
  %1841 = vmatpush1.bf16.msra.mxu0 %v1359
  %1842 = vmatprep.subr.bf16.mxu0 0
  %1843 = vmatpush1.bf16.msra.mxu0 %v1360
  %1844 = vmatprep.subr.bf16.mxu0 0
  %1845 = vmatpush1.bf16.msra.mxu0 %v1361
  %1846 = vmatprep.mubr.bf16.mxu0 %v472
  %1847 = vmatmul.mubr.bf16.gmra.mrb[0].mxu0 %v471
  %v1848 = vpop.f32.mrb[0].mxu0
  %v1849 = vadd.f32 %v1809, %v1848
  %v1850 = vpop.f32.mrb[0].mxu0
  %v1851 = vpop.f32.mrb[0].mxu0
  %v1852 = vpop.f32.mrb[0].mxu0
  %1853 = vdwg.mxu0
  %1854 = vmatprep.subr.bf16.mxu0 0
  %1855 = vmatpush1.bf16.msra.mxu0 %v1362
  %1856 = vmatprep.subr.bf16.mxu0 0
  %1857 = vmatpush1.bf16.msra.mxu0 %v1363
  %1858 = vmatprep.subr.bf16.mxu0 0
  %1859 = vmatpush1.bf16.msra.mxu0 %v1364
  %1860 = vmatprep.subr.bf16.mxu0 0
  %1861 = vmatpush1.bf16.msra.mxu0 %v1365
  %1862 = vmatprep.subr.bf16.mxu0 0
  %1863 = vmatpush1.bf16.msra.mxu0 %v1366
  %1864 = vmatprep.subr.bf16.mxu0 0
  %1865 = vmatpush1.bf16.msra.mxu0 %v1367
  %1866 = vmatprep.subr.bf16.mxu0 0
  %1867 = vmatpush1.bf16.msra.mxu0 %v1368
  %1868 = vmatprep.subr.bf16.mxu0 0
  %1869 = vmatpush1.bf16.msra.mxu0 %v1369
  %1870 = vmatprep.subr.bf16.mxu0 0
  %1871 = vmatpush1.bf16.msra.mxu0 %v1370
  %1872 = vmatprep.subr.bf16.mxu0 0
  %1873 = vmatpush1.bf16.msra.mxu0 %v1371
  %1874 = vmatprep.subr.bf16.mxu0 0
  %1875 = vmatpush1.bf16.msra.mxu0 %v1372
  %1876 = vmatprep.subr.bf16.mxu0 0
  %1877 = vmatpush1.bf16.msra.mxu0 %v1373
  %1878 = vmatprep.subr.bf16.mxu0 0
  %1879 = vmatpush1.bf16.msra.mxu0 %v1374
  %1880 = vmatprep.subr.bf16.mxu0 0
  %1881 = vmatpush1.bf16.msra.mxu0 %v1375
  %1882 = vmatprep.subr.bf16.mxu0 0
  %1883 = vmatpush1.bf16.msra.mxu0 %v1376
  %1884 = vmatprep.subr.bf16.mxu0 0
  %1885 = vmatpush1.bf16.msra.mxu0 %v1377
  %1886 = vmatprep.mubr.bf16.mxu0 %v474
  %1887 = vmatmul.mubr.bf16.gmra.mrb[0].mxu0 %v473
  %v1888 = vpop.f32.mrb[0].mxu0
  %v1889 = vadd.f32 %v1849, %v1888
  %v1890 = vpop.f32.mrb[0].mxu0
  %v1891 = vpop.f32.mrb[0].mxu0
  %v1892 = vpop.f32.mrb[0].mxu0
  %1893 = vdwg.mxu0
  %1894 = vmatprep.subr.bf16.mxu0 0
  %1895 = vmatpush1.bf16.msra.mxu0 %v1378
  %1896 = vmatprep.subr.bf16.mxu0 0
  %1897 = vmatpush1.bf16.msra.mxu0 %v1379
  %1898 = vmatprep.subr.bf16.mxu0 0
  %1899 = vmatpush1.bf16.msra.mxu0 %v1380
  %1900 = vmatprep.subr.bf16.mxu0 0
  %1901 = vmatpush1.bf16.msra.mxu0 %v1381
  %1902 = vmatprep.subr.bf16.mxu0 0
  %1903 = vmatpush1.bf16.msra.mxu0 %v1382
  %1904 = vmatprep.subr.bf16.mxu0 0
  %1905 = vmatpush1.bf16.msra.mxu0 %v1383
  %1906 = vmatprep.subr.bf16.mxu0 0
  %1907 = vmatpush1.bf16.msra.mxu0 %v1384
  %1908 = vmatprep.subr.bf16.mxu0 0
  %1909 = vmatpush1.bf16.msra.mxu0 %v1385
  %1910 = vmatprep.subr.bf16.mxu0 0
  %1911 = vmatpush1.bf16.msra.mxu0 %v1386
  %1912 = vmatprep.subr.bf16.mxu0 0
  %1913 = vmatpush1.bf16.msra.mxu0 %v1387
  %1914 = vmatprep.subr.bf16.mxu0 0
  %1915 = vmatpush1.bf16.msra.mxu0 %v1388
  %1916 = vmatprep.subr.bf16.mxu0 0
  %1917 = vmatpush1.bf16.msra.mxu0 %v1389
  %1918 = vmatprep.subr.bf16.mxu0 0
  %1919 = vmatpush1.bf16.msra.mxu0 %v1390
  %1920 = vmatprep.subr.bf16.mxu0 0
  %1921 = vmatpush1.bf16.msra.mxu0 %v1391
  %1922 = vmatprep.subr.bf16.mxu0 0
  %1923 = vmatpush1.bf16.msra.mxu0 %v1392
  %1924 = vmatprep.subr.bf16.mxu0 0
  %1925 = vmatpush1.bf16.msra.mxu0 %v1393
  %1926 = vmatprep.mubr.bf16.mxu0 %v476
  %1927 = vmatmul.mubr.bf16.gmra.mrb[0].mxu0 %v475
  %v1928 = vpop.f32.mrb[0].mxu0
  %v1929 = vadd.f32 %v1889, %v1928
  %v1930 = vpop.f32.mrb[0].mxu0
  %v1931 = vpop.f32.mrb[0].mxu0
  %v1932 = vpop.f32.mrb[0].mxu0
  %1933 = vdwg.mxu0
  %1934 = vmatprep.subr.bf16.mxu0 0
  %1935 = vmatpush1.bf16.msra.mxu0 %v1394
  %1936 = vmatprep.subr.bf16.mxu0 0
  %1937 = vmatpush1.bf16.msra.mxu0 %v1395
  %1938 = vmatprep.subr.bf16.mxu0 0
  %1939 = vmatpush1.bf16.msra.mxu0 %v1396
  %1940 = vmatprep.subr.bf16.mxu0 0
  %1941 = vmatpush1.bf16.msra.mxu0 %v1397
  %1942 = vmatprep.subr.bf16.mxu0 0
  %1943 = vmatpush1.bf16.msra.mxu0 %v1398
  %1944 = vmatprep.subr.bf16.mxu0 0
  %1945 = vmatpush1.bf16.msra.mxu0 %v1399
  %1946 = vmatprep.subr.bf16.mxu0 0
  %1947 = vmatpush1.bf16.msra.mxu0 %v1400
  %1948 = vmatprep.subr.bf16.mxu0 0
  %1949 = vmatpush1.bf16.msra.mxu0 %v1401
  %1950 = vmatprep.subr.bf16.mxu0 0
  %1951 = vmatpush1.bf16.msra.mxu0 %v1402
  %1952 = vmatprep.subr.bf16.mxu0 0
  %1953 = vmatpush1.bf16.msra.mxu0 %v1403
  %1954 = vmatprep.subr.bf16.mxu0 0
  %1955 = vmatpush1.bf16.msra.mxu0 %v1404
  %1956 = vmatprep.subr.bf16.mxu0 0
  %1957 = vmatpush1.bf16.msra.mxu0 %v1405
  %1958 = vmatprep.subr.bf16.mxu0 0
  %1959 = vmatpush1.bf16.msra.mxu0 %v1406
  %1960 = vmatprep.subr.bf16.mxu0 0
  %1961 = vmatpush1.bf16.msra.mxu0 %v1407
  %1962 = vmatprep.subr.bf16.mxu0 0
  %1963 = vmatpush1.bf16.msra.mxu0 %v1408
  %1964 = vmatprep.subr.bf16.mxu0 0
  %1965 = vmatpush1.bf16.msra.mxu0 %v1409
  %1966 = vmatprep.mubr.bf16.mxu0 %v478
  %1967 = vmatmul.mubr.bf16.gmra.mrb[0].mxu0 %v477
  %v1968 = vpop.f32.mrb[0].mxu0
  %v1969 = vadd.f32 %v1929, %v1968
  %v1970 = vpop.f32.mrb[0].mxu0
  %v1971 = vpop.f32.mrb[0].mxu0
  %v1972 = vpop.f32.mrb[0].mxu0
  %1973 = vdwg.mxu0
  %1974 = vmatprep.subr.bf16.mxu0 0
  %1975 = vmatpush1.bf16.msra.mxu0 %v1410
  %1976 = vmatprep.subr.bf16.mxu0 0
  %1977 = vmatpush1.bf16.msra.mxu0 %v1411
  %1978 = vmatprep.subr.bf16.mxu0 0
  %1979 = vmatpush1.bf16.msra.mxu0 %v1412
  %1980 = vmatprep.subr.bf16.mxu0 0
  %1981 = vmatpush1.bf16.msra.mxu0 %v1413
  %1982 = vmatprep.subr.bf16.mxu0 0
  %1983 = vmatpush1.bf16.msra.mxu0 %v1414
  %1984 = vmatprep.subr.bf16.mxu0 0
  %1985 = vmatpush1.bf16.msra.mxu0 %v1415
  %1986 = vmatprep.subr.bf16.mxu0 0
  %1987 = vmatpush1.bf16.msra.mxu0 %v1416
  %1988 = vmatprep.subr.bf16.mxu0 0
  %1989 = vmatpush1.bf16.msra.mxu0 %v1417
  %1990 = vmatprep.subr.bf16.mxu0 0
  %1991 = vmatpush1.bf16.msra.mxu0 %v1418
  %1992 = vmatprep.subr.bf16.mxu0 0
  %1993 = vmatpush1.bf16.msra.mxu0 %v1419
  %1994 = vmatprep.subr.bf16.mxu0 0
  %1995 = vmatpush1.bf16.msra.mxu0 %v1420
  %1996 = vmatprep.subr.bf16.mxu0 0
  %1997 = vmatpush1.bf16.msra.mxu0 %v1421
  %1998 = vmatprep.subr.bf16.mxu0 0
  %1999 = vmatpush1.bf16.msra.mxu0 %v1422
  %2000 = vmatprep.subr.bf16.mxu0 0
  %2001 = vmatpush1.bf16.msra.mxu0 %v1423
  %2002 = vmatprep.subr.bf16.mxu0 0
  %2003 = vmatpush1.bf16.msra.mxu0 %v1424
  %2004 = vmatprep.subr.bf16.mxu0 0
  %2005 = vmatpush1.bf16.msra.mxu0 %v1425
  %2006 = vmatprep.mubr.bf16.mxu0 %v480
  %2007 = vmatmul.mubr.bf16.gmra.mrb[0].mxu0 %v479
  %v2008 = vpop.f32.mrb[0].mxu0
  %v2009 = vadd.f32 %v1969, %v2008
  %v2010 = vpop.f32.mrb[0].mxu0
  %v2011 = vpop.f32.mrb[0].mxu0
  %v2012 = vpop.f32.mrb[0].mxu0
  %2013 = vdwg.mxu0
  %2014 = vmatprep.subr.bf16.mxu0 0
  %2015 = vmatpush1.bf16.msra.mxu0 %v1426
  %2016 = vmatprep.subr.bf16.mxu0 0
  %2017 = vmatpush1.bf16.msra.mxu0 %v1427
  %2018 = vmatprep.subr.bf16.mxu0 0
  %2019 = vmatpush1.bf16.msra.mxu0 %v1428
  %2020 = vmatprep.subr.bf16.mxu0 0
  %2021 = vmatpush1.bf16.msra.mxu0 %v1429
  %2022 = vmatprep.subr.bf16.mxu0 0
  %2023 = vmatpush1.bf16.msra.mxu0 %v1430
  %2024 = vmatprep.subr.bf16.mxu0 0
  %2025 = vmatpush1.bf16.msra.mxu0 %v1431
  %2026 = vmatprep.subr.bf16.mxu0 0
  %2027 = vmatpush1.bf16.msra.mxu0 %v1432
  %2028 = vmatprep.subr.bf16.mxu0 0
  %2029 = vmatpush1.bf16.msra.mxu0 %v1433
  %2030 = vmatprep.subr.bf16.mxu0 0
  %2031 = vmatpush1.bf16.msra.mxu0 %v1434
  %2032 = vmatprep.subr.bf16.mxu0 0
  %2033 = vmatpush1.bf16.msra.mxu0 %v1435
  %2034 = vmatprep.subr.bf16.mxu0 0
  %2035 = vmatpush1.bf16.msra.mxu0 %v1436
  %2036 = vmatprep.subr.bf16.mxu0 0
  %2037 = vmatpush1.bf16.msra.mxu0 %v1437
  %2038 = vmatprep.subr.bf16.mxu0 0
  %2039 = vmatpush1.bf16.msra.mxu0 %v1438
  %2040 = vmatprep.subr.bf16.mxu0 0
  %2041 = vmatpush1.bf16.msra.mxu0 %v1439
  %2042 = vmatprep.subr.bf16.mxu0 0
  %2043 = vmatpush1.bf16.msra.mxu0 %v1440
  %2044 = vmatprep.subr.bf16.mxu0 0
  %2045 = vmatpush1.bf16.msra.mxu0 %v1441
  %2046 = vmatprep.mubr.bf16.mxu0 %v482
  %2047 = vmatmul.mubr.bf16.gmra.mrb[0].mxu0 %v481
  %v2048 = vpop.f32.mrb[0].mxu0
  %v2049 = vadd.f32 %v2009, %v2048
  %v2050 = vpop.f32.mrb[0].mxu0
  %v2051 = vpop.f32.mrb[0].mxu0
  %v2052 = vpop.f32.mrb[0].mxu0
  %2053 = vdwg.mxu0
  %2054 = vmatprep.subr.bf16.mxu0 0
  %2055 = vmatpush1.bf16.msra.mxu0 %v1442
  %2056 = vmatprep.subr.bf16.mxu0 0
  %2057 = vmatpush1.bf16.msra.mxu0 %v1443
  %2058 = vmatprep.subr.bf16.mxu0 0
  %2059 = vmatpush1.bf16.msra.mxu0 %v1444
  %2060 = vmatprep.subr.bf16.mxu0 0
  %2061 = vmatpush1.bf16.msra.mxu0 %v1445
  %2062 = vmatprep.subr.bf16.mxu0 0
  %2063 = vmatpush1.bf16.msra.mxu0 %v1446
  %2064 = vmatprep.subr.bf16.mxu0 0
  %2065 = vmatpush1.bf16.msra.mxu0 %v1447
  %2066 = vmatprep.subr.bf16.mxu0 0
  %2067 = vmatpush1.bf16.msra.mxu0 %v1448
  %2068 = vmatprep.subr.bf16.mxu0 0
  %2069 = vmatpush1.bf16.msra.mxu0 %v1449
  %2070 = vmatprep.subr.bf16.mxu0 0
  %2071 = vmatpush1.bf16.msra.mxu0 %v1450
  %2072 = vmatprep.subr.bf16.mxu0 0
  %2073 = vmatpush1.bf16.msra.mxu0 %v1451
  %2074 = vmatprep.subr.bf16.mxu0 0
  %2075 = vmatpush1.bf16.msra.mxu0 %v1452
  %2076 = vmatprep.subr.bf16.mxu0 0
  %2077 = vmatpush1.bf16.msra.mxu0 %v1453
  %2078 = vmatprep.subr.bf16.mxu0 0
  %2079 = vmatpush1.bf16.msra.mxu0 %v1454
  %2080 = vmatprep.subr.bf16.mxu0 0
  %2081 = vmatpush1.bf16.msra.mxu0 %v1455
  %2082 = vmatprep.subr.bf16.mxu0 0
  %2083 = vmatpush1.bf16.msra.mxu0 %v1456
  %2084 = vmatprep.subr.bf16.mxu0 0
  %2085 = vmatpush1.bf16.msra.mxu0 %v1457
  %2086 = vmatprep.mubr.bf16.mxu0 %v484
  %2087 = vmatmul.mubr.bf16.gmra.mrb[0].mxu0 %v483
  %v2088 = vpop.f32.mrb[0].mxu0
  %v2089 = vadd.f32 %v2049, %v2088
  %v2090 = vpop.f32.mrb[0].mxu0
  %v2091 = vpop.f32.mrb[0].mxu0
  %v2092 = vpop.f32.mrb[0].mxu0
  %2093 = vdwg.mxu0
  %2094 = vmatprep.subr.bf16.mxu0 0
  %2095 = vmatpush1.bf16.msra.mxu0 %v1458
  %2096 = vmatprep.subr.bf16.mxu0 0
  %2097 = vmatpush1.bf16.msra.mxu0 %v1459
  %2098 = vmatprep.subr.bf16.mxu0 0
  %2099 = vmatpush1.bf16.msra.mxu0 %v1460
  %2100 = vmatprep.subr.bf16.mxu0 0
  %2101 = vmatpush1.bf16.msra.mxu0 %v1461
  %2102 = vmatprep.subr.bf16.mxu0 0
  %2103 = vmatpush1.bf16.msra.mxu0 %v1462
  %2104 = vmatprep.subr.bf16.mxu0 0
  %2105 = vmatpush1.bf16.msra.mxu0 %v1463
  %2106 = vmatprep.subr.bf16.mxu0 0
  %2107 = vmatpush1.bf16.msra.mxu0 %v1464
  %2108 = vmatprep.subr.bf16.mxu0 0
  %2109 = vmatpush1.bf16.msra.mxu0 %v1465
  %2110 = vmatprep.subr.bf16.mxu0 0
  %2111 = vmatpush1.bf16.msra.mxu0 %v1466
  %2112 = vmatprep.subr.bf16.mxu0 0
  %2113 = vmatpush1.bf16.msra.mxu0 %v1467
  %2114 = vmatprep.subr.bf16.mxu0 0
  %2115 = vmatpush1.bf16.msra.mxu0 %v1468
  %2116 = vmatprep.subr.bf16.mxu0 0
  %2117 = vmatpush1.bf16.msra.mxu0 %v1469
  %2118 = vmatprep.subr.bf16.mxu0 0
  %2119 = vmatpush1.bf16.msra.mxu0 %v1470
  %2120 = vmatprep.subr.bf16.mxu0 0
  %2121 = vmatpush1.bf16.msra.mxu0 %v1471
  %2122 = vmatprep.subr.bf16.mxu0 0
  %2123 = vmatpush1.bf16.msra.mxu0 %v1472
  %2124 = vmatprep.subr.bf16.mxu0 0
  %2125 = vmatpush1.bf16.msra.mxu0 %v1473
  %2126 = vmatprep.mubr.bf16.mxu0 %v486
  %2127 = vmatmul.mubr.bf16.gmra.mrb[0].mxu0 %v485
  %v2128 = vpop.f32.mrb[0].mxu0
  %v2129 = vadd.f32 %v2089, %v2128
  %v2130 = vpop.f32.mrb[0].mxu0
  %v2131 = vpop.f32.mrb[0].mxu0
  %v2132 = vpop.f32.mrb[0].mxu0
  %2133 = vdwg.mxu0
  %2134 = vmatprep.subr.bf16.mxu0 0
  %2135 = vmatpush1.bf16.msra.mxu0 %v1474
  %2136 = vmatprep.subr.bf16.mxu0 0
  %2137 = vmatpush1.bf16.msra.mxu0 %v1475
  %2138 = vmatprep.subr.bf16.mxu0 0
  %2139 = vmatpush1.bf16.msra.mxu0 %v1476
  %2140 = vmatprep.subr.bf16.mxu0 0
  %2141 = vmatpush1.bf16.msra.mxu0 %v1477
  %2142 = vmatprep.subr.bf16.mxu0 0
  %2143 = vmatpush1.bf16.msra.mxu0 %v1478
  %2144 = vmatprep.subr.bf16.mxu0 0
  %2145 = vmatpush1.bf16.msra.mxu0 %v1479
  %2146 = vmatprep.subr.bf16.mxu0 0
  %2147 = vmatpush1.bf16.msra.mxu0 %v1480
  %2148 = vmatprep.subr.bf16.mxu0 0
  %2149 = vmatpush1.bf16.msra.mxu0 %v1481
  %2150 = vmatprep.subr.bf16.mxu0 0
  %2151 = vmatpush1.bf16.msra.mxu0 %v1482
  %2152 = vmatprep.subr.bf16.mxu0 0
  %2153 = vmatpush1.bf16.msra.mxu0 %v1483
  %2154 = vmatprep.subr.bf16.mxu0 0
  %2155 = vmatpush1.bf16.msra.mxu0 %v1484
  %2156 = vmatprep.subr.bf16.mxu0 0
  %2157 = vmatpush1.bf16.msra.mxu0 %v1485
  %2158 = vmatprep.subr.bf16.mxu0 0
  %2159 = vmatpush1.bf16.msra.mxu0 %v1486
  %2160 = vmatprep.subr.bf16.mxu0 0
  %2161 = vmatpush1.bf16.msra.mxu0 %v1487
  %2162 = vmatprep.subr.bf16.mxu0 0
  %2163 = vmatpush1.bf16.msra.mxu0 %v1488
  %2164 = vmatprep.subr.bf16.mxu0 0
  %2165 = vmatpush1.bf16.msra.mxu0 %v1489
  %2166 = vmatprep.mubr.bf16.mxu0 %v488
  %2167 = vmatmul.mubr.bf16.gmra.mrb[0].mxu0 %v487
  %v2168 = vpop.f32.mrb[0].mxu0
  %v2169 = vadd.f32 %v2129, %v2168
  %v2170 = vpop.f32.mrb[0].mxu0
  %v2171 = vpop.f32.mrb[0].mxu0
  %v2172 = vpop.f32.mrb[0].mxu0
  %2173 = vdwg.mxu0
  %2174 = vmatprep.subr.bf16.mxu0 0
  %2175 = vmatpush1.bf16.msra.mxu0 %v1490
  %2176 = vmatprep.subr.bf16.mxu0 0
  %2177 = vmatpush1.bf16.msra.mxu0 %v1491
  %2178 = vmatprep.subr.bf16.mxu0 0
  %2179 = vmatpush1.bf16.msra.mxu0 %v1492
  %2180 = vmatprep.subr.bf16.mxu0 0
  %2181 = vmatpush1.bf16.msra.mxu0 %v1493
  %2182 = vmatprep.subr.bf16.mxu0 0
  %2183 = vmatpush1.bf16.msra.mxu0 0
  %2184 = vmatprep.subr.bf16.mxu0 0
  %2185 = vmatpush1.bf16.msra.mxu0 0
  %2186 = vmatprep.subr.bf16.mxu0 0
  %2187 = vmatpush1.bf16.msra.mxu0 0
  %2188 = vmatprep.subr.bf16.mxu0 0
  %2189 = vmatpush1.bf16.msra.mxu0 0
  %2190 = vmatprep.subr.bf16.mxu0 0
  %2191 = vmatpush1.bf16.msra.mxu0 0
  %2192 = vmatprep.subr.bf16.mxu0 0
  %2193 = vmatpush1.bf16.msra.mxu0 0
  %2194 = vmatprep.subr.bf16.mxu0 0
  %2195 = vmatpush1.bf16.msra.mxu0 0
  %2196 = vmatprep.subr.bf16.mxu0 0
  %2197 = vmatpush1.bf16.msra.mxu0 0
  %2198 = vmatprep.subr.bf16.mxu0 0
  %2199 = vmatpush1.bf16.msra.mxu0 0
  %2200 = vmatprep.subr.bf16.mxu0 0
  %2201 = vmatpush1.bf16.msra.mxu0 0
  %2202 = vmatprep.subr.bf16.mxu0 0
  %2203 = vmatpush1.bf16.msra.mxu0 0
  %2204 = vmatprep.subr.bf16.mxu0 0
  %2205 = vmatpush1.bf16.msra.mxu0 0
  %2206 = vmatprep.mubr.bf16.mxu0 0
  %2207 = vmatmul.mubr.bf16.gmra.mrb[0].mxu0 %v1692
  %v2208 = vpop.f32.mrb[0].mxu0
  %v2209 = vadd.f32 %v2169, %v2208
  %v2210 = vpop.f32.mrb[0].mxu0
  %v2211 = vpop.f32.mrb[0].mxu0
  %v2212 = vpop.f32.mrb[0].mxu0
  %2213 = vdwg.mxu0
  %v2214 = vmax.f32 %v2209, 0.0
  %2215 = vst.msk [vmem:[%s3] sm:$0xff] %vm1690, %v2214
  // Predicated region
  $region14: #{gdnet_forward.18} parent=0 // pred_check
    _
  $region15: #{gdnet_forward.18} parent=0 // pred_check_branch
    %2217 = sbr.rel (0) target = $region17
  $region16: #{gdnet_forward.18} parent=0 // pred_region
    _
  $region17: #{gdnet_forward.18} parent=0 // pred_fallthru
    _
  // Predicated region
  $region18: #{gdnet_forward.18} parent=0 // pred_check
    _
  $region19: #{gdnet_forward.18} parent=0 // pred_check_branch
    %2219 = sbr.rel (0) target = $region21
  $region20: #{gdnet_forward.18} parent=0 // pred_region
    _
  $region21: #{gdnet_forward.18} parent=0 // pred_fallthru
    _

// kernel: gdnet_forward.20
$region0: #{gdnet_forward.20}
  #allocation0 [shape = 'u32[]', space=smem, size = 0x4, offset = 0x4, fixed_abs, tag = 'smem constant byte address 0x4 - core index']
  #allocation1 [shape = 'u32[144,128]{1,0:T(1,128)}', space=vmem, size = 0x12000, scoped, tag = 'internal scratch']
  %s0 = inlined_call_operand.vmem [shape: bf16[8,64], index: 0, kind: input, shape index: {}]
  %s1 = inlined_call_operand.vmem [shape: bf16[64,64], index: 1, kind: input, shape index: {}]
  %s2 = inlined_call_operand.vmem [shape: f32[1,64], index: 2, kind: input, shape index: {}]
  %s3 = inlined_call_operand.vmem [shape: f32[8,64], index: 3, kind: output, shape index: {}]
  %s4 = sld [smem:[#allocation0]]
  $region22: #{gdnet_forward.20} parent=0
    _
  %s6 = ssub.s32 1, %s4
  %s7 = scalar_select 0, %s6, %s4
  // Predicated region
  $region2: #{gdnet_forward.20} parent=0 // pred_check
    _
  $region3: #{gdnet_forward.20} parent=0 // pred_check_branch
    %9 = sbr.rel (0) target = $region5
  $region4: #{gdnet_forward.20} parent=0 // pred_region
    _
  $region5: #{gdnet_forward.20} parent=0 // pred_fallthru
    _
  // Predicated region
  $region6: #{gdnet_forward.20} parent=0 // pred_check
    _
  $region7: #{gdnet_forward.20} parent=0 // pred_check_branch
    %11 = sbr.rel (0) target = $region9
  $region8: #{gdnet_forward.20} parent=0 // pred_region
    _
  $region9: #{gdnet_forward.20} parent=0 // pred_fallthru
    _
  // Predicated region
  $region10: #{gdnet_forward.20} parent=0 // pred_check
    _
  $region11: #{gdnet_forward.20} parent=0 // pred_check_branch
    %13 = sbr.rel (0) target = $region13
  $region12: #{gdnet_forward.20} parent=0 // pred_region
    _
  $region13: #{gdnet_forward.20} parent=0 // pred_fallthru
    _
  %v15 = vld [vmem:[%s0] sm:$0xf]
  %v16 = vld [vmem:[%s1] sm:$0xf]
  %v17 = vld [vmem:[%s1 + $0x4] sm:$0xf]
  %v18 = vld [vmem:[%s1 + $0x8] sm:$0xf]
  %v19 = vld [vmem:[%s1 + $0xc] sm:$0xf]
  %v20 = vld [vmem:[%s1 + $0x10] sm:$0xf]
  %v21 = vld [vmem:[%s1 + $0x14] sm:$0xf]
  %v22 = vld [vmem:[%s1 + $0x18] sm:$0xf]
  %v23 = vld [vmem:[%s1 + $0x1c] sm:$0xf]
  %v24 = vld [vmem:[%s2] sm:$0x1]
  %v26 = vlaneseq
  %v27 = vshrl.u32 %v26, 7
  %v28 = vsub.s32 0, %v27
  %v29 = vrot.slane %v24, %v28
  %v39 = vunpack.c.l.b16 %v16
  %v40 = vunpack.c.l.b16 %v17
  %v41 = vunpack.c.l.b16 %v18
  %v42 = vunpack.c.l.b16 %v19
  %v43 = vunpack.c.l.b16 %v20
  %v44 = vunpack.c.l.b16 %v21
  %v45 = vunpack.c.l.b16 %v22
  %v46 = vunpack.c.l.b16 %v23
  %v47 = vpack.c.b16 %v40, %v39
  %v48 = vpack.c.b16 %v42, %v41
  %v49 = vpack.c.b16 %v44, %v43
  %v50 = vpack.c.b16 %v46, %v45
  %vm55 = vcmask 523264
  %v57 = vsel %vm55, %v15, 0
  %59 = vmatprep.subr.bf16.mxu0 0
  %60 = vmatpush1.bf16.msra.mxu0 %v47
  %61 = vmatprep.subr.bf16.mxu0 0
  %62 = vmatpush1.bf16.msra.mxu0 %v48
  %63 = vmatprep.subr.bf16.mxu0 0
  %64 = vmatpush1.bf16.msra.mxu0 %v49
  %65 = vmatprep.subr.bf16.mxu0 0
  %66 = vmatpush1.bf16.msra.mxu0 %v50
  %67 = vmatprep.subr.bf16.mxu0 0
  %68 = vmatpush1.bf16.msra.mxu0 0
  %69 = vmatprep.subr.bf16.mxu0 0
  %70 = vmatpush1.bf16.msra.mxu0 0
  %71 = vmatprep.subr.bf16.mxu0 0
  %72 = vmatpush1.bf16.msra.mxu0 0
  %73 = vmatprep.subr.bf16.mxu0 0
  %74 = vmatpush1.bf16.msra.mxu0 0
  %75 = vmatprep.subr.bf16.mxu0 0
  %76 = vmatpush1.bf16.msra.mxu0 0
  %77 = vmatprep.subr.bf16.mxu0 0
  %78 = vmatpush1.bf16.msra.mxu0 0
  %79 = vmatprep.subr.bf16.mxu0 0
  %80 = vmatpush1.bf16.msra.mxu0 0
  %81 = vmatprep.subr.bf16.mxu0 0
  %82 = vmatpush1.bf16.msra.mxu0 0
  %83 = vmatprep.subr.bf16.mxu0 0
  %84 = vmatpush1.bf16.msra.mxu0 0
  %85 = vmatprep.subr.bf16.mxu0 0
  %86 = vmatpush1.bf16.msra.mxu0 0
  %87 = vmatprep.subr.bf16.mxu0 0
  %88 = vmatpush1.bf16.msra.mxu0 0
  %89 = vmatprep.subr.bf16.mxu0 0
  %90 = vmatpush1.bf16.msra.mxu0 0
  %91 = vmatprep.mubr.bf16.mxu0 0
  %92 = vmatmul.mubr.bf16.gmra.mrb[0].mxu0 %v57
  %v93 = vpop.f32.mrb[0].mxu0
  %v94 = vadd.f32 %v29, %v93
  %v95 = vpop.f32.mrb[0].mxu0
  %v96 = vpop.f32.mrb[0].mxu0
  %v97 = vpop.f32.mrb[0].mxu0
  %98 = vdwg.mxu0
  %v99 = vsub.f32 0.0, %v94
  %v100 = vmul.f32 %v99, 1.442695
  %v101 = vpow.pop %v100
  %v102 = vadd.f32 %v101, 1.0
  %v103 = vrcp.pop %v102
  %v104 = vmul.f32 1.0, %v103
  %105 = vst.msk [vmem:[%s3] sm:$0xff] %vm55, %v104
  // Predicated region
  $region14: #{gdnet_forward.20} parent=0 // pred_check
    _
  $region15: #{gdnet_forward.20} parent=0 // pred_check_branch
    %107 = sbr.rel (0) target = $region17
  $region16: #{gdnet_forward.20} parent=0 // pred_region
    _
  $region17: #{gdnet_forward.20} parent=0 // pred_fallthru
    _
  // Predicated region
  $region18: #{gdnet_forward.20} parent=0 // pred_check
    _
  $region19: #{gdnet_forward.20} parent=0 // pred_check_branch
    %109 = sbr.rel (0) target = $region21
  $region20: #{gdnet_forward.20} parent=0 // pred_region
    _
  $region21: #{gdnet_forward.20} parent=0 // pred_fallthru
    _

// kernel: tile.18
$region0: #{tile.18}
  #allocation0 [shape = 's32[1]{0}', space=sflag, size = 0x4, scoped, tag = 'scoped memory for tile.18']
  %s0 = inlined_call_operand.vmem [shape: f32[64], index: 0, kind: input, shape index: {}]
  %s1 = inlined_call_operand.vmem [shape: f32[16,64], index: 1, kind: output, shape index: {}]
  // Predicated region
  $region2: #{tile.18} parent=0 // pred_check
    _
  $region3: #{tile.18} parent=0 // pred_check_branch
    %3 = sbr.rel (0) target = $region5
  $region4: #{tile.18} parent=0 // pred_region
    _
  $region5: #{tile.18} parent=0 // pred_fallthru
    _
  %v4 = vld [vmem:[%s0] ss:$0 sm:$0xff]
  %5 = vst [vmem:[%s1] sm:$0xff] %v4
  %s6 = scalar_lea.vmem %s1, 8
  %7 = vst [vmem:[%s6] sm:$0xff] %v4

// kernel: tile.19
$region0: #{tile.19}
  %s0 = inlined_call_operand.vmem [shape: f32[16,64], index: 0, kind: input, shape index: {}]
  %s1 = inlined_call_operand.vmem [shape: f32[1,1024], index: 1, kind: output, shape index: {}]
  $region1: #{tile.19} parent=0
    #allocation0 [shape = 'u8[32768]{0}', space=vmem, size = 0x8000, scoped, tag = 'scoped mem for output reshape']
    %v2 = vld [vmem:[%s0] ss:$2 sm:$0xff]
    %vm3 = vcmask 523264
    %4 = vst.msk [vmem:[#allocation0] ss:$8 sm:$0xf] %vm3, %v2
    %5 = vst.msk [vmem:[#allocation0] ss:$8 sm:$0xf0] %vm3, %v2
    %s6 = scalar_lea.vmem %s0, 1
    %v7 = vld [vmem:[%s6] ss:$2 sm:$0xff]
    %8 = vrot.lane.b32.xlu0 %v7, 64
    %v9 = vpop.permute.xlu0 %8
    %vm10 = vcmask 1048064
    %11 = vst.msk [vmem:[#allocation0] ss:$8 sm:$0xf] %vm10, %v9
    %12 = vst.msk [vmem:[#allocation0] ss:$8 sm:$0xf0] %vm10, %v9
    %s14 = sshllo.u32 0, 1
    %v16 = vld [vmem:[#allocation0] sm:%s14]
    %s17 = sshllo.u32 0, 1
    %18 = vst [vmem:[%s1] sm:%s17] %v16
    %s19 = scalar_lea.vmem [#allocation0], 8
    %v20 = vld [vmem:[%s19] sm:%s14]
    %s21 = sshllo.u32 0, 1
    %s22 = scalar_lea.vmem %s1, 1
    %23 = vst [vmem:[%s22] sm:%s21] %v20
    %s24 = scalar_lea.vmem [#allocation0], 16
    %v25 = vld [vmem:[%s24] sm:%s14]
    %s26 = sshllo.u32 0, 1
    %s27 = smul.addr 1, 2
    %s28 = scalar_lea.vmem %s1, %s27
    %29 = vst [vmem:[%s28] sm:%s26] %v25
    %s30 = scalar_lea.vmem [#allocation0], 24
    %v31 = vld [vmem:[%s30] sm:%s14]
    %s32 = sshllo.u32 0, 1
    %s33 = smul.addr 1, 3
    %s34 = scalar_lea.vmem %s1, %s33
    %35 = vst [vmem:[%s34] sm:%s32] %v31
    %s36 = scalar_lea.vmem [#allocation0], 32
    %v37 = vld [vmem:[%s36] sm:%s14]
    %s38 = sshllo.u32 0, 1
    %s39 = smul.addr 1, 4
    %s40 = scalar_lea.vmem %s1, %s39
    %41 = vst [vmem:[%s40] sm:%s38] %v37
    %s42 = scalar_lea.vmem [#allocation0], 40
    %v43 = vld [vmem:[%s42] sm:%s14]
    %s44 = sshllo.u32 0, 1
    %s45 = smul.addr 1, 5
    %s46 = scalar_lea.vmem %s1, %s45
    %47 = vst [vmem:[%s46] sm:%s44] %v43
    %s48 = scalar_lea.vmem [#allocation0], 48
    %v49 = vld [vmem:[%s48] sm:%s14]
    %s50 = sshllo.u32 0, 1
    %s51 = smul.addr 1, 6
    %s52 = scalar_lea.vmem %s1, %s51
    %53 = vst [vmem:[%s52] sm:%s50] %v49
    %s54 = scalar_lea.vmem [#allocation0], 56
    %v55 = vld [vmem:[%s54] sm:%s14]
    %s56 = sshllo.u32 0, 1
    %s57 = smul.addr 1, 7
    %s58 = scalar_lea.vmem %s1, %s57
    %59 = vst [vmem:[%s58] sm:%s56] %v55

// kernel: gdnet_forward.21
$region0: #{gdnet_forward.21}
  #allocation0 [shape = 'u32[]', space=smem, size = 0x4, offset = 0x4, fixed_abs, tag = 'smem constant byte address 0x4 - core index']
  #allocation1 [shape = 'u32[144,128]{1,0:T(1,128)}', space=vmem, size = 0x12000, scoped, tag = 'internal scratch']
  %s0 = inlined_call_operand.vmem [shape: bf16[8,1152], index: 0, kind: input, shape index: {}]
  %s1 = inlined_call_operand.vmem [shape: bf16[1152,64], index: 1, kind: input, shape index: {}]
  %s2 = inlined_call_operand.vmem [shape: f32[1,64], index: 2, kind: input, shape index: {}]
  %s3 = inlined_call_operand.vmem [shape: f32[8,64], index: 3, kind: output, shape index: {}]
  %s4 = sld [smem:[#allocation0]]
  $region22: #{gdnet_forward.21} parent=0
    _
  %s6 = ssub.s32 1, %s4
  %s7 = scalar_select 0, %s6, %s4
  // Predicated region
  $region2: #{gdnet_forward.21} parent=0 // pred_check
    _
  $region3: #{gdnet_forward.21} parent=0 // pred_check_branch
    %9 = sbr.rel (0) target = $region5
  $region4: #{gdnet_forward.21} parent=0 // pred_region
    _
  $region5: #{gdnet_forward.21} parent=0 // pred_fallthru
    _
  // Predicated region
  $region6: #{gdnet_forward.21} parent=0 // pred_check
    _
  $region7: #{gdnet_forward.21} parent=0 // pred_check_branch
    %11 = sbr.rel (0) target = $region9
  $region8: #{gdnet_forward.21} parent=0 // pred_region
    _
  $region9: #{gdnet_forward.21} parent=0 // pred_fallthru
    _
  // Predicated region
  $region10: #{gdnet_forward.21} parent=0 // pred_check
    _
  $region11: #{gdnet_forward.21} parent=0 // pred_check_branch
    %13 = sbr.rel (0) target = $region13
  $region12: #{gdnet_forward.21} parent=0 // pred_region
    _
  $region13: #{gdnet_forward.21} parent=0 // pred_fallthru
    _
  %v15 = vld [vmem:[%s0] sm:$0xff]
  %v16 = vld [vmem:[%s0 + $0x8] sm:$0xff]
  %v17 = vld [vmem:[%s0 + $0x10] sm:$0xff]
  %v18 = vld [vmem:[%s0 + $0x18] sm:$0xff]
  %v19 = vld [vmem:[%s0 + $0x20] sm:$0xf]
  %v20 = vld [vmem:[%s1] sm:$0xf]
  %v21 = vld [vmem:[%s1 + $0x4] sm:$0xf]
  %v22 = vld [vmem:[%s1 + $0x8] sm:$0xf]
  %v23 = vld [vmem:[%s1 + $0xc] sm:$0xf]
  %v24 = vld [vmem:[%s1 + $0x10] sm:$0xf]
  %v25 = vld [vmem:[%s1 + $0x14] sm:$0xf]
  %v26 = vld [vmem:[%s1 + $0x18] sm:$0xf]
  %v27 = vld [vmem:[%s1 + $0x1c] sm:$0xf]
  %v28 = vld [vmem:[%s1 + $0x20] sm:$0xf]
  %v29 = vld [vmem:[%s1 + $0x24] sm:$0xf]
  %v30 = vld [vmem:[%s1 + $0x28] sm:$0xf]
  %v31 = vld [vmem:[%s1 + $0x2c] sm:$0xf]
  %v32 = vld [vmem:[%s1 + $0x30] sm:$0xf]
  %v33 = vld [vmem:[%s1 + $0x34] sm:$0xf]
  %v34 = vld [vmem:[%s1 + $0x38] sm:$0xf]
  %v35 = vld [vmem:[%s1 + $0x3c] sm:$0xf]
  %v36 = vld [vmem:[%s1 + $0x40] sm:$0xf]
  %v37 = vld [vmem:[%s1 + $0x44] sm:$0xf]
  %v38 = vld [vmem:[%s1 + $0x48] sm:$0xf]
  %v39 = vld [vmem:[%s1 + $0x4c] sm:$0xf]
  %v40 = vld [vmem:[%s1 + $0x50] sm:$0xf]
  %v41 = vld [vmem:[%s1 + $0x54] sm:$0xf]
  %v42 = vld [vmem:[%s1 + $0x58] sm:$0xf]
  %v43 = vld [vmem:[%s1 + $0x5c] sm:$0xf]
  %v44 = vld [vmem:[%s1 + $0x60] sm:$0xf]
  %v45 = vld [vmem:[%s1 + $0x64] sm:$0xf]
  %v46 = vld [vmem:[%s1 + $0x68] sm:$0xf]
  %v47 = vld [vmem:[%s1 + $0x6c] sm:$0xf]
  %v48 = vld [vmem:[%s1 + $0x70] sm:$0xf]
  %v49 = vld [vmem:[%s1 + $0x74] sm:$0xf]
  %v50 = vld [vmem:[%s1 + $0x78] sm:$0xf]
  %v51 = vld [vmem:[%s1 + $0x7c] sm:$0xf]
  %v52 = vld [vmem:[%s1 + $0x80] sm:$0xf]
  %v53 = vld [vmem:[%s1 + $0x84] sm:$0xf]
  %v54 = vld [vmem:[%s1 + $0x88] sm:$0xf]
  %v55 = vld [vmem:[%s1 + $0x8c] sm:$0xf]
  %v56 = vld [vmem:[%s1 + $0x90] sm:$0xf]
  %v57 = vld [vmem:[%s1 + $0x94] sm:$0xf]
  %v58 = vld [vmem:[%s1 + $0x98] sm:$0xf]
  %v59 = vld [vmem:[%s1 + $0x9c] sm:$0xf]
  %v60 = vld [vmem:[%s1 + $0xa0] sm:$0xf]
  %v61 = vld [vmem:[%s1 + $0xa4] sm:$0xf]
  %v62 = vld [vmem:[%s1 + $0xa8] sm:$0xf]
  %v63 = vld [vmem:[%s1 + $0xac] sm:$0xf]
  %v64 = vld [vmem:[%s1 + $0xb0] sm:$0xf]
  %v65 = vld [vmem:[%s1 + $0xb4] sm:$0xf]
  %v66 = vld [vmem:[%s1 + $0xb8] sm:$0xf]
  %v67 = vld [vmem:[%s1 + $0xbc] sm:$0xf]
  %v68 = vld [vmem:[%s1 + $0xc0] sm:$0xf]
  %v69 = vld [vmem:[%s1 + $0xc4] sm:$0xf]
  %v70 = vld [vmem:[%s1 + $0xc8] sm:$0xf]
  %v71 = vld [vmem:[%s1 + $0xcc] sm:$0xf]
  %v72 = vld [vmem:[%s1 + $0xd0] sm:$0xf]
  %v73 = vld [vmem:[%s1 + $0xd4] sm:$0xf]
  %v74 = vld [vmem:[%s1 + $0xd8] sm:$0xf]
  %v75 = vld [vmem:[%s1 + $0xdc] sm:$0xf]
  %v76 = vld [vmem:[%s1 + $0xe0] sm:$0xf]
  %v77 = vld [vmem:[%s1 + $0xe4] sm:$0xf]
  %v78 = vld [vmem:[%s1 + $0xe8] sm:$0xf]
  %v79 = vld [vmem:[%s1 + $0xec] sm:$0xf]
  %v80 = vld [vmem:[%s1 + $0xf0] sm:$0xf]
  %v81 = vld [vmem:[%s1 + $0xf4] sm:$0xf]
  %v82 = vld [vmem:[%s1 + $0xf8] sm:$0xf]
  %v83 = vld [vmem:[%s1 + $0xfc] sm:$0xf]
  %v84 = vld [vmem:[%s1 + $0x100] sm:$0xf]
  %v85 = vld [vmem:[%s1 + $0x104] sm:$0xf]
  %v86 = vld [vmem:[%s1 + $0x108] sm:$0xf]
  %v87 = vld [vmem:[%s1 + $0x10c] sm:$0xf]
  %v88 = vld [vmem:[%s1 + $0x110] sm:$0xf]
  %v89 = vld [vmem:[%s1 + $0x114] sm:$0xf]
  %v90 = vld [vmem:[%s1 + $0x118] sm:$0xf]
  %v91 = vld [vmem:[%s1 + $0x11c] sm:$0xf]
  %v92 = vld [vmem:[%s1 + $0x120] sm:$0xf]
  %v93 = vld [vmem:[%s1 + $0x124] sm:$0xf]
  %v94 = vld [vmem:[%s1 + $0x128] sm:$0xf]
  %v95 = vld [vmem:[%s1 + $0x12c] sm:$0xf]
  %v96 = vld [vmem:[%s1 + $0x130] sm:$0xf]
  %v97 = vld [vmem:[%s1 + $0x134] sm:$0xf]
  %v98 = vld [vmem:[%s1 + $0x138] sm:$0xf]
  %v99 = vld [vmem:[%s1 + $0x13c] sm:$0xf]
  %v100 = vld [vmem:[%s1 + $0x140] sm:$0xf]
  %v101 = vld [vmem:[%s1 + $0x144] sm:$0xf]
  %v102 = vld [vmem:[%s1 + $0x148] sm:$0xf]
  %v103 = vld [vmem:[%s1 + $0x14c] sm:$0xf]
  %v104 = vld [vmem:[%s1 + $0x150] sm:$0xf]
  %v105 = vld [vmem:[%s1 + $0x154] sm:$0xf]
  %v106 = vld [vmem:[%s1 + $0x158] sm:$0xf]
  %v107 = vld [vmem:[%s1 + $0x15c] sm:$0xf]
  %v108 = vld [vmem:[%s1 + $0x160] sm:$0xf]
  %v109 = vld [vmem:[%s1 + $0x164] sm:$0xf]
  %v110 = vld [vmem:[%s1 + $0x168] sm:$0xf]
  %v111 = vld [vmem:[%s1 + $0x16c] sm:$0xf]
  %v112 = vld [vmem:[%s1 + $0x170] sm:$0xf]
  %v113 = vld [vmem:[%s1 + $0x174] sm:$0xf]
  %v114 = vld [vmem:[%s1 + $0x178] sm:$0xf]
  %v115 = vld [vmem:[%s1 + $0x17c] sm:$0xf]
  %v116 = vld [vmem:[%s1 + $0x180] sm:$0xf]
  %v117 = vld [vmem:[%s1 + $0x184] sm:$0xf]
  %v118 = vld [vmem:[%s1 + $0x188] sm:$0xf]
  %v119 = vld [vmem:[%s1 + $0x18c] sm:$0xf]
  %v120 = vld [vmem:[%s1 + $0x190] sm:$0xf]
  %v121 = vld [vmem:[%s1 + $0x194] sm:$0xf]
  %v122 = vld [vmem:[%s1 + $0x198] sm:$0xf]
  %v123 = vld [vmem:[%s1 + $0x19c] sm:$0xf]
  %v124 = vld [vmem:[%s1 + $0x1a0] sm:$0xf]
  %v125 = vld [vmem:[%s1 + $0x1a4] sm:$0xf]
  %v126 = vld [vmem:[%s1 + $0x1a8] sm:$0xf]
  %v127 = vld [vmem:[%s1 + $0x1ac] sm:$0xf]
  %v128 = vld [vmem:[%s1 + $0x1b0] sm:$0xf]
  %v129 = vld [vmem:[%s1 + $0x1b4] sm:$0xf]
  %v130 = vld [vmem:[%s1 + $0x1b8] sm:$0xf]
  %v131 = vld [vmem:[%s1 + $0x1bc] sm:$0xf]
  %v132 = vld [vmem:[%s1 + $0x1c0] sm:$0xf]
  %v133 = vld [vmem:[%s1 + $0x1c4] sm:$0xf]
  %v134 = vld [vmem:[%s1 + $0x1c8] sm:$0xf]
  %v135 = vld [vmem:[%s1 + $0x1cc] sm:$0xf]
  %v136 = vld [vmem:[%s1 + $0x1d0] sm:$0xf]
  %v137 = vld [vmem:[%s1 + $0x1d4] sm:$0xf]
  %v138 = vld [vmem:[%s1 + $0x1d8] sm:$0xf]
  %v139 = vld [vmem:[%s1 + $0x1dc] sm:$0xf]
  %v140 = vld [vmem:[%s1 + $0x1e0] sm:$0xf]
  %v141 = vld [vmem:[%s1 + $0x1e4] sm:$0xf]
  %v142 = vld [vmem:[%s1 + $0x1e8] sm:$0xf]
  %v143 = vld [vmem:[%s1 + $0x1ec] sm:$0xf]
  %v144 = vld [vmem:[%s1 + $0x1f0] sm:$0xf]
  %v145 = vld [vmem:[%s1 + $0x1f4] sm:$0xf]
  %v146 = vld [vmem:[%s1 + $0x1f8] sm:$0xf]
  %v147 = vld [vmem:[%s1 + $0x1fc] sm:$0xf]
  %v148 = vld [vmem:[%s1 + $0x200] sm:$0xf]
  %v149 = vld [vmem:[%s1 + $0x204] sm:$0xf]
  %v150 = vld [vmem:[%s1 + $0x208] sm:$0xf]
  %v151 = vld [vmem:[%s1 + $0x20c] sm:$0xf]
  %v152 = vld [vmem:[%s1 + $0x210] sm:$0xf]
  %v153 = vld [vmem:[%s1 + $0x214] sm:$0xf]
  %v154 = vld [vmem:[%s1 + $0x218] sm:$0xf]
  %v155 = vld [vmem:[%s1 + $0x21c] sm:$0xf]
  %v156 = vld [vmem:[%s1 + $0x220] sm:$0xf]
  %v157 = vld [vmem:[%s1 + $0x224] sm:$0xf]
  %v158 = vld [vmem:[%s1 + $0x228] sm:$0xf]
  %v159 = vld [vmem:[%s1 + $0x22c] sm:$0xf]
  %v160 = vld [vmem:[%s1 + $0x230] sm:$0xf]
  %v161 = vld [vmem:[%s1 + $0x234] sm:$0xf]
  %v162 = vld [vmem:[%s1 + $0x238] sm:$0xf]
  %v163 = vld [vmem:[%s1 + $0x23c] sm:$0xf]
  %v164 = vld [vmem:[%s2] sm:$0x1]
  %v166 = vlaneseq
  %v167 = vshrl.u32 %v166, 7
  %v168 = vsub.s32 0, %v167
  %v169 = vrot.slane %v164, %v168
  %v176 = vunpack.c.l.b16 %v15
  %v177 = vunpack.c.h.b16 %v15
  %v178 = vunpack.c.l.b16 %v16
  %v179 = vunpack.c.h.b16 %v16
  %v180 = vunpack.c.l.b16 %v17
  %v181 = vunpack.c.h.b16 %v17
  %v182 = vunpack.c.l.b16 %v18
  %v183 = vunpack.c.h.b16 %v18
  %v184 = vunpack.c.l.b16 %v19
  %v185 = vpack.c.b16 %v176, %v176
  %v186 = vpack.c.b16 %v177, %v177
  %v187 = vpack.c.b16 %v178, %v178
  %v188 = vpack.c.b16 %v179, %v179
  %v189 = vpack.c.b16 %v180, %v180
  %v190 = vpack.c.b16 %v181, %v181
  %v191 = vpack.c.b16 %v182, %v182
  %v192 = vpack.c.b16 %v183, %v183
  %v193 = vpack.c.b16 %v184, %v184
  %v347 = vunpack.c.l.b16 %v20
  %v348 = vunpack.c.l.b16 %v21
  %v349 = vunpack.c.l.b16 %v22
  %v350 = vunpack.c.l.b16 %v23
  %v351 = vunpack.c.l.b16 %v24
  %v352 = vunpack.c.l.b16 %v25
  %v353 = vunpack.c.l.b16 %v26
  %v354 = vunpack.c.l.b16 %v27
  %v355 = vunpack.c.l.b16 %v28
  %v356 = vunpack.c.l.b16 %v29
  %v357 = vunpack.c.l.b16 %v30
  %v358 = vunpack.c.l.b16 %v31
  %v359 = vunpack.c.l.b16 %v32
  %v360 = vunpack.c.l.b16 %v33
  %v361 = vunpack.c.l.b16 %v34
  %v362 = vunpack.c.l.b16 %v35
  %v363 = vunpack.c.l.b16 %v36
  %v364 = vunpack.c.l.b16 %v37
  %v365 = vunpack.c.l.b16 %v38
  %v366 = vunpack.c.l.b16 %v39
  %v367 = vunpack.c.l.b16 %v40
  %v368 = vunpack.c.l.b16 %v41
  %v369 = vunpack.c.l.b16 %v42
  %v370 = vunpack.c.l.b16 %v43
  %v371 = vunpack.c.l.b16 %v44
  %v372 = vunpack.c.l.b16 %v45
  %v373 = vunpack.c.l.b16 %v46
  %v374 = vunpack.c.l.b16 %v47
  %v375 = vunpack.c.l.b16 %v48
  %v376 = vunpack.c.l.b16 %v49
  %v377 = vunpack.c.l.b16 %v50
  %v378 = vunpack.c.l.b16 %v51
  %v379 = vunpack.c.l.b16 %v52
  %v380 = vunpack.c.l.b16 %v53
  %v381 = vunpack.c.l.b16 %v54
  %v382 = vunpack.c.l.b16 %v55
  %v383 = vunpack.c.l.b16 %v56
  %v384 = vunpack.c.l.b16 %v57
  %v385 = vunpack.c.l.b16 %v58
  %v386 = vunpack.c.l.b16 %v59
  %v387 = vunpack.c.l.b16 %v60
  %v388 = vunpack.c.l.b16 %v61
  %v389 = vunpack.c.l.b16 %v62
  %v390 = vunpack.c.l.b16 %v63
  %v391 = vunpack.c.l.b16 %v64
  %v392 = vunpack.c.l.b16 %v65
  %v393 = vunpack.c.l.b16 %v66
  %v394 = vunpack.c.l.b16 %v67
  %v395 = vunpack.c.l.b16 %v68
  %v396 = vunpack.c.l.b16 %v69
  %v397 = vunpack.c.l.b16 %v70
  %v398 = vunpack.c.l.b16 %v71
  %v399 = vunpack.c.l.b16 %v72
  %v400 = vunpack.c.l.b16 %v73
  %v401 = vunpack.c.l.b16 %v74
  %v402 = vunpack.c.l.b16 %v75
  %v403 = vunpack.c.l.b16 %v76
  %v404 = vunpack.c.l.b16 %v77
  %v405 = vunpack.c.l.b16 %v78
  %v406 = vunpack.c.l.b16 %v79
  %v407 = vunpack.c.l.b16 %v80
  %v408 = vunpack.c.l.b16 %v81
  %v409 = vunpack.c.l.b16 %v82
  %v410 = vunpack.c.l.b16 %v83
  %v411 = vunpack.c.l.b16 %v84
  %v412 = vunpack.c.l.b16 %v85
  %v413 = vunpack.c.l.b16 %v86
  %v414 = vunpack.c.l.b16 %v87
  %v415 = vunpack.c.l.b16 %v88
  %v416 = vunpack.c.l.b16 %v89
  %v417 = vunpack.c.l.b16 %v90
  %v418 = vunpack.c.l.b16 %v91
  %v419 = vunpack.c.l.b16 %v92
  %v420 = vunpack.c.l.b16 %v93
  %v421 = vunpack.c.l.b16 %v94
  %v422 = vunpack.c.l.b16 %v95
  %v423 = vunpack.c.l.b16 %v96
  %v424 = vunpack.c.l.b16 %v97
  %v425 = vunpack.c.l.b16 %v98
  %v426 = vunpack.c.l.b16 %v99
  %v427 = vunpack.c.l.b16 %v100
  %v428 = vunpack.c.l.b16 %v101
  %v429 = vunpack.c.l.b16 %v102
  %v430 = vunpack.c.l.b16 %v103
  %v431 = vunpack.c.l.b16 %v104
  %v432 = vunpack.c.l.b16 %v105
  %v433 = vunpack.c.l.b16 %v106
  %v434 = vunpack.c.l.b16 %v107
  %v435 = vunpack.c.l.b16 %v108
  %v436 = vunpack.c.l.b16 %v109
  %v437 = vunpack.c.l.b16 %v110
  %v438 = vunpack.c.l.b16 %v111
  %v439 = vunpack.c.l.b16 %v112
  %v440 = vunpack.c.l.b16 %v113
  %v441 = vunpack.c.l.b16 %v114
  %v442 = vunpack.c.l.b16 %v115
  %v443 = vunpack.c.l.b16 %v116
  %v444 = vunpack.c.l.b16 %v117
  %v445 = vunpack.c.l.b16 %v118
  %v446 = vunpack.c.l.b16 %v119
  %v447 = vunpack.c.l.b16 %v120
  %v448 = vunpack.c.l.b16 %v121
  %v449 = vunpack.c.l.b16 %v122
  %v450 = vunpack.c.l.b16 %v123
  %v451 = vunpack.c.l.b16 %v124
  %v452 = vunpack.c.l.b16 %v125
  %v453 = vunpack.c.l.b16 %v126
  %v454 = vunpack.c.l.b16 %v127
  %v455 = vunpack.c.l.b16 %v128
  %v456 = vunpack.c.l.b16 %v129
  %v457 = vunpack.c.l.b16 %v130
  %v458 = vunpack.c.l.b16 %v131
  %v459 = vunpack.c.l.b16 %v132
  %v460 = vunpack.c.l.b16 %v133
  %v461 = vunpack.c.l.b16 %v134
  %v462 = vunpack.c.l.b16 %v135
  %v463 = vunpack.c.l.b16 %v136
  %v464 = vunpack.c.l.b16 %v137
  %v465 = vunpack.c.l.b16 %v138
  %v466 = vunpack.c.l.b16 %v139
  %v467 = vunpack.c.l.b16 %v140
  %v468 = vunpack.c.l.b16 %v141
  %v469 = vunpack.c.l.b16 %v142
  %v470 = vunpack.c.l.b16 %v143
  %v471 = vunpack.c.l.b16 %v144
  %v472 = vunpack.c.l.b16 %v145
  %v473 = vunpack.c.l.b16 %v146
  %v474 = vunpack.c.l.b16 %v147
  %v475 = vunpack.c.l.b16 %v148
  %v476 = vunpack.c.l.b16 %v149
  %v477 = vunpack.c.l.b16 %v150
  %v478 = vunpack.c.l.b16 %v151
  %v479 = vunpack.c.l.b16 %v152
  %v480 = vunpack.c.l.b16 %v153
  %v481 = vunpack.c.l.b16 %v154
  %v482 = vunpack.c.l.b16 %v155
  %v483 = vunpack.c.l.b16 %v156
  %v484 = vunpack.c.l.b16 %v157
  %v485 = vunpack.c.l.b16 %v158
  %v486 = vunpack.c.l.b16 %v159
  %v487 = vunpack.c.l.b16 %v160
  %v488 = vunpack.c.l.b16 %v161
  %v489 = vunpack.c.l.b16 %v162
  %v490 = vunpack.c.l.b16 %v163
  %v491 = vpack.c.b16 %v348, %v347
  %v492 = vpack.c.b16 %v350, %v349
  %v493 = vpack.c.b16 %v352, %v351
  %v494 = vpack.c.b16 %v354, %v353
  %v495 = vpack.c.b16 %v356, %v355
  %v496 = vpack.c.b16 %v358, %v357
  %v497 = vpack.c.b16 %v360, %v359
  %v498 = vpack.c.b16 %v362, %v361
  %v499 = vpack.c.b16 %v364, %v363
  %v500 = vpack.c.b16 %v366, %v365
  %v501 = vpack.c.b16 %v368, %v367
  %v502 = vpack.c.b16 %v370, %v369
  %v503 = vpack.c.b16 %v372, %v371
  %v504 = vpack.c.b16 %v374, %v373
  %v505 = vpack.c.b16 %v376, %v375
  %v506 = vpack.c.b16 %v378, %v377
  %v507 = vpack.c.b16 %v380, %v379
  %v508 = vpack.c.b16 %v382, %v381
  %v509 = vpack.c.b16 %v384, %v383
  %v510 = vpack.c.b16 %v386, %v385
  %v511 = vpack.c.b16 %v388, %v387
  %v512 = vpack.c.b16 %v390, %v389
  %v513 = vpack.c.b16 %v392, %v391
  %v514 = vpack.c.b16 %v394, %v393
  %v515 = vpack.c.b16 %v396, %v395
  %v516 = vpack.c.b16 %v398, %v397
  %v517 = vpack.c.b16 %v400, %v399
  %v518 = vpack.c.b16 %v402, %v401
  %v519 = vpack.c.b16 %v404, %v403
  %v520 = vpack.c.b16 %v406, %v405
  %v521 = vpack.c.b16 %v408, %v407
  %v522 = vpack.c.b16 %v410, %v409
  %v523 = vpack.c.b16 %v412, %v411
  %v524 = vpack.c.b16 %v414, %v413
  %v525 = vpack.c.b16 %v416, %v415
  %v526 = vpack.c.b16 %v418, %v417
  %v527 = vpack.c.b16 %v420, %v419
  %v528 = vpack.c.b16 %v422, %v421
  %v529 = vpack.c.b16 %v424, %v423
  %v530 = vpack.c.b16 %v426, %v425
  %v531 = vpack.c.b16 %v428, %v427
  %v532 = vpack.c.b16 %v430, %v429
  %v533 = vpack.c.b16 %v432, %v431
  %v534 = vpack.c.b16 %v434, %v433
  %v535 = vpack.c.b16 %v436, %v435
  %v536 = vpack.c.b16 %v438, %v437
  %v537 = vpack.c.b16 %v440, %v439
  %v538 = vpack.c.b16 %v442, %v441
  %v539 = vpack.c.b16 %v444, %v443
  %v540 = vpack.c.b16 %v446, %v445
  %v541 = vpack.c.b16 %v448, %v447
  %v542 = vpack.c.b16 %v450, %v449
  %v543 = vpack.c.b16 %v452, %v451
  %v544 = vpack.c.b16 %v454, %v453
  %v545 = vpack.c.b16 %v456, %v455
  %v546 = vpack.c.b16 %v458, %v457
  %v547 = vpack.c.b16 %v460, %v459
  %v548 = vpack.c.b16 %v462, %v461
  %v549 = vpack.c.b16 %v464, %v463
  %v550 = vpack.c.b16 %v466, %v465
  %v551 = vpack.c.b16 %v468, %v467
  %v552 = vpack.c.b16 %v470, %v469
  %v553 = vpack.c.b16 %v472, %v471
  %v554 = vpack.c.b16 %v474, %v473
  %v555 = vpack.c.b16 %v476, %v475
  %v556 = vpack.c.b16 %v478, %v477
  %v557 = vpack.c.b16 %v480, %v479
  %v558 = vpack.c.b16 %v482, %v481
  %v559 = vpack.c.b16 %v484, %v483
  %v560 = vpack.c.b16 %v486, %v485
  %v561 = vpack.c.b16 %v488, %v487
  %v562 = vpack.c.b16 %v490, %v489
  %635 = vmatprep.subr.bf16.mxu0 0
  %636 = vmatpush1.bf16.msra.mxu0 %v491
  %637 = vmatprep.subr.bf16.mxu0 0
  %638 = vmatpush1.bf16.msra.mxu0 %v492
  %639 = vmatprep.subr.bf16.mxu0 0
  %640 = vmatpush1.bf16.msra.mxu0 %v493
  %641 = vmatprep.subr.bf16.mxu0 0
  %642 = vmatpush1.bf16.msra.mxu0 %v494
  %643 = vmatprep.subr.bf16.mxu0 0
  %644 = vmatpush1.bf16.msra.mxu0 %v495
  %645 = vmatprep.subr.bf16.mxu0 0
  %646 = vmatpush1.bf16.msra.mxu0 %v496
  %647 = vmatprep.subr.bf16.mxu0 0
  %648 = vmatpush1.bf16.msra.mxu0 %v497
  %649 = vmatprep.subr.bf16.mxu0 0
  %650 = vmatpush1.bf16.msra.mxu0 %v498
  %651 = vmatprep.subr.bf16.mxu0 0
  %652 = vmatpush1.bf16.msra.mxu0 %v499
  %653 = vmatprep.subr.bf16.mxu0 0
  %654 = vmatpush1.bf16.msra.mxu0 %v500
  %655 = vmatprep.subr.bf16.mxu0 0
  %656 = vmatpush1.bf16.msra.mxu0 %v501
  %657 = vmatprep.subr.bf16.mxu0 0
  %658 = vmatpush1.bf16.msra.mxu0 %v502
  %659 = vmatprep.subr.bf16.mxu0 0
  %660 = vmatpush1.bf16.msra.mxu0 %v503
  %661 = vmatprep.subr.bf16.mxu0 0
  %662 = vmatpush1.bf16.msra.mxu0 %v504
  %663 = vmatprep.subr.bf16.mxu0 0
  %664 = vmatpush1.bf16.msra.mxu0 %v505
  %665 = vmatprep.subr.bf16.mxu0 0
  %666 = vmatpush1.bf16.msra.mxu0 %v506
  %667 = vmatprep.mubr.bf16.mxu0 %v186
  %668 = vmatmul.mubr.bf16.gmra.mrb[0].mxu0 %v185
  %v669 = vpop.f32.mrb[0].mxu0
  %v670 = vadd.f32 %v169, %v669
  %v671 = vpop.f32.mrb[0].mxu0
  %v672 = vpop.f32.mrb[0].mxu0
  %v673 = vpop.f32.mrb[0].mxu0
  %674 = vdwg.mxu0
  %675 = vmatprep.subr.bf16.mxu0 0
  %676 = vmatpush1.bf16.msra.mxu0 %v507
  %677 = vmatprep.subr.bf16.mxu0 0
  %678 = vmatpush1.bf16.msra.mxu0 %v508
  %679 = vmatprep.subr.bf16.mxu0 0
  %680 = vmatpush1.bf16.msra.mxu0 %v509
  %681 = vmatprep.subr.bf16.mxu0 0
  %682 = vmatpush1.bf16.msra.mxu0 %v510
  %683 = vmatprep.subr.bf16.mxu0 0
  %684 = vmatpush1.bf16.msra.mxu0 %v511
  %685 = vmatprep.subr.bf16.mxu0 0
  %686 = vmatpush1.bf16.msra.mxu0 %v512
  %687 = vmatprep.subr.bf16.mxu0 0
  %688 = vmatpush1.bf16.msra.mxu0 %v513
  %689 = vmatprep.subr.bf16.mxu0 0
  %690 = vmatpush1.bf16.msra.mxu0 %v514
  %691 = vmatprep.subr.bf16.mxu0 0
  %692 = vmatpush1.bf16.msra.mxu0 %v515
  %693 = vmatprep.subr.bf16.mxu0 0
  %694 = vmatpush1.bf16.msra.mxu0 %v516
  %695 = vmatprep.subr.bf16.mxu0 0
  %696 = vmatpush1.bf16.msra.mxu0 %v517
  %697 = vmatprep.subr.bf16.mxu0 0
  %698 = vmatpush1.bf16.msra.mxu0 %v518
  %699 = vmatprep.subr.bf16.mxu0 0
  %700 = vmatpush1.bf16.msra.mxu0 %v519
  %701 = vmatprep.subr.bf16.mxu0 0
  %702 = vmatpush1.bf16.msra.mxu0 %v520
  %703 = vmatprep.subr.bf16.mxu0 0
  %704 = vmatpush1.bf16.msra.mxu0 %v521
  %705 = vmatprep.subr.bf16.mxu0 0
  %706 = vmatpush1.bf16.msra.mxu0 %v522
  %707 = vmatprep.mubr.bf16.mxu0 %v188
  %708 = vmatmul.mubr.bf16.gmra.mrb[0].mxu0 %v187
  %v709 = vpop.f32.mrb[0].mxu0
  %v710 = vadd.f32 %v670, %v709
  %v711 = vpop.f32.mrb[0].mxu0
  %v712 = vpop.f32.mrb[0].mxu0
  %v713 = vpop.f32.mrb[0].mxu0
  %714 = vdwg.mxu0
  %715 = vmatprep.subr.bf16.mxu0 0
  %716 = vmatpush1.bf16.msra.mxu0 %v523
  %717 = vmatprep.subr.bf16.mxu0 0
  %718 = vmatpush1.bf16.msra.mxu0 %v524
  %719 = vmatprep.subr.bf16.mxu0 0
  %720 = vmatpush1.bf16.msra.mxu0 %v525
  %721 = vmatprep.subr.bf16.mxu0 0
  %722 = vmatpush1.bf16.msra.mxu0 %v526
  %723 = vmatprep.subr.bf16.mxu0 0
  %724 = vmatpush1.bf16.msra.mxu0 %v527
  %725 = vmatprep.subr.bf16.mxu0 0
  %726 = vmatpush1.bf16.msra.mxu0 %v528
  %727 = vmatprep.subr.bf16.mxu0 0
  %728 = vmatpush1.bf16.msra.mxu0 %v529
  %729 = vmatprep.subr.bf16.mxu0 0
  %730 = vmatpush1.bf16.msra.mxu0 %v530
  %731 = vmatprep.subr.bf16.mxu0 0
  %732 = vmatpush1.bf16.msra.mxu0 %v531
  %733 = vmatprep.subr.bf16.mxu0 0
  %734 = vmatpush1.bf16.msra.mxu0 %v532
  %735 = vmatprep.subr.bf16.mxu0 0
  %736 = vmatpush1.bf16.msra.mxu0 %v533
  %737 = vmatprep.subr.bf16.mxu0 0
  %738 = vmatpush1.bf16.msra.mxu0 %v534
  %739 = vmatprep.subr.bf16.mxu0 0
  %740 = vmatpush1.bf16.msra.mxu0 %v535
  %741 = vmatprep.subr.bf16.mxu0 0
  %742 = vmatpush1.bf16.msra.mxu0 %v536
  %743 = vmatprep.subr.bf16.mxu0 0
  %744 = vmatpush1.bf16.msra.mxu0 %v537
  %745 = vmatprep.subr.bf16.mxu0 0
  %746 = vmatpush1.bf16.msra.mxu0 %v538
  %747 = vmatprep.mubr.bf16.mxu0 %v190
  %748 = vmatmul.mubr.bf16.gmra.mrb[0].mxu0 %v189
  %v749 = vpop.f32.mrb[0].mxu0
  %v750 = vadd.f32 %v710, %v749
  %v751 = vpop.f32.mrb[0].mxu0
  %v752 = vpop.f32.mrb[0].mxu0
  %v753 = vpop.f32.mrb[0].mxu0
  %754 = vdwg.mxu0
  %755 = vmatprep.subr.bf16.mxu0 0
  %756 = vmatpush1.bf16.msra.mxu0 %v539
  %757 = vmatprep.subr.bf16.mxu0 0
  %758 = vmatpush1.bf16.msra.mxu0 %v540
  %759 = vmatprep.subr.bf16.mxu0 0
  %760 = vmatpush1.bf16.msra.mxu0 %v541
  %761 = vmatprep.subr.bf16.mxu0 0
  %762 = vmatpush1.bf16.msra.mxu0 %v542
  %763 = vmatprep.subr.bf16.mxu0 0
  %764 = vmatpush1.bf16.msra.mxu0 %v543
  %765 = vmatprep.subr.bf16.mxu0 0
  %766 = vmatpush1.bf16.msra.mxu0 %v544
  %767 = vmatprep.subr.bf16.mxu0 0
  %768 = vmatpush1.bf16.msra.mxu0 %v545
  %769 = vmatprep.subr.bf16.mxu0 0
  %770 = vmatpush1.bf16.msra.mxu0 %v546
  %771 = vmatprep.subr.bf16.mxu0 0
  %772 = vmatpush1.bf16.msra.mxu0 %v547
  %773 = vmatprep.subr.bf16.mxu0 0
  %774 = vmatpush1.bf16.msra.mxu0 %v548
  %775 = vmatprep.subr.bf16.mxu0 0
  %776 = vmatpush1.bf16.msra.mxu0 %v549
  %777 = vmatprep.subr.bf16.mxu0 0
  %778 = vmatpush1.bf16.msra.mxu0 %v550
  %779 = vmatprep.subr.bf16.mxu0 0
  %780 = vmatpush1.bf16.msra.mxu0 %v551
  %781 = vmatprep.subr.bf16.mxu0 0
  %782 = vmatpush1.bf16.msra.mxu0 %v552
  %783 = vmatprep.subr.bf16.mxu0 0
  %784 = vmatpush1.bf16.msra.mxu0 %v553
  %785 = vmatprep.subr.bf16.mxu0 0
  %786 = vmatpush1.bf16.msra.mxu0 %v554
  %787 = vmatprep.mubr.bf16.mxu0 %v192
  %788 = vmatmul.mubr.bf16.gmra.mrb[0].mxu0 %v191
  %v789 = vpop.f32.mrb[0].mxu0
  %v790 = vadd.f32 %v750, %v789
  %v791 = vpop.f32.mrb[0].mxu0
  %v792 = vpop.f32.mrb[0].mxu0
  %v793 = vpop.f32.mrb[0].mxu0
  %794 = vdwg.mxu0
  %795 = vmatprep.subr.bf16.mxu0 0
  %796 = vmatpush1.bf16.msra.mxu0 %v555
  %797 = vmatprep.subr.bf16.mxu0 0
  %798 = vmatpush1.bf16.msra.mxu0 %v556
  %799 = vmatprep.subr.bf16.mxu0 0
  %800 = vmatpush1.bf16.msra.mxu0 %v557
  %801 = vmatprep.subr.bf16.mxu0 0
  %802 = vmatpush1.bf16.msra.mxu0 %v558
  %803 = vmatprep.subr.bf16.mxu0 0
  %804 = vmatpush1.bf16.msra.mxu0 %v559
  %805 = vmatprep.subr.bf16.mxu0 0
  %806 = vmatpush1.bf16.msra.mxu0 %v560
  %807 = vmatprep.subr.bf16.mxu0 0
  %808 = vmatpush1.bf16.msra.mxu0 %v561
  %809 = vmatprep.subr.bf16.mxu0 0
  %810 = vmatpush1.bf16.msra.mxu0 %v562
  %811 = vmatprep.subr.bf16.mxu0 0
  %812 = vmatpush1.bf16.msra.mxu0 0
  %813 = vmatprep.subr.bf16.mxu0 0
  %814 = vmatpush1.bf16.msra.mxu0 0
  %815 = vmatprep.subr.bf16.mxu0 0
  %816 = vmatpush1.bf16.msra.mxu0 0
  %817 = vmatprep.subr.bf16.mxu0 0
  %818 = vmatpush1.bf16.msra.mxu0 0
  %819 = vmatprep.subr.bf16.mxu0 0
  %820 = vmatpush1.bf16.msra.mxu0 0
  %821 = vmatprep.subr.bf16.mxu0 0
  %822 = vmatpush1.bf16.msra.mxu0 0
  %823 = vmatprep.subr.bf16.mxu0 0
  %824 = vmatpush1.bf16.msra.mxu0 0
  %825 = vmatprep.subr.bf16.mxu0 0
  %826 = vmatpush1.bf16.msra.mxu0 0
  %827 = vmatprep.mubr.bf16.mxu0 0
  %828 = vmatmul.mubr.bf16.gmra.mrb[0].mxu0 %v193
  %v829 = vpop.f32.mrb[0].mxu0
  %v830 = vadd.f32 %v790, %v829
  %v831 = vpop.f32.mrb[0].mxu0
  %v832 = vpop.f32.mrb[0].mxu0
  %v833 = vpop.f32.mrb[0].mxu0
  %834 = vdwg.mxu0
  %v835 = vmax.f32 %v830, 0.0
  %vm836 = vcmask 523264
  %837 = vst.msk [vmem:[%s3] sm:$0xff] %vm836, %v835
  // Predicated region
  $region14: #{gdnet_forward.21} parent=0 // pred_check
    _
  $region15: #{gdnet_forward.21} parent=0 // pred_check_branch
    %839 = sbr.rel (0) target = $region17
  $region16: #{gdnet_forward.21} parent=0 // pred_region
    _
  $region17: #{gdnet_forward.21} parent=0 // pred_fallthru
    _
  // Predicated region
  $region18: #{gdnet_forward.21} parent=0 // pred_check
    _
  $region19: #{gdnet_forward.21} parent=0 // pred_check_branch
    %841 = sbr.rel (0) target = $region21
  $region20: #{gdnet_forward.21} parent=0 // pred_region
    _
  $region21: #{gdnet_forward.21} parent=0 // pred_fallthru
    _

// kernel: tile.23
$region0: #{tile.23}
  #allocation0 [shape = 's32[1]{0}', space=sflag, size = 0x4, scoped, tag = 'scoped memory for tile.23']
  %s0 = inlined_call_operand.vmem [shape: f32[2], index: 0, kind: input, shape index: {}]
  %s1 = inlined_call_operand.vmem [shape: f32[16,2], index: 1, kind: output, shape index: {}]
  // Predicated region
  $region2: #{tile.23} parent=0 // pred_check
    _
  $region3: #{tile.23} parent=0 // pred_check_branch
    %3 = sbr.rel (0) target = $region5
  $region4: #{tile.23} parent=0 // pred_region
    _
  $region5: #{tile.23} parent=0 // pred_fallthru
    _
  %v4 = vld [vmem:[%s0] ss:$0 sm:$0xff]
  %5 = vst [vmem:[%s1] sm:$0xff] %v4
  %s6 = scalar_lea.vmem %s1, 8
  %7 = vst [vmem:[%s6] sm:$0xff] %v4

// kernel: tile.24
$region0: #{tile.24}
  %s0 = inlined_call_operand.vmem [shape: f32[16,2], index: 0, kind: input, shape index: {}]
  %s1 = inlined_call_operand.vmem [shape: f32[1,32], index: 1, kind: output, shape index: {}]
  $region1: #{tile.24} parent=0
    #allocation0 [shape = 'u8[4096]{0}', space=vmem, size = 0x1000, scoped, tag = 'scoped mem for output reshape']
    %v2 = vld [vmem:[%s0] sm:$0x1]
    %vm3 = vcmask 15360
    %4 = vst.msk [vmem:[#allocation0] sm:$0x1] %vm3, %v2
    %s5 = scalar_lea.vmem %s0, 15
    %v6 = vld [vmem:[%s5] sm:$0x1]
    %7 = vrot.lane.b32.xlu0 %v6, 30
    %v8 = vpop.permute.xlu0 %7
    %vm9 = vcmask 261360
    %10 = vst.msk [vmem:[#allocation0] sm:$0x1] %vm9, %v8
    %s11 = scalar_lea.vmem %s0, 14
    %v12 = vld [vmem:[%s11] sm:$0x1]
    %13 = vrot.lane.b32.xlu0 %v12, 28
    %v14 = vpop.permute.xlu0 %13
    %vm15 = vcmask 244960
    %16 = vst.msk [vmem:[#allocation0] sm:$0x1] %vm15, %v14
    %s17 = scalar_lea.vmem %s0, 13
    %v18 = vld [vmem:[%s17] sm:$0x1]
    %19 = vrot.lane.b32.xlu0 %v18, 26
    %v20 = vpop.permute.xlu0 %19
    %vm21 = vcmask 228560
    %22 = vst.msk [vmem:[#allocation0] sm:$0x1] %vm21, %v20
    %s23 = scalar_lea.vmem %s0, 12
    %v24 = vld [vmem:[%s23] sm:$0x1]
    %25 = vrot.lane.b32.xlu0 %v24, 24
    %v26 = vpop.permute.xlu0 %25
    %vm27 = vcmask 212160
    %28 = vst.msk [vmem:[#allocation0] sm:$0x1] %vm27, %v26
    %s29 = scalar_lea.vmem %s0, 11
    %v30 = vld [vmem:[%s29] sm:$0x1]
    %31 = vrot.lane.b32.xlu0 %v30, 22
    %v32 = vpop.permute.xlu0 %31
    %vm33 = vcmask 195760
    %34 = vst.msk [vmem:[#allocation0] sm:$0x1] %vm33, %v32
    %s35 = scalar_lea.vmem %s0, 10
    %v36 = vld [vmem:[%s35] sm:$0x1]
    %37 = vrot.lane.b32.xlu0 %v36, 20
    %v38 = vpop.permute.xlu0 %37
    %vm39 = vcmask 179360
    %40 = vst.msk [vmem:[#allocation0] sm:$0x1] %vm39, %v38
    %s41 = scalar_lea.vmem %s0, 9
    %v42 = vld [vmem:[%s41] sm:$0x1]
    %43 = vrot.lane.b32.xlu0 %v42, 18
    %v44 = vpop.permute.xlu0 %43
    %vm45 = vcmask 162960
    %46 = vst.msk [vmem:[#allocation0] sm:$0x1] %vm45, %v44
    %s47 = scalar_lea.vmem %s0, 8
    %v48 = vld [vmem:[%s47] sm:$0x1]
    %49 = vrot.lane.b32.xlu0 %v48, 16
    %v50 = vpop.permute.xlu0 %49
    %vm51 = vcmask 146560
    %52 = vst.msk [vmem:[#allocation0] sm:$0x1] %vm51, %v50
    %s53 = scalar_lea.vmem %s0, 7
    %v54 = vld [vmem:[%s53] sm:$0x1]
    %55 = vrot.lane.b32.xlu0 %v54, 14
    %v56 = vpop.permute.xlu0 %55
    %vm57 = vcmask 130160
    %58 = vst.msk [vmem:[#allocation0] sm:$0x1] %vm57, %v56
    %s59 = scalar_lea.vmem %s0, 6
    %v60 = vld [vmem:[%s59] sm:$0x1]
    %61 = vrot.lane.b32.xlu0 %v60, 12
    %v62 = vpop.permute.xlu0 %61
    %vm63 = vcmask 113760
    %64 = vst.msk [vmem:[#allocation0] sm:$0x1] %vm63, %v62
    %s65 = scalar_lea.vmem %s0, 5
    %v66 = vld [vmem:[%s65] sm:$0x1]
    %67 = vrot.lane.b32.xlu0 %v66, 10
    %v68 = vpop.permute.xlu0 %67
    %vm69 = vcmask 97360
    %70 = vst.msk [vmem:[#allocation0] sm:$0x1] %vm69, %v68
    %s71 = scalar_lea.vmem %s0, 4
    %v72 = vld [vmem:[%s71] sm:$0x1]
    %73 = vrot.lane.b32.xlu0 %v72, 8
    %v74 = vpop.permute.xlu0 %73
    %vm75 = vcmask 80960
    %76 = vst.msk [vmem:[#allocation0] sm:$0x1] %vm75, %v74
    %s77 = scalar_lea.vmem %s0, 3
    %v78 = vld [vmem:[%s77] sm:$0x1]
    %79 = vrot.lane.b32.xlu0 %v78, 6
    %v80 = vpop.permute.xlu0 %79
    %vm81 = vcmask 64560
    %82 = vst.msk [vmem:[#allocation0] sm:$0x1] %vm81, %v80
    %s83 = scalar_lea.vmem %s0, 2
    %v84 = vld [vmem:[%s83] sm:$0x1]
    %85 = vrot.lane.b32.xlu0 %v84, 4
    %v86 = vpop.permute.xlu0 %85
    %vm87 = vcmask 48160
    %88 = vst.msk [vmem:[#allocation0] sm:$0x1] %vm87, %v86
    %s89 = scalar_lea.vmem %s0, 1
    %v90 = vld [vmem:[%s89] sm:$0x1]
    %91 = vrot.lane.b32.xlu0 %v90, 2
    %v92 = vpop.permute.xlu0 %91
    %vm93 = vcmask 31760
    %94 = vst.msk [vmem:[#allocation0] sm:$0x1] %vm93, %v92
    %s96 = sshllo.u32 0, 1
    %v98 = vld [vmem:[#allocation0] sm:%s96]
    %s99 = sshllo.u32 0, 1
    %100 = vst [vmem:[%s1] sm:%s99] %v98

// kernel: gdnet_forward.22
$region0: #{gdnet_forward.22}
  #allocation0 [shape = 'u32[]', space=smem, size = 0x4, offset = 0x4, fixed_abs, tag = 'smem constant byte address 0x4 - core index']
  #allocation1 [shape = 'u32[144,128]{1,0:T(1,128)}', space=vmem, size = 0x12000, scoped, tag = 'internal scratch']
  %s0 = inlined_call_operand.vmem [shape: bf16[8,64], index: 0, kind: input, shape index: {}]
  %s1 = inlined_call_operand.vmem [shape: bf16[64,1024], index: 1, kind: input, shape index: {}]
  %s2 = inlined_call_operand.vmem [shape: f32[1,1024], index: 2, kind: input, shape index: {}]
  %s3 = inlined_call_operand.vmem [shape: f32[8,1024], index: 3, kind: output, shape index: {}]
  %s4 = sld [smem:[#allocation0]]
  $region22: #{gdnet_forward.22} parent=0
    _
  %s6 = ssub.s32 1, %s4
  %s7 = scalar_select 0, %s6, %s4
  // Predicated region
  $region2: #{gdnet_forward.22} parent=0 // pred_check
    _
  $region3: #{gdnet_forward.22} parent=0 // pred_check_branch
    %9 = sbr.rel (0) target = $region5
  $region4: #{gdnet_forward.22} parent=0 // pred_region
    _
  $region5: #{gdnet_forward.22} parent=0 // pred_fallthru
    _
  // Predicated region
  $region6: #{gdnet_forward.22} parent=0 // pred_check
    _
  $region7: #{gdnet_forward.22} parent=0 // pred_check_branch
    %11 = sbr.rel (0) target = $region9
  $region8: #{gdnet_forward.22} parent=0 // pred_region
    _
  $region9: #{gdnet_forward.22} parent=0 // pred_fallthru
    _
  // Predicated region
  $region10: #{gdnet_forward.22} parent=0 // pred_check
    _
  $region11: #{gdnet_forward.22} parent=0 // pred_check_branch
    %13 = sbr.rel (0) target = $region13
  $region12: #{gdnet_forward.22} parent=0 // pred_region
    _
  $region13: #{gdnet_forward.22} parent=0 // pred_fallthru
    _
  %v15 = vld [vmem:[%s0] sm:$0xf]
  %v16 = vld [vmem:[%s1] sm:$0xff]
  %v17 = vld [vmem:[%s1 + $0x8] sm:$0xff]
  %v18 = vld [vmem:[%s1 + $0x10] sm:$0xff]
  %v19 = vld [vmem:[%s1 + $0x18] sm:$0xff]
  %v20 = vld [vmem:[%s1 + $0x20] sm:$0xff]
  %v21 = vld [vmem:[%s1 + $0x28] sm:$0xff]
  %v22 = vld [vmem:[%s1 + $0x30] sm:$0xff]
  %v23 = vld [vmem:[%s1 + $0x38] sm:$0xff]
  %v24 = vld [vmem:[%s1 + $0x40] sm:$0xff]
  %v25 = vld [vmem:[%s1 + $0x48] sm:$0xff]
  %v26 = vld [vmem:[%s1 + $0x50] sm:$0xff]
  %v27 = vld [vmem:[%s1 + $0x58] sm:$0xff]
  %v28 = vld [vmem:[%s1 + $0x60] sm:$0xff]
  %v29 = vld [vmem:[%s1 + $0x68] sm:$0xff]
  %v30 = vld [vmem:[%s1 + $0x70] sm:$0xff]
  %v31 = vld [vmem:[%s1 + $0x78] sm:$0xff]
  %v32 = vld [vmem:[%s1 + $0x80] sm:$0xff]
  %v33 = vld [vmem:[%s1 + $0x88] sm:$0xff]
  %v34 = vld [vmem:[%s1 + $0x90] sm:$0xff]
  %v35 = vld [vmem:[%s1 + $0x98] sm:$0xff]
  %v36 = vld [vmem:[%s1 + $0xa0] sm:$0xff]
  %v37 = vld [vmem:[%s1 + $0xa8] sm:$0xff]
  %v38 = vld [vmem:[%s1 + $0xb0] sm:$0xff]
  %v39 = vld [vmem:[%s1 + $0xb8] sm:$0xff]
  %v40 = vld [vmem:[%s1 + $0xc0] sm:$0xff]
  %v41 = vld [vmem:[%s1 + $0xc8] sm:$0xff]
  %v42 = vld [vmem:[%s1 + $0xd0] sm:$0xff]
  %v43 = vld [vmem:[%s1 + $0xd8] sm:$0xff]
  %v44 = vld [vmem:[%s1 + $0xe0] sm:$0xff]
  %v45 = vld [vmem:[%s1 + $0xe8] sm:$0xff]
  %v46 = vld [vmem:[%s1 + $0xf0] sm:$0xff]
  %v47 = vld [vmem:[%s1 + $0xf8] sm:$0xff]
  %v48 = vld [vmem:[%s2] sm:$0xff]
  %v50 = vlaneseq
  %v51 = vshrl.u32 %v50, 7
  %v52 = vsub.s32 0, %v51
  %v53 = vrot.slane %v48, %v52
  %v54 = vlaneseq
  %v55 = vshrl.u32 %v54, 7
  %v56 = vsub.s32 1, %v55
  %v57 = vrot.slane %v48, %v56
  %v58 = vlaneseq
  %v59 = vshrl.u32 %v58, 7
  %v60 = vsub.s32 2, %v59
  %v61 = vrot.slane %v48, %v60
  %v62 = vlaneseq
  %v63 = vshrl.u32 %v62, 7
  %v64 = vsub.s32 3, %v63
  %v65 = vrot.slane %v48, %v64
  %v66 = vlaneseq
  %v67 = vshrl.u32 %v66, 7
  %v68 = vsub.s32 4, %v67
  %v69 = vrot.slane %v48, %v68
  %v70 = vlaneseq
  %v71 = vshrl.u32 %v70, 7
  %v72 = vsub.s32 5, %v71
  %v73 = vrot.slane %v48, %v72
  %v74 = vlaneseq
  %v75 = vshrl.u32 %v74, 7
  %v76 = vsub.s32 6, %v75
  %v77 = vrot.slane %v48, %v76
  %v78 = vlaneseq
  %v79 = vshrl.u32 %v78, 7
  %v80 = vsub.s32 7, %v79
  %v81 = vrot.slane %v48, %v80
  %v122 = vunpack.c.l.b16 %v16
  %v123 = vunpack.c.h.b16 %v16
  %v124 = vunpack.c.l.b16 %v17
  %v125 = vunpack.c.h.b16 %v17
  %v126 = vunpack.c.l.b16 %v18
  %v127 = vunpack.c.h.b16 %v18
  %v128 = vunpack.c.l.b16 %v19
  %v129 = vunpack.c.h.b16 %v19
  %v130 = vunpack.c.l.b16 %v20
  %v131 = vunpack.c.h.b16 %v20
  %v132 = vunpack.c.l.b16 %v21
  %v133 = vunpack.c.h.b16 %v21
  %v134 = vunpack.c.l.b16 %v22
  %v135 = vunpack.c.h.b16 %v22
  %v136 = vunpack.c.l.b16 %v23
  %v137 = vunpack.c.h.b16 %v23
  %v138 = vunpack.c.l.b16 %v24
  %v139 = vunpack.c.h.b16 %v24
  %v140 = vunpack.c.l.b16 %v25
  %v141 = vunpack.c.h.b16 %v25
  %v142 = vunpack.c.l.b16 %v26
  %v143 = vunpack.c.h.b16 %v26
  %v144 = vunpack.c.l.b16 %v27
  %v145 = vunpack.c.h.b16 %v27
  %v146 = vunpack.c.l.b16 %v28
  %v147 = vunpack.c.h.b16 %v28
  %v148 = vunpack.c.l.b16 %v29
  %v149 = vunpack.c.h.b16 %v29
  %v150 = vunpack.c.l.b16 %v30
  %v151 = vunpack.c.h.b16 %v30
  %v152 = vunpack.c.l.b16 %v31
  %v153 = vunpack.c.h.b16 %v31
  %v154 = vunpack.c.l.b16 %v32
  %v155 = vunpack.c.h.b16 %v32
  %v156 = vunpack.c.l.b16 %v33
  %v157 = vunpack.c.h.b16 %v33
  %v158 = vunpack.c.l.b16 %v34
  %v159 = vunpack.c.h.b16 %v34
  %v160 = vunpack.c.l.b16 %v35
  %v161 = vunpack.c.h.b16 %v35
  %v162 = vunpack.c.l.b16 %v36
  %v163 = vunpack.c.h.b16 %v36
  %v164 = vunpack.c.l.b16 %v37
  %v165 = vunpack.c.h.b16 %v37
  %v166 = vunpack.c.l.b16 %v38
  %v167 = vunpack.c.h.b16 %v38
  %v168 = vunpack.c.l.b16 %v39
  %v169 = vunpack.c.h.b16 %v39
  %v170 = vunpack.c.l.b16 %v40
  %v171 = vunpack.c.h.b16 %v40
  %v172 = vunpack.c.l.b16 %v41
  %v173 = vunpack.c.h.b16 %v41
  %v174 = vunpack.c.l.b16 %v42
  %v175 = vunpack.c.h.b16 %v42
  %v176 = vunpack.c.l.b16 %v43
  %v177 = vunpack.c.h.b16 %v43
  %v178 = vunpack.c.l.b16 %v44
  %v179 = vunpack.c.h.b16 %v44
  %v180 = vunpack.c.l.b16 %v45
  %v181 = vunpack.c.h.b16 %v45
  %v182 = vunpack.c.l.b16 %v46
  %v183 = vunpack.c.h.b16 %v46
  %v184 = vunpack.c.l.b16 %v47
  %v185 = vunpack.c.h.b16 %v47
  %v186 = vpack.c.b16 %v130, %v122
  %v187 = vpack.c.b16 %v131, %v123
  %v188 = vpack.c.b16 %v132, %v124
  %v189 = vpack.c.b16 %v133, %v125
  %v190 = vpack.c.b16 %v134, %v126
  %v191 = vpack.c.b16 %v135, %v127
  %v192 = vpack.c.b16 %v136, %v128
  %v193 = vpack.c.b16 %v137, %v129
  %v194 = vpack.c.b16 %v146, %v138
  %v195 = vpack.c.b16 %v147, %v139
  %v196 = vpack.c.b16 %v148, %v140
  %v197 = vpack.c.b16 %v149, %v141
  %v198 = vpack.c.b16 %v150, %v142
  %v199 = vpack.c.b16 %v151, %v143
  %v200 = vpack.c.b16 %v152, %v144
  %v201 = vpack.c.b16 %v153, %v145
  %v202 = vpack.c.b16 %v162, %v154
  %v203 = vpack.c.b16 %v163, %v155
  %v204 = vpack.c.b16 %v164, %v156
  %v205 = vpack.c.b16 %v165, %v157
  %v206 = vpack.c.b16 %v166, %v158
  %v207 = vpack.c.b16 %v167, %v159
  %v208 = vpack.c.b16 %v168, %v160
  %v209 = vpack.c.b16 %v169, %v161
  %v210 = vpack.c.b16 %v178, %v170
  %v211 = vpack.c.b16 %v179, %v171
  %v212 = vpack.c.b16 %v180, %v172
  %v213 = vpack.c.b16 %v181, %v173
  %v214 = vpack.c.b16 %v182, %v174
  %v215 = vpack.c.b16 %v183, %v175
  %v216 = vpack.c.b16 %v184, %v176
  %v217 = vpack.c.b16 %v185, %v177
  %vm250 = vcmask 523264
  %v252 = vsel %vm250, %v15, 0
  %254 = vmatprep.subr.bf16.mxu0 %v187
  %255 = vmatpush1.bf16.msra.mxu0 %v186
  %256 = vmatprep.subr.bf16.mxu0 %v195
  %257 = vmatpush1.bf16.msra.mxu0 %v194
  %258 = vmatprep.subr.bf16.mxu0 %v203
  %259 = vmatpush1.bf16.msra.mxu0 %v202
  %260 = vmatprep.subr.bf16.mxu0 %v211
  %261 = vmatpush1.bf16.msra.mxu0 %v210
  %262 = vmatprep.subr.bf16.mxu0 0
  %263 = vmatpush1.bf16.msra.mxu0 0
  %264 = vmatprep.subr.bf16.mxu0 0
  %265 = vmatpush1.bf16.msra.mxu0 0
  %266 = vmatprep.subr.bf16.mxu0 0
  %267 = vmatpush1.bf16.msra.mxu0 0
  %268 = vmatprep.subr.bf16.mxu0 0
  %269 = vmatpush1.bf16.msra.mxu0 0
  %270 = vmatprep.subr.bf16.mxu0 0
  %271 = vmatpush1.bf16.msra.mxu0 0
  %272 = vmatprep.subr.bf16.mxu0 0
  %273 = vmatpush1.bf16.msra.mxu0 0
  %274 = vmatprep.subr.bf16.mxu0 0
  %275 = vmatpush1.bf16.msra.mxu0 0
  %276 = vmatprep.subr.bf16.mxu0 0
  %277 = vmatpush1.bf16.msra.mxu0 0
  %278 = vmatprep.subr.bf16.mxu0 0
  %279 = vmatpush1.bf16.msra.mxu0 0
  %280 = vmatprep.subr.bf16.mxu0 0
  %281 = vmatpush1.bf16.msra.mxu0 0
  %282 = vmatprep.subr.bf16.mxu0 0
  %283 = vmatpush1.bf16.msra.mxu0 0
  %284 = vmatprep.subr.bf16.mxu0 0
  %285 = vmatpush1.bf16.msra.mxu0 0
  %286 = vmatprep.mubr.bf16.mxu0 0
  %287 = vmatmul.mubr.bf16.gmra.mrb[0].mxu0 %v252
  %v288 = vpop.f32.mrb[0].mxu0
  %v289 = vadd.f32 %v53, %v288
  %v290 = vpop.f32.mrb[0].mxu0
  %v291 = vadd.f32 %v57, %v290
  %v292 = vpop.f32.mrb[0].mxu0
  %v293 = vpop.f32.mrb[0].mxu0
  %294 = vdwg.mxu0
  %295 = vmatprep.subr.bf16.mxu0 %v189
  %296 = vmatpush1.bf16.msra.mxu0 %v188
  %297 = vmatprep.subr.bf16.mxu0 %v197
  %298 = vmatpush1.bf16.msra.mxu0 %v196
  %299 = vmatprep.subr.bf16.mxu0 %v205
  %300 = vmatpush1.bf16.msra.mxu0 %v204
  %301 = vmatprep.subr.bf16.mxu0 %v213
  %302 = vmatpush1.bf16.msra.mxu0 %v212
  %303 = vmatprep.subr.bf16.mxu0 0
  %304 = vmatpush1.bf16.msra.mxu0 0
  %305 = vmatprep.subr.bf16.mxu0 0
  %306 = vmatpush1.bf16.msra.mxu0 0
  %307 = vmatprep.subr.bf16.mxu0 0
  %308 = vmatpush1.bf16.msra.mxu0 0
  %309 = vmatprep.subr.bf16.mxu0 0
  %310 = vmatpush1.bf16.msra.mxu0 0
  %311 = vmatprep.subr.bf16.mxu0 0
  %312 = vmatpush1.bf16.msra.mxu0 0
  %313 = vmatprep.subr.bf16.mxu0 0
  %314 = vmatpush1.bf16.msra.mxu0 0
  %315 = vmatprep.subr.bf16.mxu0 0
  %316 = vmatpush1.bf16.msra.mxu0 0
  %317 = vmatprep.subr.bf16.mxu0 0
  %318 = vmatpush1.bf16.msra.mxu0 0
  %319 = vmatprep.subr.bf16.mxu0 0
  %320 = vmatpush1.bf16.msra.mxu0 0
  %321 = vmatprep.subr.bf16.mxu0 0
  %322 = vmatpush1.bf16.msra.mxu0 0
  %323 = vmatprep.subr.bf16.mxu0 0
  %324 = vmatpush1.bf16.msra.mxu0 0
  %325 = vmatprep.subr.bf16.mxu0 0
  %326 = vmatpush1.bf16.msra.mxu0 0
  %327 = vmatprep.mubr.bf16.mxu0 0
  %328 = vmatmul.mubr.bf16.gmra.mrb[0].mxu0 %v252
  %v329 = vpop.f32.mrb[0].mxu0
  %v330 = vadd.f32 %v61, %v329
  %v331 = vpop.f32.mrb[0].mxu0
  %v332 = vadd.f32 %v65, %v331
  %v333 = vpop.f32.mrb[0].mxu0
  %v334 = vpop.f32.mrb[0].mxu0
  %335 = vdwg.mxu0
  %336 = vmatprep.subr.bf16.mxu0 %v191
  %337 = vmatpush1.bf16.msra.mxu0 %v190
  %338 = vmatprep.subr.bf16.mxu0 %v199
  %339 = vmatpush1.bf16.msra.mxu0 %v198
  %340 = vmatprep.subr.bf16.mxu0 %v207
  %341 = vmatpush1.bf16.msra.mxu0 %v206
  %342 = vmatprep.subr.bf16.mxu0 %v215
  %343 = vmatpush1.bf16.msra.mxu0 %v214
  %344 = vmatprep.subr.bf16.mxu0 0
  %345 = vmatpush1.bf16.msra.mxu0 0
  %346 = vmatprep.subr.bf16.mxu0 0
  %347 = vmatpush1.bf16.msra.mxu0 0
  %348 = vmatprep.subr.bf16.mxu0 0
  %349 = vmatpush1.bf16.msra.mxu0 0
  %350 = vmatprep.subr.bf16.mxu0 0
  %351 = vmatpush1.bf16.msra.mxu0 0
  %352 = vmatprep.subr.bf16.mxu0 0
  %353 = vmatpush1.bf16.msra.mxu0 0
  %354 = vmatprep.subr.bf16.mxu0 0
  %355 = vmatpush1.bf16.msra.mxu0 0
  %356 = vmatprep.subr.bf16.mxu0 0
  %357 = vmatpush1.bf16.msra.mxu0 0
  %358 = vmatprep.subr.bf16.mxu0 0
  %359 = vmatpush1.bf16.msra.mxu0 0
  %360 = vmatprep.subr.bf16.mxu0 0
  %361 = vmatpush1.bf16.msra.mxu0 0
  %362 = vmatprep.subr.bf16.mxu0 0
  %363 = vmatpush1.bf16.msra.mxu0 0
  %364 = vmatprep.subr.bf16.mxu0 0
  %365 = vmatpush1.bf16.msra.mxu0 0
  %366 = vmatprep.subr.bf16.mxu0 0
  %367 = vmatpush1.bf16.msra.mxu0 0
  %368 = vmatprep.mubr.bf16.mxu0 0
  %369 = vmatmul.mubr.bf16.gmra.mrb[0].mxu0 %v252
  %v370 = vpop.f32.mrb[0].mxu0
  %v371 = vadd.f32 %v69, %v370
  %v372 = vpop.f32.mrb[0].mxu0
  %v373 = vadd.f32 %v73, %v372
  %v374 = vpop.f32.mrb[0].mxu0
  %v375 = vpop.f32.mrb[0].mxu0
  %376 = vdwg.mxu0
  %377 = vmatprep.subr.bf16.mxu0 %v193
  %378 = vmatpush1.bf16.msra.mxu0 %v192
  %379 = vmatprep.subr.bf16.mxu0 %v201
  %380 = vmatpush1.bf16.msra.mxu0 %v200
  %381 = vmatprep.subr.bf16.mxu0 %v209
  %382 = vmatpush1.bf16.msra.mxu0 %v208
  %383 = vmatprep.subr.bf16.mxu0 %v217
  %384 = vmatpush1.bf16.msra.mxu0 %v216
  %385 = vmatprep.subr.bf16.mxu0 0
  %386 = vmatpush1.bf16.msra.mxu0 0
  %387 = vmatprep.subr.bf16.mxu0 0
  %388 = vmatpush1.bf16.msra.mxu0 0
  %389 = vmatprep.subr.bf16.mxu0 0
  %390 = vmatpush1.bf16.msra.mxu0 0
  %391 = vmatprep.subr.bf16.mxu0 0
  %392 = vmatpush1.bf16.msra.mxu0 0
  %393 = vmatprep.subr.bf16.mxu0 0
  %394 = vmatpush1.bf16.msra.mxu0 0
  %395 = vmatprep.subr.bf16.mxu0 0
  %396 = vmatpush1.bf16.msra.mxu0 0
  %397 = vmatprep.subr.bf16.mxu0 0
  %398 = vmatpush1.bf16.msra.mxu0 0
  %399 = vmatprep.subr.bf16.mxu0 0
  %400 = vmatpush1.bf16.msra.mxu0 0
  %401 = vmatprep.subr.bf16.mxu0 0
  %402 = vmatpush1.bf16.msra.mxu0 0
  %403 = vmatprep.subr.bf16.mxu0 0
  %404 = vmatpush1.bf16.msra.mxu0 0
  %405 = vmatprep.subr.bf16.mxu0 0
  %406 = vmatpush1.bf16.msra.mxu0 0
  %407 = vmatprep.subr.bf16.mxu0 0
  %408 = vmatpush1.bf16.msra.mxu0 0
  %409 = vmatprep.mubr.bf16.mxu0 0
  %410 = vmatmul.mubr.bf16.gmra.mrb[0].mxu0 %v252
  %v411 = vpop.f32.mrb[0].mxu0
  %v412 = vadd.f32 %v77, %v411
  %v413 = vpop.f32.mrb[0].mxu0
  %v414 = vadd.f32 %v81, %v413
  %v415 = vpop.f32.mrb[0].mxu0
  %v416 = vpop.f32.mrb[0].mxu0
  %417 = vdwg.mxu0
  %vm418 = vcmp.gt.f32.partialorder %v289, 0.0
  %vm419 = vcmp.gt.f32.partialorder %v291, 0.0
  %vm420 = vcmp.gt.f32.partialorder %v330, 0.0
  %vm421 = vcmp.gt.f32.partialorder %v332, 0.0
  %vm422 = vcmp.gt.f32.partialorder %v371, 0.0
  %vm423 = vcmp.gt.f32.partialorder %v373, 0.0
  %vm424 = vcmp.gt.f32.partialorder %v412, 0.0
  %vm425 = vcmp.gt.f32.partialorder %v414, 0.0
  %v426 = vmul.f32 %v289, 0.01
  %v427 = vmul.f32 %v291, 0.01
  %v428 = vmul.f32 %v330, 0.01
  %v429 = vmul.f32 %v332, 0.01
  %v430 = vmul.f32 %v371, 0.01
  %v431 = vmul.f32 %v373, 0.01
  %v432 = vmul.f32 %v412, 0.01
  %v433 = vmul.f32 %v414, 0.01
  %v434 = vsel %vm418, %v289, %v426
  %v435 = vsel %vm419, %v291, %v427
  %v436 = vsel %vm420, %v330, %v428
  %v437 = vsel %vm421, %v332, %v429
  %v438 = vsel %vm422, %v371, %v430
  %v439 = vsel %vm423, %v373, %v431
  %v440 = vsel %vm424, %v412, %v432
  %v441 = vsel %vm425, %v414, %v433
  %442 = vst [vmem:[%s3] sm:$0xff] %v434
  %443 = vst [vmem:[%s3 + $0x8] sm:$0xff] %v435
  %444 = vst [vmem:[%s3 + $0x10] sm:$0xff] %v436
  %445 = vst [vmem:[%s3 + $0x18] sm:$0xff] %v437
  %446 = vst [vmem:[%s3 + $0x20] sm:$0xff] %v438
  %447 = vst [vmem:[%s3 + $0x28] sm:$0xff] %v439
  %448 = vst [vmem:[%s3 + $0x30] sm:$0xff] %v440
  %449 = vst [vmem:[%s3 + $0x38] sm:$0xff] %v441
  // Predicated region
  $region14: #{gdnet_forward.22} parent=0 // pred_check
    _
  $region15: #{gdnet_forward.22} parent=0 // pred_check_branch
    %451 = sbr.rel (0) target = $region17
  $region16: #{gdnet_forward.22} parent=0 // pred_region
    _
  $region17: #{gdnet_forward.22} parent=0 // pred_fallthru
    _
  // Predicated region
  $region18: #{gdnet_forward.22} parent=0 // pred_check
    _
  $region19: #{gdnet_forward.22} parent=0 // pred_check_branch
    %453 = sbr.rel (0) target = $region21
  $region20: #{gdnet_forward.22} parent=0 // pred_region
    _
  $region21: #{gdnet_forward.22} parent=0 // pred_fallthru
    _

// kernel: gdnet_forward.24
$region0: #{gdnet_forward.24}
  #allocation0 [shape = 'u32[]', space=smem, size = 0x4, offset = 0x4, fixed_abs, tag = 'smem constant byte address 0x4 - core index']
  #allocation1 [shape = 'u32[144,128]{1,0:T(1,128)}', space=vmem, size = 0x12000, scoped, tag = 'internal scratch']
  %s0 = inlined_call_operand.vmem [shape: bf16[16,32], index: 0, kind: input, shape index: {}]
  %s1 = inlined_call_operand.vmem [shape: bf16[32,32], index: 1, kind: input, shape index: {}]
  %s2 = inlined_call_operand.vmem [shape: f32[1,32], index: 2, kind: input, shape index: {}]
  %s3 = inlined_call_operand.vmem [shape: f32[16,32], index: 3, kind: output, shape index: {}]
  %s4 = sld [smem:[#allocation0]]
  $region22: #{gdnet_forward.24} parent=0
    _
  %s6 = ssub.s32 1, %s4
  %s7 = scalar_select 0, %s6, %s4
  // Predicated region
  $region2: #{gdnet_forward.24} parent=0 // pred_check
    _
  $region3: #{gdnet_forward.24} parent=0 // pred_check_branch
    %9 = sbr.rel (0) target = $region5
  $region4: #{gdnet_forward.24} parent=0 // pred_region
    _
  $region5: #{gdnet_forward.24} parent=0 // pred_fallthru
    _
  // Predicated region
  $region6: #{gdnet_forward.24} parent=0 // pred_check
    _
  $region7: #{gdnet_forward.24} parent=0 // pred_check_branch
    %11 = sbr.rel (0) target = $region9
  $region8: #{gdnet_forward.24} parent=0 // pred_region
    _
  $region9: #{gdnet_forward.24} parent=0 // pred_fallthru
    _
  // Predicated region
  $region10: #{gdnet_forward.24} parent=0 // pred_check
    _
  $region11: #{gdnet_forward.24} parent=0 // pred_check_branch
    %13 = sbr.rel (0) target = $region13
  $region12: #{gdnet_forward.24} parent=0 // pred_region
    _
  $region13: #{gdnet_forward.24} parent=0 // pred_fallthru
    _
  %v15 = vld [vmem:[%s0] sm:$0xf]
  %v16 = vld [vmem:[%s0 + $0x4] sm:$0xf]
  %v17 = vld [vmem:[%s1] sm:$0xf]
  %v18 = vld [vmem:[%s1 + $0x4] sm:$0xf]
  %v19 = vld [vmem:[%s1 + $0x8] sm:$0xf]
  %v20 = vld [vmem:[%s1 + $0xc] sm:$0xf]
  %v21 = vld [vmem:[%s2] sm:$0x1]
  %v23 = vlaneseq
  %v24 = vshrl.u32 %v23, 7
  %v25 = vsub.s32 0, %v24
  %v26 = vrot.slane %v21, %v25
  %v30 = vunpack.c.l.b16 %v15
  %v31 = vunpack.c.l.b16 %v16
  %v32 = vpack.c.b16 %v31, %v30
  %v37 = vunpack.c.l.b16 %v17
  %v38 = vunpack.c.l.b16 %v18
  %v39 = vunpack.c.l.b16 %v19
  %v40 = vunpack.c.l.b16 %v20
  %v41 = vpack.c.b16 %v38, %v37
  %v42 = vpack.c.b16 %v40, %v39
  %vm45 = vcmask 261120
  %v47 = vsel %vm45, %v32, 0
  %49 = vmatprep.subr.bf16.mxu0 0
  %50 = vmatpush1.bf16.msra.mxu0 %v41
  %51 = vmatprep.subr.bf16.mxu0 0
  %52 = vmatpush1.bf16.msra.mxu0 %v42
  %53 = vmatprep.subr.bf16.mxu0 0
  %54 = vmatpush1.bf16.msra.mxu0 0
  %55 = vmatprep.subr.bf16.mxu0 0
  %56 = vmatpush1.bf16.msra.mxu0 0
  %57 = vmatprep.subr.bf16.mxu0 0
  %58 = vmatpush1.bf16.msra.mxu0 0
  %59 = vmatprep.subr.bf16.mxu0 0
  %60 = vmatpush1.bf16.msra.mxu0 0
  %61 = vmatprep.subr.bf16.mxu0 0
  %62 = vmatpush1.bf16.msra.mxu0 0
  %63 = vmatprep.subr.bf16.mxu0 0
  %64 = vmatpush1.bf16.msra.mxu0 0
  %65 = vmatprep.subr.bf16.mxu0 0
  %66 = vmatpush1.bf16.msra.mxu0 0
  %67 = vmatprep.subr.bf16.mxu0 0
  %68 = vmatpush1.bf16.msra.mxu0 0
  %69 = vmatprep.subr.bf16.mxu0 0
  %70 = vmatpush1.bf16.msra.mxu0 0
  %71 = vmatprep.subr.bf16.mxu0 0
  %72 = vmatpush1.bf16.msra.mxu0 0
  %73 = vmatprep.subr.bf16.mxu0 0
  %74 = vmatpush1.bf16.msra.mxu0 0
  %75 = vmatprep.subr.bf16.mxu0 0
  %76 = vmatpush1.bf16.msra.mxu0 0
  %77 = vmatprep.subr.bf16.mxu0 0
  %78 = vmatpush1.bf16.msra.mxu0 0
  %79 = vmatprep.subr.bf16.mxu0 0
  %80 = vmatpush1.bf16.msra.mxu0 0
  %81 = vmatprep.mubr.bf16.mxu0 0
  %82 = vmatmul.mubr.bf16.gmra.mrb[0].mxu0 %v47
  %v83 = vpop.f32.mrb[0].mxu0
  %v84 = vadd.f32 %v26, %v83
  %v85 = vpop.f32.mrb[0].mxu0
  %v86 = vpop.f32.mrb[0].mxu0
  %v87 = vadd.f32 %v26, %v86
  %v88 = vpop.f32.mrb[0].mxu0
  %89 = vdwg.mxu0
  %v90 = vsub.f32 0.0, %v84
  %v91 = vsub.f32 0.0, %v87
  %v92 = vmul.f32 %v90, 1.442695
  %v93 = vpow.pop %v92
  %v94 = vmul.f32 %v91, 1.442695
  %v95 = vpow.pop %v94
  %v96 = vadd.f32 %v93, 1.0
  %v97 = vadd.f32 %v95, 1.0
  %v98 = vrcp.pop %v96
  %v99 = vmul.f32 1.0, %v98
  %v100 = vrcp.pop %v97
  %v101 = vmul.f32 1.0, %v100
  %102 = vst.msk [vmem:[%s3] sm:$0xff] %vm45, %v99
  %103 = vst.msk [vmem:[%s3 + $0x8] sm:$0xff] %vm45, %v101
  // Predicated region
  $region14: #{gdnet_forward.24} parent=0 // pred_check
    _
  $region15: #{gdnet_forward.24} parent=0 // pred_check_branch
    %105 = sbr.rel (0) target = $region17
  $region16: #{gdnet_forward.24} parent=0 // pred_region
    _
  $region17: #{gdnet_forward.24} parent=0 // pred_fallthru
    _
  // Predicated region
  $region18: #{gdnet_forward.24} parent=0 // pred_check
    _
  $region19: #{gdnet_forward.24} parent=0 // pred_check_branch
    %107 = sbr.rel (0) target = $region21
  $region20: #{gdnet_forward.24} parent=0 // pred_region
    _
  $region21: #{gdnet_forward.24} parent=0 // pred_fallthru
    _

// kernel: gdnet_forward.25
$region0: #{gdnet_forward.25}
  #allocation0 [shape = 'u32[]', space=smem, size = 0x4, offset = 0x4, fixed_abs, tag = 'smem constant byte address 0x4 - core index']
  #allocation1 [shape = 'u32[144,128]{1,0:T(1,128)}', space=vmem, size = 0x12000, scoped, tag = 'internal scratch']
  %s0 = inlined_call_operand.vmem [shape: bf16[16,32], index: 0, kind: input, shape index: {}]
  %s1 = inlined_call_operand.vmem [shape: bf16[32,32], index: 1, kind: input, shape index: {}]
  %s2 = inlined_call_operand.vmem [shape: f32[1,32], index: 2, kind: input, shape index: {}]
  %s3 = inlined_call_operand.vmem [shape: f32[16,32], index: 3, kind: output, shape index: {}]
  %s4 = sld [smem:[#allocation0]]
  $region22: #{gdnet_forward.25} parent=0
    _
  %s6 = ssub.s32 1, %s4
  %s7 = scalar_select 0, %s6, %s4
  // Predicated region
  $region2: #{gdnet_forward.25} parent=0 // pred_check
    _
  $region3: #{gdnet_forward.25} parent=0 // pred_check_branch
    %9 = sbr.rel (0) target = $region5
  $region4: #{gdnet_forward.25} parent=0 // pred_region
    _
  $region5: #{gdnet_forward.25} parent=0 // pred_fallthru
    _
  // Predicated region
  $region6: #{gdnet_forward.25} parent=0 // pred_check
    _
  $region7: #{gdnet_forward.25} parent=0 // pred_check_branch
    %11 = sbr.rel (0) target = $region9
  $region8: #{gdnet_forward.25} parent=0 // pred_region
    _
  $region9: #{gdnet_forward.25} parent=0 // pred_fallthru
    _
  // Predicated region
  $region10: #{gdnet_forward.25} parent=0 // pred_check
    _
  $region11: #{gdnet_forward.25} parent=0 // pred_check_branch
    %13 = sbr.rel (0) target = $region13
  $region12: #{gdnet_forward.25} parent=0 // pred_region
    _
  $region13: #{gdnet_forward.25} parent=0 // pred_fallthru
    _
  %v15 = vld [vmem:[%s0] sm:$0xf]
  %v16 = vld [vmem:[%s0 + $0x4] sm:$0xf]
  %v17 = vld [vmem:[%s1] sm:$0xf]
  %v18 = vld [vmem:[%s1 + $0x4] sm:$0xf]
  %v19 = vld [vmem:[%s1 + $0x8] sm:$0xf]
  %v20 = vld [vmem:[%s1 + $0xc] sm:$0xf]
  %v21 = vld [vmem:[%s2] sm:$0x1]
  %v23 = vlaneseq
  %v24 = vshrl.u32 %v23, 7
  %v25 = vsub.s32 0, %v24
  %v26 = vrot.slane %v21, %v25
  %v30 = vunpack.c.l.b16 %v15
  %v31 = vunpack.c.l.b16 %v16
  %v32 = vpack.c.b16 %v31, %v30
  %v37 = vunpack.c.l.b16 %v17
  %v38 = vunpack.c.l.b16 %v18
  %v39 = vunpack.c.l.b16 %v19
  %v40 = vunpack.c.l.b16 %v20
  %v41 = vpack.c.b16 %v38, %v37
  %v42 = vpack.c.b16 %v40, %v39
  %vm45 = vcmask 261120
  %v47 = vsel %vm45, %v32, 0
  %49 = vmatprep.subr.bf16.mxu0 0
  %50 = vmatpush1.bf16.msra.mxu0 %v41
  %51 = vmatprep.subr.bf16.mxu0 0
  %52 = vmatpush1.bf16.msra.mxu0 %v42
  %53 = vmatprep.subr.bf16.mxu0 0
  %54 = vmatpush1.bf16.msra.mxu0 0
  %55 = vmatprep.subr.bf16.mxu0 0
  %56 = vmatpush1.bf16.msra.mxu0 0
  %57 = vmatprep.subr.bf16.mxu0 0
  %58 = vmatpush1.bf16.msra.mxu0 0
  %59 = vmatprep.subr.bf16.mxu0 0
  %60 = vmatpush1.bf16.msra.mxu0 0
  %61 = vmatprep.subr.bf16.mxu0 0
  %62 = vmatpush1.bf16.msra.mxu0 0
  %63 = vmatprep.subr.bf16.mxu0 0
  %64 = vmatpush1.bf16.msra.mxu0 0
  %65 = vmatprep.subr.bf16.mxu0 0
  %66 = vmatpush1.bf16.msra.mxu0 0
  %67 = vmatprep.subr.bf16.mxu0 0
  %68 = vmatpush1.bf16.msra.mxu0 0
  %69 = vmatprep.subr.bf16.mxu0 0
  %70 = vmatpush1.bf16.msra.mxu0 0
  %71 = vmatprep.subr.bf16.mxu0 0
  %72 = vmatpush1.bf16.msra.mxu0 0
  %73 = vmatprep.subr.bf16.mxu0 0
  %74 = vmatpush1.bf16.msra.mxu0 0
  %75 = vmatprep.subr.bf16.mxu0 0
  %76 = vmatpush1.bf16.msra.mxu0 0
  %77 = vmatprep.subr.bf16.mxu0 0
  %78 = vmatpush1.bf16.msra.mxu0 0
  %79 = vmatprep.subr.bf16.mxu0 0
  %80 = vmatpush1.bf16.msra.mxu0 0
  %81 = vmatprep.mubr.bf16.mxu0 0
  %82 = vmatmul.mubr.bf16.gmra.mrb[0].mxu0 %v47
  %v83 = vpop.f32.mrb[0].mxu0
  %v84 = vadd.f32 %v26, %v83
  %v85 = vpop.f32.mrb[0].mxu0
  %v86 = vpop.f32.mrb[0].mxu0
  %v87 = vadd.f32 %v26, %v86
  %v88 = vpop.f32.mrb[0].mxu0
  %89 = vdwg.mxu0
  %vm90 = vcmp.gt.f32.partialorder %v84, 0.0
  %vm91 = vcmp.gt.f32.partialorder %v87, 0.0
  %v92 = vmul.f32 %v84, 0.01
  %v93 = vmul.f32 %v87, 0.01
  %v94 = vsel %vm90, %v84, %v92
  %v95 = vsel %vm91, %v87, %v93
  %96 = vst.msk [vmem:[%s3] sm:$0xff] %vm45, %v94
  %97 = vst.msk [vmem:[%s3 + $0x8] sm:$0xff] %vm45, %v95
  // Predicated region
  $region14: #{gdnet_forward.25} parent=0 // pred_check
    _
  $region15: #{gdnet_forward.25} parent=0 // pred_check_branch
    %99 = sbr.rel (0) target = $region17
  $region16: #{gdnet_forward.25} parent=0 // pred_region
    _
  $region17: #{gdnet_forward.25} parent=0 // pred_fallthru
    _
  // Predicated region
  $region18: #{gdnet_forward.25} parent=0 // pred_check
    _
  $region19: #{gdnet_forward.25} parent=0 // pred_check_branch
    %101 = sbr.rel (0) target = $region21
  $region20: #{gdnet_forward.25} parent=0 // pred_region
    _
  $region21: #{gdnet_forward.25} parent=0 // pred_fallthru
    _

// kernel: gdnet_forward.23
$region0: #{gdnet_forward.23}
  #allocation0 [shape = 'u32[]', space=smem, size = 0x4, offset = 0x4, fixed_abs, tag = 'smem constant byte address 0x4 - core index']
  #allocation1 [shape = 'u32[144,128]{1,0:T(1,128)}', space=vmem, size = 0x12000, scoped, tag = 'internal scratch']
  %s0 = inlined_call_operand.vmem [shape: bf16[16,576], index: 0, kind: input, shape index: {}]
  %s1 = inlined_call_operand.vmem [shape: bf16[576,32], index: 1, kind: input, shape index: {}]
  %s2 = inlined_call_operand.vmem [shape: f32[1,32], index: 2, kind: input, shape index: {}]
  %s3 = inlined_call_operand.vmem [shape: f32[16,32], index: 3, kind: output, shape index: {}]
  %s4 = sld [smem:[#allocation0]]
  $region22: #{gdnet_forward.23} parent=0
    _
  %s6 = ssub.s32 1, %s4
  %s7 = scalar_select 0, %s6, %s4
  // Predicated region
  $region2: #{gdnet_forward.23} parent=0 // pred_check
    _
  $region3: #{gdnet_forward.23} parent=0 // pred_check_branch
    %9 = sbr.rel (0) target = $region5
  $region4: #{gdnet_forward.23} parent=0 // pred_region
    _
  $region5: #{gdnet_forward.23} parent=0 // pred_fallthru
    _
  // Predicated region
  $region6: #{gdnet_forward.23} parent=0 // pred_check
    _
  $region7: #{gdnet_forward.23} parent=0 // pred_check_branch
    %11 = sbr.rel (0) target = $region9
  $region8: #{gdnet_forward.23} parent=0 // pred_region
    _
  $region9: #{gdnet_forward.23} parent=0 // pred_fallthru
    _
  // Predicated region
  $region10: #{gdnet_forward.23} parent=0 // pred_check
    _
  $region11: #{gdnet_forward.23} parent=0 // pred_check_branch
    %13 = sbr.rel (0) target = $region13
  $region12: #{gdnet_forward.23} parent=0 // pred_region
    _
  $region13: #{gdnet_forward.23} parent=0 // pred_fallthru
    _
  %v15 = vld [vmem:[%s0] sm:$0xff]
  %v16 = vld [vmem:[%s0 + $0x8] sm:$0xff]
  %v17 = vld [vmem:[%s0 + $0x10] sm:$0xf]
  %v18 = vld [vmem:[%s0 + $0x14] sm:$0xff]
  %v19 = vld [vmem:[%s0 + $0x1c] sm:$0xff]
  %v20 = vld [vmem:[%s0 + $0x24] sm:$0xf]
  %v21 = vld [vmem:[%s1] sm:$0xf]
  %v22 = vld [vmem:[%s1 + $0x4] sm:$0xf]
  %v23 = vld [vmem:[%s1 + $0x8] sm:$0xf]
  %v24 = vld [vmem:[%s1 + $0xc] sm:$0xf]
  %v25 = vld [vmem:[%s1 + $0x10] sm:$0xf]
  %v26 = vld [vmem:[%s1 + $0x14] sm:$0xf]
  %v27 = vld [vmem:[%s1 + $0x18] sm:$0xf]
  %v28 = vld [vmem:[%s1 + $0x1c] sm:$0xf]
  %v29 = vld [vmem:[%s1 + $0x20] sm:$0xf]
  %v30 = vld [vmem:[%s1 + $0x24] sm:$0xf]
  %v31 = vld [vmem:[%s1 + $0x28] sm:$0xf]
  %v32 = vld [vmem:[%s1 + $0x2c] sm:$0xf]
  %v33 = vld [vmem:[%s1 + $0x30] sm:$0xf]
  %v34 = vld [vmem:[%s1 + $0x34] sm:$0xf]
  %v35 = vld [vmem:[%s1 + $0x38] sm:$0xf]
  %v36 = vld [vmem:[%s1 + $0x3c] sm:$0xf]
  %v37 = vld [vmem:[%s1 + $0x40] sm:$0xf]
  %v38 = vld [vmem:[%s1 + $0x44] sm:$0xf]
  %v39 = vld [vmem:[%s1 + $0x48] sm:$0xf]
  %v40 = vld [vmem:[%s1 + $0x4c] sm:$0xf]
  %v41 = vld [vmem:[%s1 + $0x50] sm:$0xf]
  %v42 = vld [vmem:[%s1 + $0x54] sm:$0xf]
  %v43 = vld [vmem:[%s1 + $0x58] sm:$0xf]
  %v44 = vld [vmem:[%s1 + $0x5c] sm:$0xf]
  %v45 = vld [vmem:[%s1 + $0x60] sm:$0xf]
  %v46 = vld [vmem:[%s1 + $0x64] sm:$0xf]
  %v47 = vld [vmem:[%s1 + $0x68] sm:$0xf]
  %v48 = vld [vmem:[%s1 + $0x6c] sm:$0xf]
  %v49 = vld [vmem:[%s1 + $0x70] sm:$0xf]
  %v50 = vld [vmem:[%s1 + $0x74] sm:$0xf]
  %v51 = vld [vmem:[%s1 + $0x78] sm:$0xf]
  %v52 = vld [vmem:[%s1 + $0x7c] sm:$0xf]
  %v53 = vld [vmem:[%s1 + $0x80] sm:$0xf]
  %v54 = vld [vmem:[%s1 + $0x84] sm:$0xf]
  %v55 = vld [vmem:[%s1 + $0x88] sm:$0xf]
  %v56 = vld [vmem:[%s1 + $0x8c] sm:$0xf]
  %v57 = vld [vmem:[%s1 + $0x90] sm:$0xf]
  %v58 = vld [vmem:[%s1 + $0x94] sm:$0xf]
  %v59 = vld [vmem:[%s1 + $0x98] sm:$0xf]
  %v60 = vld [vmem:[%s1 + $0x9c] sm:$0xf]
  %v61 = vld [vmem:[%s1 + $0xa0] sm:$0xf]
  %v62 = vld [vmem:[%s1 + $0xa4] sm:$0xf]
  %v63 = vld [vmem:[%s1 + $0xa8] sm:$0xf]
  %v64 = vld [vmem:[%s1 + $0xac] sm:$0xf]
  %v65 = vld [vmem:[%s1 + $0xb0] sm:$0xf]
  %v66 = vld [vmem:[%s1 + $0xb4] sm:$0xf]
  %v67 = vld [vmem:[%s1 + $0xb8] sm:$0xf]
  %v68 = vld [vmem:[%s1 + $0xbc] sm:$0xf]
  %v69 = vld [vmem:[%s1 + $0xc0] sm:$0xf]
  %v70 = vld [vmem:[%s1 + $0xc4] sm:$0xf]
  %v71 = vld [vmem:[%s1 + $0xc8] sm:$0xf]
  %v72 = vld [vmem:[%s1 + $0xcc] sm:$0xf]
  %v73 = vld [vmem:[%s1 + $0xd0] sm:$0xf]
  %v74 = vld [vmem:[%s1 + $0xd4] sm:$0xf]
  %v75 = vld [vmem:[%s1 + $0xd8] sm:$0xf]
  %v76 = vld [vmem:[%s1 + $0xdc] sm:$0xf]
  %v77 = vld [vmem:[%s1 + $0xe0] sm:$0xf]
  %v78 = vld [vmem:[%s1 + $0xe4] sm:$0xf]
  %v79 = vld [vmem:[%s1 + $0xe8] sm:$0xf]
  %v80 = vld [vmem:[%s1 + $0xec] sm:$0xf]
  %v81 = vld [vmem:[%s1 + $0xf0] sm:$0xf]
  %v82 = vld [vmem:[%s1 + $0xf4] sm:$0xf]
  %v83 = vld [vmem:[%s1 + $0xf8] sm:$0xf]
  %v84 = vld [vmem:[%s1 + $0xfc] sm:$0xf]
  %v85 = vld [vmem:[%s1 + $0x100] sm:$0xf]
  %v86 = vld [vmem:[%s1 + $0x104] sm:$0xf]
  %v87 = vld [vmem:[%s1 + $0x108] sm:$0xf]
  %v88 = vld [vmem:[%s1 + $0x10c] sm:$0xf]
  %v89 = vld [vmem:[%s1 + $0x110] sm:$0xf]
  %v90 = vld [vmem:[%s1 + $0x114] sm:$0xf]
  %v91 = vld [vmem:[%s1 + $0x118] sm:$0xf]
  %v92 = vld [vmem:[%s1 + $0x11c] sm:$0xf]
  %v93 = vld [vmem:[%s2] sm:$0x1]
  %v95 = vlaneseq
  %v96 = vshrl.u32 %v95, 7
  %v97 = vsub.s32 0, %v96
  %v98 = vrot.slane %v93, %v97
  %v106 = vunpack.c.l.b16 %v15
  %v107 = vunpack.c.h.b16 %v15
  %v108 = vunpack.c.l.b16 %v16
  %v109 = vunpack.c.h.b16 %v16
  %v110 = vunpack.c.l.b16 %v17
  %v111 = vunpack.c.l.b16 %v18
  %v112 = vunpack.c.h.b16 %v18
  %v113 = vunpack.c.l.b16 %v19
  %v114 = vunpack.c.h.b16 %v19
  %v115 = vunpack.c.l.b16 %v20
  %v116 = vpack.c.b16 %v111, %v106
  %v117 = vpack.c.b16 %v112, %v107
  %v118 = vpack.c.b16 %v113, %v108
  %v119 = vpack.c.b16 %v114, %v109
  %v120 = vpack.c.b16 %v115, %v110
  %v197 = vunpack.c.l.b16 %v21
  %v198 = vunpack.c.l.b16 %v22
  %v199 = vunpack.c.l.b16 %v23
  %v200 = vunpack.c.l.b16 %v24
  %v201 = vunpack.c.l.b16 %v25
  %v202 = vunpack.c.l.b16 %v26
  %v203 = vunpack.c.l.b16 %v27
  %v204 = vunpack.c.l.b16 %v28
  %v205 = vunpack.c.l.b16 %v29
  %v206 = vunpack.c.l.b16 %v30
  %v207 = vunpack.c.l.b16 %v31
  %v208 = vunpack.c.l.b16 %v32
  %v209 = vunpack.c.l.b16 %v33
  %v210 = vunpack.c.l.b16 %v34
  %v211 = vunpack.c.l.b16 %v35
  %v212 = vunpack.c.l.b16 %v36
  %v213 = vunpack.c.l.b16 %v37
  %v214 = vunpack.c.l.b16 %v38
  %v215 = vunpack.c.l.b16 %v39
  %v216 = vunpack.c.l.b16 %v40
  %v217 = vunpack.c.l.b16 %v41
  %v218 = vunpack.c.l.b16 %v42
  %v219 = vunpack.c.l.b16 %v43
  %v220 = vunpack.c.l.b16 %v44
  %v221 = vunpack.c.l.b16 %v45
  %v222 = vunpack.c.l.b16 %v46
  %v223 = vunpack.c.l.b16 %v47
  %v224 = vunpack.c.l.b16 %v48
  %v225 = vunpack.c.l.b16 %v49
  %v226 = vunpack.c.l.b16 %v50
  %v227 = vunpack.c.l.b16 %v51
  %v228 = vunpack.c.l.b16 %v52
  %v229 = vunpack.c.l.b16 %v53
  %v230 = vunpack.c.l.b16 %v54
  %v231 = vunpack.c.l.b16 %v55
  %v232 = vunpack.c.l.b16 %v56
  %v233 = vunpack.c.l.b16 %v57
  %v234 = vunpack.c.l.b16 %v58
  %v235 = vunpack.c.l.b16 %v59
  %v236 = vunpack.c.l.b16 %v60
  %v237 = vunpack.c.l.b16 %v61
  %v238 = vunpack.c.l.b16 %v62
  %v239 = vunpack.c.l.b16 %v63
  %v240 = vunpack.c.l.b16 %v64
  %v241 = vunpack.c.l.b16 %v65
  %v242 = vunpack.c.l.b16 %v66
  %v243 = vunpack.c.l.b16 %v67
  %v244 = vunpack.c.l.b16 %v68
  %v245 = vunpack.c.l.b16 %v69
  %v246 = vunpack.c.l.b16 %v70
  %v247 = vunpack.c.l.b16 %v71
  %v248 = vunpack.c.l.b16 %v72
  %v249 = vunpack.c.l.b16 %v73
  %v250 = vunpack.c.l.b16 %v74
  %v251 = vunpack.c.l.b16 %v75
  %v252 = vunpack.c.l.b16 %v76
  %v253 = vunpack.c.l.b16 %v77
  %v254 = vunpack.c.l.b16 %v78
  %v255 = vunpack.c.l.b16 %v79
  %v256 = vunpack.c.l.b16 %v80
  %v257 = vunpack.c.l.b16 %v81
  %v258 = vunpack.c.l.b16 %v82
  %v259 = vunpack.c.l.b16 %v83
  %v260 = vunpack.c.l.b16 %v84
  %v261 = vunpack.c.l.b16 %v85
  %v262 = vunpack.c.l.b16 %v86
  %v263 = vunpack.c.l.b16 %v87
  %v264 = vunpack.c.l.b16 %v88
  %v265 = vunpack.c.l.b16 %v89
  %v266 = vunpack.c.l.b16 %v90
  %v267 = vunpack.c.l.b16 %v91
  %v268 = vunpack.c.l.b16 %v92
  %v269 = vpack.c.b16 %v198, %v197
  %v270 = vpack.c.b16 %v200, %v199
  %v271 = vpack.c.b16 %v202, %v201
  %v272 = vpack.c.b16 %v204, %v203
  %v273 = vpack.c.b16 %v206, %v205
  %v274 = vpack.c.b16 %v208, %v207
  %v275 = vpack.c.b16 %v210, %v209
  %v276 = vpack.c.b16 %v212, %v211
  %v277 = vpack.c.b16 %v214, %v213
  %v278 = vpack.c.b16 %v216, %v215
  %v279 = vpack.c.b16 %v218, %v217
  %v280 = vpack.c.b16 %v220, %v219
  %v281 = vpack.c.b16 %v222, %v221
  %v282 = vpack.c.b16 %v224, %v223
  %v283 = vpack.c.b16 %v226, %v225
  %v284 = vpack.c.b16 %v228, %v227
  %v285 = vpack.c.b16 %v230, %v229
  %v286 = vpack.c.b16 %v232, %v231
  %v287 = vpack.c.b16 %v234, %v233
  %v288 = vpack.c.b16 %v236, %v235
  %v289 = vpack.c.b16 %v238, %v237
  %v290 = vpack.c.b16 %v240, %v239
  %v291 = vpack.c.b16 %v242, %v241
  %v292 = vpack.c.b16 %v244, %v243
  %v293 = vpack.c.b16 %v246, %v245
  %v294 = vpack.c.b16 %v248, %v247
  %v295 = vpack.c.b16 %v250, %v249
  %v296 = vpack.c.b16 %v252, %v251
  %v297 = vpack.c.b16 %v254, %v253
  %v298 = vpack.c.b16 %v256, %v255
  %v299 = vpack.c.b16 %v258, %v257
  %v300 = vpack.c.b16 %v260, %v259
  %v301 = vpack.c.b16 %v262, %v261
  %v302 = vpack.c.b16 %v264, %v263
  %v303 = vpack.c.b16 %v266, %v265
  %v304 = vpack.c.b16 %v268, %v267
  %vm341 = vcmask 523264
  %v343 = vsel %vm341, %v120, 0
  %345 = vmatprep.subr.bf16.mxu0 0
  %346 = vmatpush1.bf16.msra.mxu0 %v269
  %347 = vmatprep.subr.bf16.mxu0 0
  %348 = vmatpush1.bf16.msra.mxu0 %v270
  %349 = vmatprep.subr.bf16.mxu0 0
  %350 = vmatpush1.bf16.msra.mxu0 %v271
  %351 = vmatprep.subr.bf16.mxu0 0
  %352 = vmatpush1.bf16.msra.mxu0 %v272
  %353 = vmatprep.subr.bf16.mxu0 0
  %354 = vmatpush1.bf16.msra.mxu0 %v273
  %355 = vmatprep.subr.bf16.mxu0 0
  %356 = vmatpush1.bf16.msra.mxu0 %v274
  %357 = vmatprep.subr.bf16.mxu0 0
  %358 = vmatpush1.bf16.msra.mxu0 %v275
  %359 = vmatprep.subr.bf16.mxu0 0
  %360 = vmatpush1.bf16.msra.mxu0 %v276
  %361 = vmatprep.subr.bf16.mxu0 0
  %362 = vmatpush1.bf16.msra.mxu0 %v277
  %363 = vmatprep.subr.bf16.mxu0 0
  %364 = vmatpush1.bf16.msra.mxu0 %v278
  %365 = vmatprep.subr.bf16.mxu0 0
  %366 = vmatpush1.bf16.msra.mxu0 %v279
  %367 = vmatprep.subr.bf16.mxu0 0
  %368 = vmatpush1.bf16.msra.mxu0 %v280
  %369 = vmatprep.subr.bf16.mxu0 0
  %370 = vmatpush1.bf16.msra.mxu0 %v281
  %371 = vmatprep.subr.bf16.mxu0 0
  %372 = vmatpush1.bf16.msra.mxu0 %v282
  %373 = vmatprep.subr.bf16.mxu0 0
  %374 = vmatpush1.bf16.msra.mxu0 %v283
  %375 = vmatprep.subr.bf16.mxu0 0
  %376 = vmatpush1.bf16.msra.mxu0 %v284
  %377 = vmatprep.mubr.bf16.mxu0 %v117
  %378 = vmatmul.mubr.bf16.gmra.mrb[0].mxu0 %v116
  %v379 = vpop.f32.mrb[0].mxu0
  %v380 = vadd.f32 %v98, %v379
  %v381 = vpop.f32.mrb[0].mxu0
  %v382 = vpop.f32.mrb[0].mxu0
  %v383 = vadd.f32 %v98, %v382
  %v384 = vpop.f32.mrb[0].mxu0
  %385 = vdwg.mxu0
  %386 = vmatprep.subr.bf16.mxu0 0
  %387 = vmatpush1.bf16.msra.mxu0 %v285
  %388 = vmatprep.subr.bf16.mxu0 0
  %389 = vmatpush1.bf16.msra.mxu0 %v286
  %390 = vmatprep.subr.bf16.mxu0 0
  %391 = vmatpush1.bf16.msra.mxu0 %v287
  %392 = vmatprep.subr.bf16.mxu0 0
  %393 = vmatpush1.bf16.msra.mxu0 %v288
  %394 = vmatprep.subr.bf16.mxu0 0
  %395 = vmatpush1.bf16.msra.mxu0 %v289
  %396 = vmatprep.subr.bf16.mxu0 0
  %397 = vmatpush1.bf16.msra.mxu0 %v290
  %398 = vmatprep.subr.bf16.mxu0 0
  %399 = vmatpush1.bf16.msra.mxu0 %v291
  %400 = vmatprep.subr.bf16.mxu0 0
  %401 = vmatpush1.bf16.msra.mxu0 %v292
  %402 = vmatprep.subr.bf16.mxu0 0
  %403 = vmatpush1.bf16.msra.mxu0 %v293
  %404 = vmatprep.subr.bf16.mxu0 0
  %405 = vmatpush1.bf16.msra.mxu0 %v294
  %406 = vmatprep.subr.bf16.mxu0 0
  %407 = vmatpush1.bf16.msra.mxu0 %v295
  %408 = vmatprep.subr.bf16.mxu0 0
  %409 = vmatpush1.bf16.msra.mxu0 %v296
  %410 = vmatprep.subr.bf16.mxu0 0
  %411 = vmatpush1.bf16.msra.mxu0 %v297
  %412 = vmatprep.subr.bf16.mxu0 0
  %413 = vmatpush1.bf16.msra.mxu0 %v298
  %414 = vmatprep.subr.bf16.mxu0 0
  %415 = vmatpush1.bf16.msra.mxu0 %v299
  %416 = vmatprep.subr.bf16.mxu0 0
  %417 = vmatpush1.bf16.msra.mxu0 %v300
  %418 = vmatprep.mubr.bf16.mxu0 %v119
  %419 = vmatmul.mubr.bf16.gmra.mrb[0].mxu0 %v118
  %v420 = vpop.f32.mrb[0].mxu0
  %v421 = vadd.f32 %v380, %v420
  %v422 = vpop.f32.mrb[0].mxu0
  %v423 = vpop.f32.mrb[0].mxu0
  %v424 = vadd.f32 %v383, %v423
  %v425 = vpop.f32.mrb[0].mxu0
  %426 = vdwg.mxu0
  %427 = vmatprep.subr.bf16.mxu0 0
  %428 = vmatpush1.bf16.msra.mxu0 %v301
  %429 = vmatprep.subr.bf16.mxu0 0
  %430 = vmatpush1.bf16.msra.mxu0 %v302
  %431 = vmatprep.subr.bf16.mxu0 0
  %432 = vmatpush1.bf16.msra.mxu0 %v303
  %433 = vmatprep.subr.bf16.mxu0 0
  %434 = vmatpush1.bf16.msra.mxu0 %v304
  %435 = vmatprep.subr.bf16.mxu0 0
  %436 = vmatpush1.bf16.msra.mxu0 0
  %437 = vmatprep.subr.bf16.mxu0 0
  %438 = vmatpush1.bf16.msra.mxu0 0
  %439 = vmatprep.subr.bf16.mxu0 0
  %440 = vmatpush1.bf16.msra.mxu0 0
  %441 = vmatprep.subr.bf16.mxu0 0
  %442 = vmatpush1.bf16.msra.mxu0 0
  %443 = vmatprep.subr.bf16.mxu0 0
  %444 = vmatpush1.bf16.msra.mxu0 0
  %445 = vmatprep.subr.bf16.mxu0 0
  %446 = vmatpush1.bf16.msra.mxu0 0
  %447 = vmatprep.subr.bf16.mxu0 0
  %448 = vmatpush1.bf16.msra.mxu0 0
  %449 = vmatprep.subr.bf16.mxu0 0
  %450 = vmatpush1.bf16.msra.mxu0 0
  %451 = vmatprep.subr.bf16.mxu0 0
  %452 = vmatpush1.bf16.msra.mxu0 0
  %453 = vmatprep.subr.bf16.mxu0 0
  %454 = vmatpush1.bf16.msra.mxu0 0
  %455 = vmatprep.subr.bf16.mxu0 0
  %456 = vmatpush1.bf16.msra.mxu0 0
  %457 = vmatprep.subr.bf16.mxu0 0
  %458 = vmatpush1.bf16.msra.mxu0 0
  %459 = vmatprep.mubr.bf16.mxu0 0
  %460 = vmatmul.mubr.bf16.gmra.mrb[0].mxu0 %v343
  %v461 = vpop.f32.mrb[0].mxu0
  %v462 = vadd.f32 %v421, %v461
  %v463 = vpop.f32.mrb[0].mxu0
  %v464 = vpop.f32.mrb[0].mxu0
  %v465 = vadd.f32 %v424, %v464
  %v466 = vpop.f32.mrb[0].mxu0
  %467 = vdwg.mxu0
  %v468 = vmax.f32 %v462, 0.0
  %v469 = vmax.f32 %v465, 0.0
  %vm470 = vcmask 261120
  %471 = vst.msk [vmem:[%s3] sm:$0xff] %vm470, %v468
  %472 = vst.msk [vmem:[%s3 + $0x8] sm:$0xff] %vm470, %v469
  // Predicated region
  $region14: #{gdnet_forward.23} parent=0 // pred_check
    _
  $region15: #{gdnet_forward.23} parent=0 // pred_check_branch
    %474 = sbr.rel (0) target = $region17
  $region16: #{gdnet_forward.23} parent=0 // pred_region
    _
  $region17: #{gdnet_forward.23} parent=0 // pred_fallthru
    _
  // Predicated region
  $region18: #{gdnet_forward.23} parent=0 // pred_check
    _
  $region19: #{gdnet_forward.23} parent=0 // pred_check_branch
    %476 = sbr.rel (0) target = $region21
  $region20: #{gdnet_forward.23} parent=0 // pred_region
    _
  $region21: #{gdnet_forward.23} parent=0 // pred_fallthru
    _

</llo_original>
